<compile_context>
chip_gen: v6e
topology: v6e:2x2x1
jax: 0.10.0
libtpu: 0.0.40
codegen_flags: <defaults>
</compile_context>

<pallas_src>
import functools

import jax
import jax.numpy as jnp
from jax import lax
from jax.experimental import pallas as pl
from jax.experimental.pallas import tpu as pltpu


# ----------------------------- GAT attention body -----------------------------

def _gat_attention(proj, adj, bias, heads, c):
    """proj: [N, H*C + 2H] = x @ W_all ; adj: [N,N] mask (>0 = edge, self-loops present);
    bias: [1, H*C].  Returns relu(GATConv(x)) concatenated over heads -> [N, H*C]."""
    hc = heads * c
    att = proj[:, hc:]                       # [N, 2H]: cols 0..H-1 = a_src, H..2H-1 = a_dst
    att_t = jnp.transpose(att)               # [2H, N] (single small XLU relayout per layer)
    outs = []
    for h in range(heads):                   # heads=2: static unroll
        xh = proj[:, h * c:(h + 1) * c]                      # [N, C]
        a_src_row = att_t[h:h + 1, :]                        # [1, N]  (per source node j)
        a_dst_col = att[:, heads + h:heads + h + 1]          # [N, 1]  (per dst node i)
        e = a_dst_col + a_src_row                            # [N_dst, N_src]
        e = jnp.where(e > 0, e, 0.2 * e)                     # LeakyReLU(0.2)
        e = jnp.where(adj > 0, e, -1e30)                     # mask (self-loops guarantee a hit)
        e = e - jnp.max(e, axis=-1, keepdims=True)
        p = jnp.exp(e)                                       # masked entries -> exactly 0
        denom = jnp.maximum(jnp.sum(p, axis=-1, keepdims=True), 1e-20)
        alpha = p * pl.reciprocal(denom, approx=True)        # EUP reciprocal, no VALU divide
        # bf16 MXU operands, f32 accumulate (v6e/v7x MXU fast path).
        agg = jnp.dot(alpha.astype(jnp.bfloat16), xh.astype(jnp.bfloat16),
                      preferred_element_type=jnp.float32)    # [N, C]
        outs.append(agg)
    out = jnp.concatenate(outs, axis=-1) + bias              # [N, H*C] lane-dense
    return jnp.maximum(out, 0.0)                             # relu (all GAT layers are relu'd)


# ----------------------------- Pallas kernels -----------------------------

def _gat1_kernel(x_ref, wall_ref, b_ref, adj_ref, o_ref, *, heads, c):
    x = x_ref[...]                                                     # [N, F0]
    proj = jnp.dot(x, wall_ref[...], preferred_element_type=jnp.float32)
    out = _gat_attention(proj, adj_ref[...], b_ref[...], heads, c)     # [N, H*C]
    # fuse torch.cat((x_in, relu(gat1(x))), -1) into the kernel output.
    o_ref[...] = jnp.concatenate([x, out], axis=-1)                    # [N, F0 + H*C]


def _gat_chain_kernel(x_ref, adj_ref, w2_ref, b2_ref,
                      w3p_ref, w3h_ref, b3_ref,
                      w4p_ref, w4h_ref, b4_ref, o_ref, *, heads, c):
    # Fused gat2 -> gat3 -> gat4 (same N, same adj); the cat(x_pool3, h) inputs of gat3/gat4
    # are realized by splitting their fused weights along Fin (no concatenation at all).
    x = x_ref[...]                                                     # [N, 132] = x_pool3
    adj = adj_ref[...]
    proj2 = jnp.dot(x, w2_ref[...], preferred_element_type=jnp.float32)
    h2 = _gat_attention(proj2, adj, b2_ref[...], heads, c)             # [N, 128]
    proj3 = (jnp.dot(x, w3p_ref[...], preferred_element_type=jnp.float32)
             + jnp.dot(h2, w3h_ref[...], preferred_element_type=jnp.float32))
    h3 = _gat_attention(proj3, adj, b3_ref[...], heads, c)
    proj4 = (jnp.dot(x, w4p_ref[...], preferred_element_type=jnp.float32)
             + jnp.dot(h3, w4h_ref[...], preferred_element_type=jnp.float32))
    h4 = _gat_attention(proj4, adj, b4_ref[...], heads, c)
    o_ref[...] = h4                                                    # [N, 128] lane-dense


def _edge_score_kernel(xs_ref, xd_ref, ws_ref, wd_ref, b_ref, o_ref):
    # EdgePooling raw edge score: cat(x[src], x[dst]) @ w + b, realized as two matmuls.
    raw = (jnp.dot(xs_ref[...], ws_ref[...], preferred_element_type=jnp.float32)
           + jnp.dot(xd_ref[...], wd_ref[...], preferred_element_type=jnp.float32)
           + b_ref[...])
    o_ref[...] = raw                                                   # [E, 1]


def _fc_kernel(xin_ref, x_ref, w1i_ref, w1x_ref, b1_ref, w2i_ref, w2h_ref, b2_ref, o_ref):
    # Fused fc1 (relu) + fc2 (sigmoid); cat(x_in, .) inputs realized by weight splitting.
    xin = xin_ref[...]
    x = x_ref[...]
    h = (jnp.dot(xin, w1i_ref[...], preferred_element_type=jnp.float32)
         + jnp.dot(x, w1x_ref[...], preferred_element_type=jnp.float32) + b1_ref[...])
    h = jnp.maximum(h, 0.0)
    y = (jnp.dot(xin, w2i_ref[...], preferred_element_type=jnp.float32)
         + jnp.dot(h, w2h_ref[...], preferred_element_type=jnp.float32) + b2_ref[...])
    o_ref[...] = pl.reciprocal(1.0 + jnp.exp(-y), approx=True)         # sigmoid via EUP


# ----------------------------- Wrappers -----------------------------

_VMEM = pl.BlockSpec(memory_space=pltpu.MemorySpace.VMEM)


def _fuse_gat_weights(p):
    """[H,Fin,C] weights + [H,1,C] att vectors + bias -> ([Fin, H*C+2H], [1, H*C])."""
    h, fin, c = p["w"].shape
    w_heads = jnp.transpose(p["w"], (1, 0, 2)).reshape(fin, h * c)       # [Fin, H*C]
    w_asrc = jnp.einsum("hfc,hc->fh", p["w"], p["a_src"][:, 0, :])       # [Fin, H]
    w_adst = jnp.einsum("hfc,hc->fh", p["w"], p["a_dst"][:, 0, :])       # [Fin, H]
    w_all = jnp.concatenate([w_heads, w_asrc, w_adst], axis=1)           # [Fin, H*C + 2H]
    b = jnp.transpose(p["b"], (1, 0, 2)).reshape(1, h * c)               # [1, H*C]
    return w_all, b


def gat1_layer(x, adj, p):
    # TODO(synk): for large N, tile over dst rows with grid=(cdiv(N,t),), adj/logit BlockSpecs
    # of (t, N), dimension_semantics=("parallel",), and size t to v7x's 64 MiB VMEM.
    n, f0 = x.shape
    h, _, c = p["w"].shape
    w_all, b = _fuse_gat_weights(p)
    return pl.pallas_call(
        functools.partial(_gat1_kernel, heads=h, c=c),
        out_shape=jax.ShapeDtypeStruct((n, f0 + h * c), jnp.float32),
        in_specs=[_VMEM] * 4,
        out_specs=_VMEM,
    )(x, w_all, b, adj)


def gat_chain(x_pool3, adj, p2, p3, p4):
    n, fin2 = x_pool3.shape
    h, _, c = p2["w"].shape
    w2, b2 = _fuse_gat_weights(p2)
    w3, b3 = _fuse_gat_weights(p3)
    w4, b4 = _fuse_gat_weights(p4)
    w3p, w3h = w3[:fin2], w3[fin2:]          # gat3 input = cat(x_pool3, h2)
    w4p, w4h = w4[:fin2], w4[fin2:]          # gat4 input = cat(x_pool3, h3)
    return pl.pallas_call(
        functools.partial(_gat_chain_kernel, heads=h, c=c),
        out_shape=jax.ShapeDtypeStruct((n, h * c), jnp.float32),
        in_specs=[_VMEM] * 10,
        out_specs=_VMEM,
    )(x_pool3, adj, w2, b2, w3p, w3h, b3, w4p, w4h, b4)


def edge_score(x_src, x_dst, p):
    e, f = x_src.shape
    w, b = p["w"], p["b"]
    # TODO(synk): at production E, pad the 1-lane output to 128 lanes (lane-dense vst) and slice.
    return pl.pallas_call(
        _edge_score_kernel,
        out_shape=jax.ShapeDtypeStruct((e, 1), jnp.float32),
        in_specs=[_VMEM] * 5,
        out_specs=_VMEM,
    )(x_src, x_dst, w[:f], w[f:], b)


def fc_head(x_in, x, p1, p2):
    n, f0 = x_in.shape
    w1, b1 = p1["w"], p1["b"]
    w2, b2 = p2["w"], p2["b"]
    return pl.pallas_call(
        _fc_kernel,
        out_shape=jax.ShapeDtypeStruct((n, w2.shape[1]), jnp.float32),
        in_specs=[_VMEM] * 8,
        out_specs=_VMEM,
    )(x_in, x, w1[:f0], w1[f0:], b1, w2[:f0], w2[f0:], b2)


# --------------------------- EdgePooling (glue) ---------------------------

def build_adj(src, dst, evalid, n):
    adj = jnp.zeros((n, n), jnp.float32)
    adj = adj.at[dst, src].max(evalid.astype(jnp.float32))
    # GATConv add_self_loops=True (also guarantees nonzero softmax denominators)
    return jnp.maximum(adj, jnp.eye(n, dtype=jnp.float32))


def segment_softmax(raw, dst, evalid, n):
    neg = jnp.float32(-1e30)
    s = jnp.where(evalid, raw, neg)
    seg_max = jnp.full((n,), neg, jnp.float32).at[dst].max(s)
    es = jnp.where(evalid, jnp.exp(s - seg_max[dst]), 0.0)
    seg_sum = jnp.zeros((n,), jnp.float32).at[dst].add(es)
    return es / jnp.maximum(seg_sum[dst], 1e-16)


def _dedup_mask(nsrc, ndst, evalid, n):
    # O(E log E) sort-based duplicate detection (replaces the old O(E^2) pairwise compare).
    e = nsrc.shape[0]
    key = nsrc * (n + 1) + ndst
    key = jnp.where(evalid, key, (n + 1) * (n + 1) + jnp.arange(e, dtype=key.dtype))
    order = jnp.argsort(key)                       # stable -> first occurrence = lowest index
    sk = key[order]
    dup_sorted = jnp.concatenate([jnp.zeros((1,), bool), sk[1:] == sk[:-1]])
    return jnp.zeros((e,), bool).at[order].set(dup_sorted)


def edge_pool(x, src, dst, evalid, nvalid, p):
    # TODO(synk): EdgePooling's greedy edge contraction is inherently sequential / data-dependent,
    # so it is done in plain JAX (lax.fori_loop + scatters); the edge-score matmul is Pallas.
    n, f = x.shape
    e = src.shape[0]
    raw = edge_score(x[src], x[dst], p)[:, 0]                         # Pallas, no [E,2F] concat
    score = segment_softmax(raw, dst, evalid, n) + 0.5                # PyG add_to_edge_score=0.5

    order = jnp.argsort(jnp.where(evalid, -score, jnp.inf))           # descending over valid edges

    def body(k, state):
        matched, cluster, nsel, nscore = state
        ei = order[k]
        s = src[ei]
        d = dst[ei]
        ok = evalid[ei] & (~matched[s]) & (~matched[d])
        matched = jnp.where(ok, matched.at[s].set(True).at[d].set(True), matched)
        cluster = jnp.where(ok, cluster.at[s].set(nsel).at[d].set(nsel), cluster)
        nscore = jnp.where(ok, nscore.at[nsel].set(score[ei]), nscore)
        nsel = nsel + ok.astype(jnp.int32)
        return matched, cluster, nsel, nscore

    init = (~nvalid, jnp.zeros((n,), jnp.int32), jnp.int32(0),
            jnp.ones((n,), jnp.float32))
    matched, cluster, nsel, nscore = lax.fori_loop(0, e, body, init)

    remaining = nvalid & ~matched
    kept_ids = nsel + jnp.cumsum(remaining.astype(jnp.int32)) - 1
    cluster = jnp.where(matched & nvalid, cluster, jnp.where(remaining, kept_ids, 0))
    num_new = nsel + jnp.sum(remaining.astype(jnp.int32))

    xm = jnp.where(nvalid[:, None], x, 0.0)
    new_x = jnp.zeros((n, f), jnp.float32).at[cluster].add(xm) * nscore[:, None]

    nsrc = cluster[src]
    ndst = cluster[dst]
    new_evalid = evalid & ~_dedup_mask(nsrc, ndst, evalid, n)         # coalesce (dedup)
    new_nvalid = jnp.arange(n) < num_new

    return new_x, nsrc, ndst, new_evalid, new_nvalid, (cluster, nscore)


def edge_unpool(x, unpool_info):
    cluster, nscore = unpool_info
    return (x / nscore[:, None])[cluster]


# ------------------------------- Forward ----------------------------------

def forward(params, x0, edge_list):
    n = x0.shape[0]
    src0 = edge_list[:, 0]
    dst0 = edge_list[:, 1]
    e = src0.shape[0]
    evalid0 = jnp.ones((e,), bool)
    nvalid0 = jnp.ones((n,), bool)

    adj0 = build_adj(src0, dst0, evalid0, n)
    x = gat1_layer(x0, adj0, params["gat1"])                          # [N, 132] = cat(x_in, gat1)

    x, s1, d1, ev1, nv1, up1 = edge_pool(x, src0, dst0, evalid0, nvalid0, params["pool1"])
    x, s2, d2, ev2, nv2, up2 = edge_pool(x, s1, d1, ev1, nv1, params["pool2"])
    x, s3, d3, ev3, nv3, up3 = edge_pool(x, s2, d2, ev2, nv2, params["pool3"])

    adj3 = build_adj(s3, d3, ev3, n)
    x = gat_chain(x, adj3, params["gat2"], params["gat3"], params["gat4"])   # [N, 128]

    x = edge_unpool(x, up3)
    x = edge_unpool(x, up2)
    x = edge_unpool(x, up1)

    y = fc_head(x0, x, params["fc1"], params["fc2"])                  # fused fc1+fc2, [N, 1]
    return y[:, 0]                                                    # num_classes==2 -> flatten


# ------------------------------ Parameters ---------------------------------

def init_linear(key, fin, fout):
    kw, kb = jax.random.split(key)
    return {"w": jax.random.normal(kw, (fin, fout), jnp.float32) / jnp.sqrt(float(fin)),
            "b": 0.01 * jax.random.normal(kb, (1, fout), jnp.float32)}


def init_gat(key, fin, heads, c):
    k1, k2, k3, k4 = jax.random.split(key, 4)
    return {"w": jax.random.normal(k1, (heads, fin, c), jnp.float32) / jnp.sqrt(float(fin)),
            "a_src": 0.1 * jax.random.normal(k2, (heads, 1, c), jnp.float32),
            "a_dst": 0.1 * jax.random.normal(k3, (heads, 1, c), jnp.float32),
            "b": 0.01 * jax.random.normal(k4, (heads, 1, c), jnp.float32)}


def init_params(key, node_features, num_classes):
    hid, heads = 64, 2
    nc = 1 if num_classes == 2 else num_classes
    ks = jax.random.split(key, 9)
    d_cat = hid * heads + node_features
    return {
        "gat1": init_gat(ks[0], node_features, heads, hid),
        "gat2": init_gat(ks[1], d_cat, heads, hid),
        "gat3": init_gat(ks[2], hid * heads * 2 + node_features, heads, hid),
        "gat4": init_gat(ks[3], hid * heads * 2 + node_features, heads, hid),
        "pool1": init_linear(ks[4], 2 * d_cat, 1),
        "pool2": init_linear(ks[5], 2 * d_cat, 1),
        "pool3": init_linear(ks[6], 2 * d_cat, 1),
        "fc1": init_linear(ks[7], d_cat, hid),
        "fc2": init_linear(ks[8], hid + node_features, nc),
    }


if __name__ == "__main__":
    key = jax.random.PRNGKey(0)
    kx, kp = jax.random.split(key)
    num_nodes, node_features, num_classes = 16, 4, 2
    x = jax.random.normal(kx, (num_nodes, node_features), jnp.float32)
    idx = jnp.arange(num_nodes, dtype=jnp.int32)
    nxt = (idx + 1) % num_nodes
    # directed ring (both directions), [E, 2] = [32, 2], matching the PyTorch edge-list input
    edge_list = jnp.concatenate(
        [jnp.stack([idx, nxt], axis=1), jnp.stack([nxt, idx], axis=1)], axis=0
    ).astype(jnp.int32)

    params = init_params(kp, node_features, num_classes)
    out = jax.jit(forward)(params, x, edge_list)
    out = jax.block_until_ready(out)
    assert out.shape == (num_nodes,)
    assert bool(jnp.all(jnp.isfinite(out)))
    print("KERNEL_OK")
</pallas_src>

<mosaic_0001>
module attributes {stable_mosaic.version = 11 : i64} {
  func.func private @main(%arg0: i32) attributes {dimension_semantics = [#tpu.dimension_semantics<core_parallel>], iteration_bounds = array<i64: 2>, tpu.core_type = #tpu.core_type<sc_scalar_subcore>, window_params = []} {
    return
  }
}

module attributes {stable_mosaic.version = 11 : i64} {
  func.func private @main(%arg0: i32) attributes {dimension_semantics = [#tpu.dimension_semantics<core_parallel>], iteration_bounds = array<i64: 2>, tpu.core_type = #tpu.core_type<sc_scalar_subcore>, window_params = []} {
    return
  }
}

module attributes {stable_mosaic.version = 11 : i64} {
  func.func @_gat1_kernel(%arg0: memref<16x4xf32, #tpu.memory_space<vmem>>, %arg1: memref<4x132xf32, #tpu.memory_space<vmem>>, %arg2: memref<1x128xf32, #tpu.memory_space<vmem>>, %arg3: memref<16x16xf32, #tpu.memory_space<vmem>>, %arg4: memref<16x132xf32, #tpu.memory_space<vmem>>) attributes {dimension_semantics = [], scalar_prefetch = 0 : i64, scratch_operands = 0 : i64, tpu.core_type = #tpu.core_type<tc>} {
    %c0 = arith.constant 0 : index
    %c0_0 = arith.constant 0 : index
    %0 = vector.load %arg0[%c0, %c0_0] : memref<16x4xf32, #tpu.memory_space<vmem>>, vector<16x4xf32>
    %c0_1 = arith.constant 0 : index
    %c0_2 = arith.constant 0 : index
    %1 = vector.load %arg1[%c0_1, %c0_2] : memref<4x132xf32, #tpu.memory_space<vmem>>, vector<4x132xf32>
    %cst = arith.constant dense<0.000000e+00> : vector<16x132xf32>
    %2 = tpu.matmul %0, %1, %cst {dimension_numbers = #tpu.dot_dimension_numbers<[1], [0], [0], [1], [0, 0, 1, 1], [], []>} : vector<16x4xf32>, vector<4x132xf32>, vector<16x132xf32> -> vector<16x132xf32>
    %c0_3 = arith.constant 0 : index
    %c0_4 = arith.constant 0 : index
    %3 = vector.load %arg3[%c0_3, %c0_4] : memref<16x16xf32, #tpu.memory_space<vmem>>, vector<16x16xf32>
    %c0_5 = arith.constant 0 : index
    %c0_6 = arith.constant 0 : index
    %4 = vector.load %arg2[%c0_5, %c0_6] : memref<1x128xf32, #tpu.memory_space<vmem>>, vector<1x128xf32>
    %5 = vector.extract_strided_slice %2 {offsets = [0, 128], sizes = [16, 4], strides = [1, 1]} : vector<16x132xf32> to vector<16x4xf32>
    %6 = tpu.transpose %5, [1, 0] : vector<16x4xf32> -> vector<4x16xf32>
    %7 = vector.extract_strided_slice %2 {offsets = [0, 0], sizes = [16, 64], strides = [1, 1]} : vector<16x132xf32> to vector<16x64xf32>
    %8 = vector.extract_strided_slice %6 {offsets = [0, 0], sizes = [1, 16], strides = [1, 1]} : vector<4x16xf32> to vector<1x16xf32>
    %9 = vector.extract_strided_slice %5 {offsets = [0, 2], sizes = [16, 1], strides = [1, 1]} : vector<16x4xf32> to vector<16x1xf32>
    %10 = vector.broadcast %9 : vector<16x1xf32> to vector<16x16xf32>
    %11 = vector.broadcast %8 : vector<1x16xf32> to vector<16x16xf32>
    %12 = arith.addf %10, %11 : vector<16x16xf32>
    %cst_7 = arith.constant 0.000000e+00 : f32
    %13 = vector.broadcast %cst_7 : f32 to vector<16x16xf32>
    %14 = arith.cmpf ogt, %12, %13 : vector<16x16xf32>
    %cst_8 = arith.constant 2.000000e-01 : f32
    %15 = vector.broadcast %cst_8 : f32 to vector<16x16xf32>
    %16 = arith.mulf %15, %12 : vector<16x16xf32>
    %17 = arith.select %14, %12, %16 : vector<16x16xi1>, vector<16x16xf32>
    %cst_9 = arith.constant 0.000000e+00 : f32
    %18 = vector.broadcast %cst_9 : f32 to vector<16x16xf32>
    %19 = arith.cmpf ogt, %3, %18 : vector<16x16xf32>
    %cst_10 = arith.constant -1.000000e+30 : f32
    %20 = vector.broadcast %cst_10 : f32 to vector<16x16xf32>
    %21 = arith.select %19, %17, %20 : vector<16x16xi1>, vector<16x16xf32>
    %cst_11 = arith.constant dense<0xFF800000> : vector<16xf32>
    %22 = vector.multi_reduction <maximumf>, %21, %cst_11 [1] : vector<16x16xf32> to vector<16xf32>
    %23 = vector.shape_cast %22 : vector<16xf32> to vector<16x1xf32>
    %24 = vector.broadcast %23 : vector<16x1xf32> to vector<16x16xf32>
    %25 = arith.subf %21, %24 : vector<16x16xf32>
    %26 = math.exp %25 : vector<16x16xf32>
    %cst_12 = arith.constant dense<0.000000e+00> : vector<16xf32>
    %27 = vector.multi_reduction <add>, %26, %cst_12 [1] : vector<16x16xf32> to vector<16xf32>
    %28 = vector.shape_cast %27 : vector<16xf32> to vector<16x1xf32>
    %cst_13 = arith.constant 9.99999968E-21 : f32
    %29 = vector.broadcast %cst_13 : f32 to vector<16x1xf32>
    %30 = arith.maximumf %28, %29 : vector<16x1xf32>
    %31 = tpu.reciprocal %30 {approx = true} : vector<16x1xf32> -> vector<16x1xf32>
    %32 = vector.broadcast %31 : vector<16x1xf32> to vector<16x16xf32>
    %33 = arith.mulf %26, %32 : vector<16x16xf32>
    %34 = arith.truncf %33 : vector<16x16xf32> to vector<16x16xbf16>
    %35 = arith.truncf %7 : vector<16x64xf32> to vector<16x64xbf16>
    %cst_14 = arith.constant dense<0.000000e+00> : vector<16x64xf32>
    %36 = tpu.matmul %34, %35, %cst_14 {dimension_numbers = #tpu.dot_dimension_numbers<[1], [0], [0], [1], [0, 0, 1, 1], [], []>} : vector<16x16xbf16>, vector<16x64xbf16>, vector<16x64xf32> -> vector<16x64xf32>
    %37 = vector.extract_strided_slice %2 {offsets = [0, 64], sizes = [16, 64], strides = [1, 1]} : vector<16x132xf32> to vector<16x64xf32>
    %38 = vector.extract_strided_slice %6 {offsets = [1, 0], sizes = [1, 16], strides = [1, 1]} : vector<4x16xf32> to vector<1x16xf32>
    %39 = vector.extract_strided_slice %5 {offsets = [0, 3], sizes = [16, 1], strides = [1, 1]} : vector<16x4xf32> to vector<16x1xf32>
    %40 = vector.broadcast %39 : vector<16x1xf32> to vector<16x16xf32>
    %41 = vector.broadcast %38 : vector<1x16xf32> to vector<16x16xf32>
    %42 = arith.addf %40, %41 : vector<16x16xf32>
    %cst_15 = arith.constant 0.000000e+00 : f32
    %43 = vector.broadcast %cst_15 : f32 to vector<16x16xf32>
    %44 = arith.cmpf ogt, %42, %43 : vector<16x16xf32>
    %cst_16 = arith.constant 2.000000e-01 : f32
    %45 = vector.broadcast %cst_16 : f32 to vector<16x16xf32>
    %46 = arith.mulf %45, %42 : vector<16x16xf32>
    %47 = arith.select %44, %42, %46 : vector<16x16xi1>, vector<16x16xf32>
    %cst_17 = arith.constant 0.000000e+00 : f32
    %48 = vector.broadcast %cst_17 : f32 to vector<16x16xf32>
    %49 = arith.cmpf ogt, %3, %48 : vector<16x16xf32>
    %cst_18 = arith.constant -1.000000e+30 : f32
    %50 = vector.broadcast %cst_18 : f32 to vector<16x16xf32>
    %51 = arith.select %49, %47, %50 : vector<16x16xi1>, vector<16x16xf32>
    %cst_19 = arith.constant dense<0xFF800000> : vector<16xf32>
    %52 = vector.multi_reduction <maximumf>, %51, %cst_19 [1] : vector<16x16xf32> to vector<16xf32>
    %53 = vector.shape_cast %52 : vector<16xf32> to vector<16x1xf32>
    %54 = vector.broadcast %53 : vector<16x1xf32> to vector<16x16xf32>
    %55 = arith.subf %51, %54 : vector<16x16xf32>
    %56 = math.exp %55 : vector<16x16xf32>
    %cst_20 = arith.constant dense<0.000000e+00> : vector<16xf32>
    %57 = vector.multi_reduction <add>, %56, %cst_20 [1] : vector<16x16xf32> to vector<16xf32>
    %58 = vector.shape_cast %57 : vector<16xf32> to vector<16x1xf32>
    %cst_21 = arith.constant 9.99999968E-21 : f32
    %59 = vector.broadcast %cst_21 : f32 to vector<16x1xf32>
    %60 = arith.maximumf %58, %59 : vector<16x1xf32>
    %61 = tpu.reciprocal %60 {approx = true} : vector<16x1xf32> -> vector<16x1xf32>
    %62 = vector.broadcast %61 : vector<16x1xf32> to vector<16x16xf32>
    %63 = arith.mulf %56, %62 : vector<16x16xf32>
    %64 = arith.truncf %63 : vector<16x16xf32> to vector<16x16xbf16>
    %65 = arith.truncf %37 : vector<16x64xf32> to vector<16x64xbf16>
    %cst_22 = arith.constant dense<0.000000e+00> : vector<16x64xf32>
    %66 = tpu.matmul %64, %65, %cst_22 {dimension_numbers = #tpu.dot_dimension_numbers<[1], [0], [0], [1], [0, 0, 1, 1], [], []>} : vector<16x16xbf16>, vector<16x64xbf16>, vector<16x64xf32> -> vector<16x64xf32>
    %67 = tpu.concatenate %36, %66 in 1 : vector<16x64xf32>, vector<16x64xf32> -> vector<16x128xf32>
    %68 = vector.broadcast %4 : vector<1x128xf32> to vector<16x128xf32>
    %69 = arith.addf %67, %68 : vector<16x128xf32>
    %cst_23 = arith.constant 0.000000e+00 : f32
    %70 = vector.broadcast %cst_23 : f32 to vector<16x128xf32>
    %71 = arith.maximumf %69, %70 : vector<16x128xf32>
    %72 = tpu.concatenate %0, %71 in 1 : vector<16x4xf32>, vector<16x128xf32> -> vector<16x132xf32>
    %c0_24 = arith.constant 0 : index
    %c0_25 = arith.constant 0 : index
    %73 = vector.load %arg4[%c0_24, %c0_25] : memref<16x132xf32, #tpu.memory_space<vmem>>, vector<16x132xf32>
    tpu.vector_store %arg4[%c0_24, %c0_25], %72 {strides = array<i32>} : memref<16x132xf32, #tpu.memory_space<vmem>>, vector<16x132xf32>,
    return
  }
}

module attributes {stable_mosaic.version = 11 : i64} {
  func.func @_edge_score_kernel(%arg0: memref<32x132xf32, #tpu.memory_space<vmem>>, %arg1: memref<32x132xf32, #tpu.memory_space<vmem>>, %arg2: memref<132x1xf32, #tpu.memory_space<vmem>>, %arg3: memref<132x1xf32, #tpu.memory_space<vmem>>, %arg4: memref<1x1xf32, #tpu.memory_space<vmem>>, %arg5: memref<32x1xf32, #tpu.memory_space<vmem>>) attributes {dimension_semantics = [], scalar_prefetch = 0 : i64, scratch_operands = 0 : i64, tpu.core_type = #tpu.core_type<tc>} {
    %c0 = arith.constant 0 : index
    %c0_0 = arith.constant 0 : index
    %0 = vector.load %arg0[%c0, %c0_0] : memref<32x132xf32, #tpu.memory_space<vmem>>, vector<32x132xf32>
    %c0_1 = arith.constant 0 : index
    %c0_2 = arith.constant 0 : index
    %1 = vector.load %arg2[%c0_1, %c0_2] : memref<132x1xf32, #tpu.memory_space<vmem>>, vector<132x1xf32>
    %cst = arith.constant dense<0.000000e+00> : vector<32x1xf32>
    %2 = tpu.matmul %0, %1, %cst {dimension_numbers = #tpu.dot_dimension_numbers<[1], [0], [0], [1], [0, 0, 1, 1], [], []>} : vector<32x132xf32>, vector<132x1xf32>, vector<32x1xf32> -> vector<32x1xf32>
    %c0_3 = arith.constant 0 : index
    %c0_4 = arith.constant 0 : index
    %3 = vector.load %arg1[%c0_3, %c0_4] : memref<32x132xf32, #tpu.memory_space<vmem>>, vector<32x132xf32>
    %c0_5 = arith.constant 0 : index
    %c0_6 = arith.constant 0 : index
    %4 = vector.load %arg3[%c0_5, %c0_6] : memref<132x1xf32, #tpu.memory_space<vmem>>, vector<132x1xf32>
    %cst_7 = arith.constant dense<0.000000e+00> : vector<32x1xf32>
    %5 = tpu.matmul %3, %4, %cst_7 {dimension_numbers = #tpu.dot_dimension_numbers<[1], [0], [0], [1], [0, 0, 1, 1], [], []>} : vector<32x132xf32>, vector<132x1xf32>, vector<32x1xf32> -> vector<32x1xf32>
    %6 = arith.addf %2, %5 : vector<32x1xf32>
    %c0_8 = arith.constant 0 : index
    %c0_9 = arith.constant 0 : index
    %7 = vector.load %arg4[%c0_8, %c0_9] : memref<1x1xf32, #tpu.memory_space<vmem>>, vector<1x1xf32>
    %8 = vector.broadcast %7 : vector<1x1xf32> to vector<32x1xf32>
    %9 = arith.addf %6, %8 : vector<32x1xf32>
    %c0_10 = arith.constant 0 : index
    %c0_11 = arith.constant 0 : index
    %10 = vector.load %arg5[%c0_10, %c0_11] : memref<32x1xf32, #tpu.memory_space<vmem>>, vector<32x1xf32>
    tpu.vector_store %arg5[%c0_10, %c0_11], %9 {strides = array<i32>} : memref<32x1xf32, #tpu.memory_space<vmem>>, vector<32x1xf32>,
    return
  }
}

module attributes {stable_mosaic.version = 11 : i64} {
  func.func @_gat_chain_kernel(%arg0: memref<16x132xf32, #tpu.memory_space<vmem>>, %arg1: memref<16x16xf32, #tpu.memory_space<vmem>>, %arg2: memref<132x132xf32, #tpu.memory_space<vmem>>, %arg3: memref<1x128xf32, #tpu.memory_space<vmem>>, %arg4: memref<132x132xf32, #tpu.memory_space<vmem>>, %arg5: memref<128x132xf32, #tpu.memory_space<vmem>>, %arg6: memref<1x128xf32, #tpu.memory_space<vmem>>, %arg7: memref<132x132xf32, #tpu.memory_space<vmem>>, %arg8: memref<128x132xf32, #tpu.memory_space<vmem>>, %arg9: memref<1x128xf32, #tpu.memory_space<vmem>>, %arg10: memref<16x128xf32, #tpu.memory_space<vmem>>) attributes {dimension_semantics = [], scalar_prefetch = 0 : i64, scratch_operands = 0 : i64, tpu.core_type = #tpu.core_type<tc>} {
    %c0 = arith.constant 0 : index
    %c0_0 = arith.constant 0 : index
    %0 = vector.load %arg0[%c0, %c0_0] : memref<16x132xf32, #tpu.memory_space<vmem>>, vector<16x132xf32>
    %c0_1 = arith.constant 0 : index
    %c0_2 = arith.constant 0 : index
    %1 = vector.load %arg1[%c0_1, %c0_2] : memref<16x16xf32, #tpu.memory_space<vmem>>, vector<16x16xf32>
    %c0_3 = arith.constant 0 : index
    %c0_4 = arith.constant 0 : index
    %2 = vector.load %arg2[%c0_3, %c0_4] : memref<132x132xf32, #tpu.memory_space<vmem>>, vector<132x132xf32>
    %cst = arith.constant dense<0.000000e+00> : vector<16x132xf32>
    %3 = tpu.matmul %0, %2, %cst {dimension_numbers = #tpu.dot_dimension_numbers<[1], [0], [0], [1], [0, 0, 1, 1], [], []>} : vector<16x132xf32>, vector<132x132xf32>, vector<16x132xf32> -> vector<16x132xf32>
    %c0_5 = arith.constant 0 : index
    %c0_6 = arith.constant 0 : index
    %4 = vector.load %arg3[%c0_5, %c0_6] : memref<1x128xf32, #tpu.memory_space<vmem>>, vector<1x128xf32>
    %5 = vector.extract_strided_slice %3 {offsets = [0, 128], sizes = [16, 4], strides = [1, 1]} : vector<16x132xf32> to vector<16x4xf32>
    %6 = tpu.transpose %5, [1, 0] : vector<16x4xf32> -> vector<4x16xf32>
    %7 = vector.extract_strided_slice %3 {offsets = [0, 0], sizes = [16, 64], strides = [1, 1]} : vector<16x132xf32> to vector<16x64xf32>
    %8 = vector.extract_strided_slice %6 {offsets = [0, 0], sizes = [1, 16], strides = [1, 1]} : vector<4x16xf32> to vector<1x16xf32>
    %9 = vector.extract_strided_slice %5 {offsets = [0, 2], sizes = [16, 1], strides = [1, 1]} : vector<16x4xf32> to vector<16x1xf32>
    %10 = vector.broadcast %9 : vector<16x1xf32> to vector<16x16xf32>
    %11 = vector.broadcast %8 : vector<1x16xf32> to vector<16x16xf32>
    %12 = arith.addf %10, %11 : vector<16x16xf32>
    %cst_7 = arith.constant 0.000000e+00 : f32
    %13 = vector.broadcast %cst_7 : f32 to vector<16x16xf32>
    %14 = arith.cmpf ogt, %12, %13 : vector<16x16xf32>
    %cst_8 = arith.constant 2.000000e-01 : f32
    %15 = vector.broadcast %cst_8 : f32 to vector<16x16xf32>
    %16 = arith.mulf %15, %12 : vector<16x16xf32>
    %17 = arith.select %14, %12, %16 : vector<16x16xi1>, vector<16x16xf32>
    %cst_9 = arith.constant 0.000000e+00 : f32
    %18 = vector.broadcast %cst_9 : f32 to vector<16x16xf32>
    %19 = arith.cmpf ogt, %1, %18 : vector<16x16xf32>
    %cst_10 = arith.constant -1.000000e+30 : f32
    %20 = vector.broadcast %cst_10 : f32 to vector<16x16xf32>
    %21 = arith.select %19, %17, %20 : vector<16x16xi1>, vector<16x16xf32>
    %cst_11 = arith.constant dense<0xFF800000> : vector<16xf32>
    %22 = vector.multi_reduction <maximumf>, %21, %cst_11 [1] : vector<16x16xf32> to vector<16xf32>
    %23 = vector.shape_cast %22 : vector<16xf32> to vector<16x1xf32>
    %24 = vector.broadcast %23 : vector<16x1xf32> to vector<16x16xf32>
    %25 = arith.subf %21, %24 : vector<16x16xf32>
    %26 = math.exp %25 : vector<16x16xf32>
    %cst_12 = arith.constant dense<0.000000e+00> : vector<16xf32>
    %27 = vector.multi_reduction <add>, %26, %cst_12 [1] : vector<16x16xf32> to vector<16xf32>
    %28 = vector.shape_cast %27 : vector<16xf32> to vector<16x1xf32>
    %cst_13 = arith.constant 9.99999968E-21 : f32
    %29 = vector.broadcast %cst_13 : f32 to vector<16x1xf32>
    %30 = arith.maximumf %28, %29 : vector<16x1xf32>
    %31 = tpu.reciprocal %30 {approx = true} : vector<16x1xf32> -> vector<16x1xf32>
    %32 = vector.broadcast %31 : vector<16x1xf32> to vector<16x16xf32>
    %33 = arith.mulf %26, %32 : vector<16x16xf32>
    %34 = arith.truncf %33 : vector<16x16xf32> to vector<16x16xbf16>
    %35 = arith.truncf %7 : vector<16x64xf32> to vector<16x64xbf16>
    %cst_14 = arith.constant dense<0.000000e+00> : vector<16x64xf32>
    %36 = tpu.matmul %34, %35, %cst_14 {dimension_numbers = #tpu.dot_dimension_numbers<[1], [0], [0], [1], [0, 0, 1, 1], [], []>} : vector<16x16xbf16>, vector<16x64xbf16>, vector<16x64xf32> -> vector<16x64xf32>
    %37 = vector.extract_strided_slice %3 {offsets = [0, 64], sizes = [16, 64], strides = [1, 1]} : vector<16x132xf32> to vector<16x64xf32>
    %38 = vector.extract_strided_slice %6 {offsets = [1, 0], sizes = [1, 16], strides = [1, 1]} : vector<4x16xf32> to vector<1x16xf32>
    %39 = vector.extract_strided_slice %5 {offsets = [0, 3], sizes = [16, 1], strides = [1, 1]} : vector<16x4xf32> to vector<16x1xf32>
    %40 = vector.broadcast %39 : vector<16x1xf32> to vector<16x16xf32>
    %41 = vector.broadcast %38 : vector<1x16xf32> to vector<16x16xf32>
    %42 = arith.addf %40, %41 : vector<16x16xf32>
    %cst_15 = arith.constant 0.000000e+00 : f32
    %43 = vector.broadcast %cst_15 : f32 to vector<16x16xf32>
    %44 = arith.cmpf ogt, %42, %43 : vector<16x16xf32>
    %cst_16 = arith.constant 2.000000e-01 : f32
    %45 = vector.broadcast %cst_16 : f32 to vector<16x16xf32>
    %46 = arith.mulf %45, %42 : vector<16x16xf32>
    %47 = arith.select %44, %42, %46 : vector<16x16xi1>, vector<16x16xf32>
    %cst_17 = arith.constant 0.000000e+00 : f32
    %48 = vector.broadcast %cst_17 : f32 to vector<16x16xf32>
    %49 = arith.cmpf ogt, %1, %48 : vector<16x16xf32>
    %cst_18 = arith.constant -1.000000e+30 : f32
    %50 = vector.broadcast %cst_18 : f32 to vector<16x16xf32>
    %51 = arith.select %49, %47, %50 : vector<16x16xi1>, vector<16x16xf32>
    %cst_19 = arith.constant dense<0xFF800000> : vector<16xf32>
    %52 = vector.multi_reduction <maximumf>, %51, %cst_19 [1] : vector<16x16xf32> to vector<16xf32>
    %53 = vector.shape_cast %52 : vector<16xf32> to vector<16x1xf32>
    %54 = vector.broadcast %53 : vector<16x1xf32> to vector<16x16xf32>
    %55 = arith.subf %51, %54 : vector<16x16xf32>
    %56 = math.exp %55 : vector<16x16xf32>
    %cst_20 = arith.constant dense<0.000000e+00> : vector<16xf32>
    %57 = vector.multi_reduction <add>, %56, %cst_20 [1] : vector<16x16xf32> to vector<16xf32>
    %58 = vector.shape_cast %57 : vector<16xf32> to vector<16x1xf32>
    %cst_21 = arith.constant 9.99999968E-21 : f32
    %59 = vector.broadcast %cst_21 : f32 to vector<16x1xf32>
    %60 = arith.maximumf %58, %59 : vector<16x1xf32>
    %61 = tpu.reciprocal %60 {approx = true} : vector<16x1xf32> -> vector<16x1xf32>
    %62 = vector.broadcast %61 : vector<16x1xf32> to vector<16x16xf32>
    %63 = arith.mulf %56, %62 : vector<16x16xf32>
    %64 = arith.truncf %63 : vector<16x16xf32> to vector<16x16xbf16>
    %65 = arith.truncf %37 : vector<16x64xf32> to vector<16x64xbf16>
    %cst_22 = arith.constant dense<0.000000e+00> : vector<16x64xf32>
    %66 = tpu.matmul %64, %65, %cst_22 {dimension_numbers = #tpu.dot_dimension_numbers<[1], [0], [0], [1], [0, 0, 1, 1], [], []>} : vector<16x16xbf16>, vector<16x64xbf16>, vector<16x64xf32> -> vector<16x64xf32>
    %67 = tpu.concatenate %36, %66 in 1 : vector<16x64xf32>, vector<16x64xf32> -> vector<16x128xf32>
    %68 = vector.broadcast %4 : vector<1x128xf32> to vector<16x128xf32>
    %69 = arith.addf %67, %68 : vector<16x128xf32>
    %cst_23 = arith.constant 0.000000e+00 : f32
    %70 = vector.broadcast %cst_23 : f32 to vector<16x128xf32>
    %71 = arith.maximumf %69, %70 : vector<16x128xf32>
    %c0_24 = arith.constant 0 : index
    %c0_25 = arith.constant 0 : index
    %72 = vector.load %arg4[%c0_24, %c0_25] : memref<132x132xf32, #tpu.memory_space<vmem>>, vector<132x132xf32>
    %cst_26 = arith.constant dense<0.000000e+00> : vector<16x132xf32>
    %73 = tpu.matmul %0, %72, %cst_26 {dimension_numbers = #tpu.dot_dimension_numbers<[1], [0], [0], [1], [0, 0, 1, 1], [], []>} : vector<16x132xf32>, vector<132x132xf32>, vector<16x132xf32> -> vector<16x132xf32>
    %c0_27 = arith.constant 0 : index
    %c0_28 = arith.constant 0 : index
    %74 = vector.load %arg5[%c0_27, %c0_28] : memref<128x132xf32, #tpu.memory_space<vmem>>, vector<128x132xf32>
    %cst_29 = arith.constant dense<0.000000e+00> : vector<16x132xf32>
    %75 = tpu.matmul %71, %74, %cst_29 {dimension_numbers = #tpu.dot_dimension_numbers<[1], [0], [0], [1], [0, 0, 1, 1], [], []>} : vector<16x128xf32>, vector<128x132xf32>, vector<16x132xf32> -> vector<16x132xf32>
    %76 = arith.addf %73, %75 : vector<16x132xf32>
    %c0_30 = arith.constant 0 : index
    %c0_31 = arith.constant 0 : index
    %77 = vector.load %arg6[%c0_30, %c0_31] : memref<1x128xf32, #tpu.memory_space<vmem>>, vector<1x128xf32>
    %78 = vector.extract_strided_slice %76 {offsets = [0, 128], sizes = [16, 4], strides = [1, 1]} : vector<16x132xf32> to vector<16x4xf32>
    %79 = tpu.transpose %78, [1, 0] : vector<16x4xf32> -> vector<4x16xf32>
    %80 = vector.extract_strided_slice %76 {offsets = [0, 0], sizes = [16, 64], strides = [1, 1]} : vector<16x132xf32> to vector<16x64xf32>
    %81 = vector.extract_strided_slice %79 {offsets = [0, 0], sizes = [1, 16], strides = [1, 1]} : vector<4x16xf32> to vector<1x16xf32>
    %82 = vector.extract_strided_slice %78 {offsets = [0, 2], sizes = [16, 1], strides = [1, 1]} : vector<16x4xf32> to vector<16x1xf32>
    %83 = vector.broadcast %82 : vector<16x1xf32> to vector<16x16xf32>
    %84 = vector.broadcast %81 : vector<1x16xf32> to vector<16x16xf32>
    %85 = arith.addf %83, %84 : vector<16x16xf32>
    %cst_32 = arith.constant 0.000000e+00 : f32
    %86 = vector.broadcast %cst_32 : f32 to vector<16x16xf32>
    %87 = arith.cmpf ogt, %85, %86 : vector<16x16xf32>
    %cst_33 = arith.constant 2.000000e-01 : f32
    %88 = vector.broadcast %cst_33 : f32 to vector<16x16xf32>
    %89 = arith.mulf %88, %85 : vector<16x16xf32>
    %90 = arith.select %87, %85, %89 : vector<16x16xi1>, vector<16x16xf32>
    %cst_34 = arith.constant 0.000000e+00 : f32
    %91 = vector.broadcast %cst_34 : f32 to vector<16x16xf32>
    %92 = arith.cmpf ogt, %1, %91 : vector<16x16xf32>
    %cst_35 = arith.constant -1.000000e+30 : f32
    %93 = vector.broadcast %cst_35 : f32 to vector<16x16xf32>
    %94 = arith.select %92, %90, %93 : vector<16x16xi1>, vector<16x16xf32>
    %cst_36 = arith.constant dense<0xFF800000> : vector<16xf32>
    %95 = vector.multi_reduction <maximumf>, %94, %cst_36 [1] : vector<16x16xf32> to vector<16xf32>
    %96 = vector.shape_cast %95 : vector<16xf32> to vector<16x1xf32>
    %97 = vector.broadcast %96 : vector<16x1xf32> to vector<16x16xf32>
    %98 = arith.subf %94, %97 : vector<16x16xf32>
    %99 = math.exp %98 : vector<16x16xf32>
    %cst_37 = arith.constant dense<0.000000e+00> : vector<16xf32>
    %100 = vector.multi_reduction <add>, %99, %cst_37 [1] : vector<16x16xf32> to vector<16xf32>
    %101 = vector.shape_cast %100 : vector<16xf32> to vector<16x1xf32>
    %cst_38 = arith.constant 9.99999968E-21 : f32
    %102 = vector.broadcast %cst_38 : f32 to vector<16x1xf32>
    %103 = arith.maximumf %101, %102 : vector<16x1xf32>
    %104 = tpu.reciprocal %103 {approx = true} : vector<16x1xf32> -> vector<16x1xf32>
    %105 = vector.broadcast %104 : vector<16x1xf32> to vector<16x16xf32>
    %106 = arith.mulf %99, %105 : vector<16x16xf32>
    %107 = arith.truncf %106 : vector<16x16xf32> to vector<16x16xbf16>
    %108 = arith.truncf %80 : vector<16x64xf32> to vector<16x64xbf16>
    %cst_39 = arith.constant dense<0.000000e+00> : vector<16x64xf32>
    %109 = tpu.matmul %107, %108, %cst_39 {dimension_numbers = #tpu.dot_dimension_numbers<[1], [0], [0], [1], [0, 0, 1, 1], [], []>} : vector<16x16xbf16>, vector<16x64xbf16>, vector<16x64xf32> -> vector<16x64xf32>
    %110 = vector.extract_strided_slice %76 {offsets = [0, 64], sizes = [16, 64], strides = [1, 1]} : vector<16x132xf32> to vector<16x64xf32>
    %111 = vector.extract_strided_slice %79 {offsets = [1, 0], sizes = [1, 16], strides = [1, 1]} : vector<4x16xf32> to vector<1x16xf32>
    %112 = vector.extract_strided_slice %78 {offsets = [0, 3], sizes = [16, 1], strides = [1, 1]} : vector<16x4xf32> to vector<16x1xf32>
    %113 = vector.broadcast %112 : vector<16x1xf32> to vector<16x16xf32>
    %114 = vector.broadcast %111 : vector<1x16xf32> to vector<16x16xf32>
    %115 = arith.addf %113, %114 : vector<16x16xf32>
    %cst_40 = arith.constant 0.000000e+00 : f32
    %116 = vector.broadcast %cst_40 : f32 to vector<16x16xf32>
    %117 = arith.cmpf ogt, %115, %116 : vector<16x16xf32>
    %cst_41 = arith.constant 2.000000e-01 : f32
    %118 = vector.broadcast %cst_41 : f32 to vector<16x16xf32>
    %119 = arith.mulf %118, %115 : vector<16x16xf32>
    %120 = arith.select %117, %115, %119 : vector<16x16xi1>, vector<16x16xf32>
    %cst_42 = arith.constant 0.000000e+00 : f32
    %121 = vector.broadcast %cst_42 : f32 to vector<16x16xf32>
    %122 = arith.cmpf ogt, %1, %121 : vector<16x16xf32>
    %cst_43 = arith.constant -1.000000e+30 : f32
    %123 = vector.broadcast %cst_43 : f32 to vector<16x16xf32>
    %124 = arith.select %122, %120, %123 : vector<16x16xi1>, vector<16x16xf32>
    %cst_44 = arith.constant dense<0xFF800000> : vector<16xf32>
    %125 = vector.multi_reduction <maximumf>, %124, %cst_44 [1] : vector<16x16xf32> to vector<16xf32>
    %126 = vector.shape_cast %125 : vector<16xf32> to vector<16x1xf32>
    %127 = vector.broadcast %126 : vector<16x1xf32> to vector<16x16xf32>
    %128 = arith.subf %124, %127 : vector<16x16xf32>
    %129 = math.exp %128 : vector<16x16xf32>
    %cst_45 = arith.constant dense<0.000000e+00> : vector<16xf32>
    %130 = vector.multi_reduction <add>, %129, %cst_45 [1] : vector<16x16xf32> to vector<16xf32>
    %131 = vector.shape_cast %130 : vector<16xf32> to vector<16x1xf32>
    %cst_46 = arith.constant 9.99999968E-21 : f32
    %132 = vector.broadcast %cst_46 : f32 to vector<16x1xf32>
    %133 = arith.maximumf %131, %132 : vector<16x1xf32>
    %134 = tpu.reciprocal %133 {approx = true} : vector<16x1xf32> -> vector<16x1xf32>
    %135 = vector.broadcast %134 : vector<16x1xf32> to vector<16x16xf32>
    %136 = arith.mulf %129, %135 : vector<16x16xf32>
    %137 = arith.truncf %136 : vector<16x16xf32> to vector<16x16xbf16>
    %138 = arith.truncf %110 : vector<16x64xf32> to vector<16x64xbf16>
    %cst_47 = arith.constant dense<0.000000e+00> : vector<16x64xf32>
    %139 = tpu.matmul %137, %138, %cst_47 {dimension_numbers = #tpu.dot_dimension_numbers<[1], [0], [0], [1], [0, 0, 1, 1], [], []>} : vector<16x16xbf16>, vector<16x64xbf16>, vector<16x64xf32> -> vector<16x64xf32>
    %140 = tpu.concatenate %109, %139 in 1 : vector<16x64xf32>, vector<16x64xf32> -> vector<16x128xf32>
    %141 = vector.broadcast %77 : vector<1x128xf32> to vector<16x128xf32>
    %142 = arith.addf %140, %141 : vector<16x128xf32>
    %cst_48 = arith.constant 0.000000e+00 : f32
    %143 = vector.broadcast %cst_48 : f32 to vector<16x128xf32>
    %144 = arith.maximumf %142, %143 : vector<16x128xf32>
    %c0_49 = arith.constant 0 : index
    %c0_50 = arith.constant 0 : index
    %145 = vector.load %arg7[%c0_49, %c0_50] : memref<132x132xf32, #tpu.memory_space<vmem>>, vector<132x132xf32>
    %cst_51 = arith.constant dense<0.000000e+00> : vector<16x132xf32>
    %146 = tpu.matmul %0, %145, %cst_51 {dimension_numbers = #tpu.dot_dimension_numbers<[1], [0], [0], [1], [0, 0, 1, 1], [], []>} : vector<16x132xf32>, vector<132x132xf32>, vector<16x132xf32> -> vector<16x132xf32>
    %c0_52 = arith.constant 0 : index
    %c0_53 = arith.constant 0 : index
    %147 = vector.load %arg8[%c0_52, %c0_53] : memref<128x132xf32, #tpu.memory_space<vmem>>, vector<128x132xf32>
    %cst_54 = arith.constant dense<0.000000e+00> : vector<16x132xf32>
    %148 = tpu.matmul %144, %147, %cst_54 {dimension_numbers = #tpu.dot_dimension_numbers<[1], [0], [0], [1], [0, 0, 1, 1], [], []>} : vector<16x128xf32>, vector<128x132xf32>, vector<16x132xf32> -> vector<16x132xf32>
    %149 = arith.addf %146, %148 : vector<16x132xf32>
    %c0_55 = arith.constant 0 : index
    %c0_56 = arith.constant 0 : index
    %150 = vector.load %arg9[%c0_55, %c0_56] : memref<1x128xf32, #tpu.memory_space<vmem>>, vector<1x128xf32>
    %151 = vector.extract_strided_slice %149 {offsets = [0, 128], sizes = [16, 4], strides = [1, 1]} : vector<16x132xf32> to vector<16x4xf32>
    %152 = tpu.transpose %151, [1, 0] : vector<16x4xf32> -> vector<4x16xf32>
    %153 = vector.extract_strided_slice %149 {offsets = [0, 0], sizes = [16, 64], strides = [1, 1]} : vector<16x132xf32> to vector<16x64xf32>
    %154 = vector.extract_strided_slice %152 {offsets = [0, 0], sizes = [1, 16], strides = [1, 1]} : vector<4x16xf32> to vector<1x16xf32>
    %155 = vector.extract_strided_slice %151 {offsets = [0, 2], sizes = [16, 1], strides = [1, 1]} : vector<16x4xf32> to vector<16x1xf32>
    %156 = vector.broadcast %155 : vector<16x1xf32> to vector<16x16xf32>
    %157 = vector.broadcast %154 : vector<1x16xf32> to vector<16x16xf32>
    %158 = arith.addf %156, %157 : vector<16x16xf32>
    %cst_57 = arith.constant 0.000000e+00 : f32
    %159 = vector.broadcast %cst_57 : f32 to vector<16x16xf32>
    %160 = arith.cmpf ogt, %158, %159 : vector<16x16xf32>
    %cst_58 = arith.constant 2.000000e-01 : f32
    %161 = vector.broadcast %cst_58 : f32 to vector<16x16xf32>
    %162 = arith.mulf %161, %158 : vector<16x16xf32>
    %163 = arith.select %160, %158, %162 : vector<16x16xi1>, vector<16x16xf32>
    %cst_59 = arith.constant 0.000000e+00 : f32
    %164 = vector.broadcast %cst_59 : f32 to vector<16x16xf32>
    %165 = arith.cmpf ogt, %1, %164 : vector<16x16xf32>
    %cst_60 = arith.constant -1.000000e+30 : f32
    %166 = vector.broadcast %cst_60 : f32 to vector<16x16xf32>
    %167 = arith.select %165, %163, %166 : vector<16x16xi1>, vector<16x16xf32>
    %cst_61 = arith.constant dense<0xFF800000> : vector<16xf32>
    %168 = vector.multi_reduction <maximumf>, %167, %cst_61 [1] : vector<16x16xf32> to vector<16xf32>
    %169 = vector.shape_cast %168 : vector<16xf32> to vector<16x1xf32>
    %170 = vector.broadcast %169 : vector<16x1xf32> to vector<16x16xf32>
    %171 = arith.subf %167, %170 : vector<16x16xf32>
    %172 = math.exp %171 : vector<16x16xf32>
    %cst_62 = arith.constant dense<0.000000e+00> : vector<16xf32>
    %173 = vector.multi_reduction <add>, %172, %cst_62 [1] : vector<16x16xf32> to vector<16xf32>
    %174 = vector.shape_cast %173 : vector<16xf32> to vector<16x1xf32>
    %cst_63 = arith.constant 9.99999968E-21 : f32
    %175 = vector.broadcast %cst_63 : f32 to vector<16x1xf32>
    %176 = arith.maximumf %174, %175 : vector<16x1xf32>
    %177 = tpu.reciprocal %176 {approx = true} : vector<16x1xf32> -> vector<16x1xf32>
    %178 = vector.broadcast %177 : vector<16x1xf32> to vector<16x16xf32>
    %179 = arith.mulf %172, %178 : vector<16x16xf32>
    %180 = arith.truncf %179 : vector<16x16xf32> to vector<16x16xbf16>
    %181 = arith.truncf %153 : vector<16x64xf32> to vector<16x64xbf16>
    %cst_64 = arith.constant dense<0.000000e+00> : vector<16x64xf32>
    %182 = tpu.matmul %180, %181, %cst_64 {dimension_numbers = #tpu.dot_dimension_numbers<[1], [0], [0], [1], [0, 0, 1, 1], [], []>} : vector<16x16xbf16>, vector<16x64xbf16>, vector<16x64xf32> -> vector<16x64xf32>
    %183 = vector.extract_strided_slice %149 {offsets = [0, 64], sizes = [16, 64], strides = [1, 1]} : vector<16x132xf32> to vector<16x64xf32>
    %184 = vector.extract_strided_slice %152 {offsets = [1, 0], sizes = [1, 16], strides = [1, 1]} : vector<4x16xf32> to vector<1x16xf32>
    %185 = vector.extract_strided_slice %151 {offsets = [0, 3], sizes = [16, 1], strides = [1, 1]} : vector<16x4xf32> to vector<16x1xf32>
    %186 = vector.broadcast %185 : vector<16x1xf32> to vector<16x16xf32>
    %187 = vector.broadcast %184 : vector<1x16xf32> to vector<16x16xf32>
    %188 = arith.addf %186, %187 : vector<16x16xf32>
    %cst_65 = arith.constant 0.000000e+00 : f32
    %189 = vector.broadcast %cst_65 : f32 to vector<16x16xf32>
    %190 = arith.cmpf ogt, %188, %189 : vector<16x16xf32>
    %cst_66 = arith.constant 2.000000e-01 : f32
    %191 = vector.broadcast %cst_66 : f32 to vector<16x16xf32>
    %192 = arith.mulf %191, %188 : vector<16x16xf32>
    %193 = arith.select %190, %188, %192 : vector<16x16xi1>, vector<16x16xf32>
    %cst_67 = arith.constant 0.000000e+00 : f32
    %194 = vector.broadcast %cst_67 : f32 to vector<16x16xf32>
    %195 = arith.cmpf ogt, %1, %194 : vector<16x16xf32>
    %cst_68 = arith.constant -1.000000e+30 : f32
    %196 = vector.broadcast %cst_68 : f32 to vector<16x16xf32>
    %197 = arith.select %195, %193, %196 : vector<16x16xi1>, vector<16x16xf32>
    %cst_69 = arith.constant dense<0xFF800000> : vector<16xf32>
    %198 = vector.multi_reduction <maximumf>, %197, %cst_69 [1] : vector<16x16xf32> to vector<16xf32>
    %199 = vector.shape_cast %198 : vector<16xf32> to vector<16x1xf32>
    %200 = vector.broadcast %199 : vector<16x1xf32> to vector<16x16xf32>
    %201 = arith.subf %197, %200 : vector<16x16xf32>
    %202 = math.exp %201 : vector<16x16xf32>
    %cst_70 = arith.constant dense<0.000000e+00> : vector<16xf32>
    %203 = vector.multi_reduction <add>, %202, %cst_70 [1] : vector<16x16xf32> to vector<16xf32>
    %204 = vector.shape_cast %203 : vector<16xf32> to vector<16x1xf32>
    %cst_71 = arith.constant 9.99999968E-21 : f32
    %205 = vector.broadcast %cst_71 : f32 to vector<16x1xf32>
    %206 = arith.maximumf %204, %205 : vector<16x1xf32>
    %207 = tpu.reciprocal %206 {approx = true} : vector<16x1xf32> -> vector<16x1xf32>
    %208 = vector.broadcast %207 : vector<16x1xf32> to vector<16x16xf32>
    %209 = arith.mulf %202, %208 : vector<16x16xf32>
    %210 = arith.truncf %209 : vector<16x16xf32> to vector<16x16xbf16>
    %211 = arith.truncf %183 : vector<16x64xf32> to vector<16x64xbf16>
    %cst_72 = arith.constant dense<0.000000e+00> : vector<16x64xf32>
    %212 = tpu.matmul %210, %211, %cst_72 {dimension_numbers = #tpu.dot_dimension_numbers<[1], [0], [0], [1], [0, 0, 1, 1], [], []>} : vector<16x16xbf16>, vector<16x64xbf16>, vector<16x64xf32> -> vector<16x64xf32>
    %213 = tpu.concatenate %182, %212 in 1 : vector<16x64xf32>, vector<16x64xf32> -> vector<16x128xf32>
    %214 = vector.broadcast %150 : vector<1x128xf32> to vector<16x128xf32>
    %215 = arith.addf %213, %214 : vector<16x128xf32>
    %cst_73 = arith.constant 0.000000e+00 : f32
    %216 = vector.broadcast %cst_73 : f32 to vector<16x128xf32>
    %217 = arith.maximumf %215, %216 : vector<16x128xf32>
    %c0_74 = arith.constant 0 : index
    %c0_75 = arith.constant 0 : index
    %218 = vector.load %arg10[%c0_74, %c0_75] : memref<16x128xf32, #tpu.memory_space<vmem>>, vector<16x128xf32>
    tpu.vector_store %arg10[%c0_74, %c0_75], %217 {strides = array<i32>} : memref<16x128xf32, #tpu.memory_space<vmem>>, vector<16x128xf32>,
    return
  }
}

module attributes {stable_mosaic.version = 11 : i64} {
  func.func @_fc_kernel(%arg0: memref<16x4xf32, #tpu.memory_space<vmem>>, %arg1: memref<16x128xf32, #tpu.memory_space<vmem>>, %arg2: memref<4x64xf32, #tpu.memory_space<vmem>>, %arg3: memref<128x64xf32, #tpu.memory_space<vmem>>, %arg4: memref<1x64xf32, #tpu.memory_space<vmem>>, %arg5: memref<4x1xf32, #tpu.memory_space<vmem>>, %arg6: memref<64x1xf32, #tpu.memory_space<vmem>>, %arg7: memref<1x1xf32, #tpu.memory_space<vmem>>, %arg8: memref<16x1xf32, #tpu.memory_space<vmem>>) attributes {dimension_semantics = [], scalar_prefetch = 0 : i64, scratch_operands = 0 : i64, tpu.core_type = #tpu.core_type<tc>} {
    %c0 = arith.constant 0 : index
    %c0_0 = arith.constant 0 : index
    %0 = vector.load %arg0[%c0, %c0_0] : memref<16x4xf32, #tpu.memory_space<vmem>>, vector<16x4xf32>
    %c0_1 = arith.constant 0 : index
    %c0_2 = arith.constant 0 : index
    %1 = vector.load %arg1[%c0_1, %c0_2] : memref<16x128xf32, #tpu.memory_space<vmem>>, vector<16x128xf32>
    %c0_3 = arith.constant 0 : index
    %c0_4 = arith.constant 0 : index
    %2 = vector.load %arg2[%c0_3, %c0_4] : memref<4x64xf32, #tpu.memory_space<vmem>>, vector<4x64xf32>
    %cst = arith.constant dense<0.000000e+00> : vector<16x64xf32>
    %3 = tpu.matmul %0, %2, %cst {dimension_numbers = #tpu.dot_dimension_numbers<[1], [0], [0], [1], [0, 0, 1, 1], [], []>} : vector<16x4xf32>, vector<4x64xf32>, vector<16x64xf32> -> vector<16x64xf32>
    %c0_5 = arith.constant 0 : index
    %c0_6 = arith.constant 0 : index
    %4 = vector.load %arg3[%c0_5, %c0_6] : memref<128x64xf32, #tpu.memory_space<vmem>>, vector<128x64xf32>
    %cst_7 = arith.constant dense<0.000000e+00> : vector<16x64xf32>
    %5 = tpu.matmul %1, %4, %cst_7 {dimension_numbers = #tpu.dot_dimension_numbers<[1], [0], [0], [1], [0, 0, 1, 1], [], []>} : vector<16x128xf32>, vector<128x64xf32>, vector<16x64xf32> -> vector<16x64xf32>
    %6 = arith.addf %3, %5 : vector<16x64xf32>
    %c0_8 = arith.constant 0 : index
    %c0_9 = arith.constant 0 : index
    %7 = vector.load %arg4[%c0_8, %c0_9] : memref<1x64xf32, #tpu.memory_space<vmem>>, vector<1x64xf32>
    %8 = vector.broadcast %7 : vector<1x64xf32> to vector<16x64xf32>
    %9 = arith.addf %6, %8 : vector<16x64xf32>
    %cst_10 = arith.constant 0.000000e+00 : f32
    %10 = vector.broadcast %cst_10 : f32 to vector<16x64xf32>
    %11 = arith.maximumf %9, %10 : vector<16x64xf32>
    %c0_11 = arith.constant 0 : index
    %c0_12 = arith.constant 0 : index
    %12 = vector.load %arg5[%c0_11, %c0_12] : memref<4x1xf32, #tpu.memory_space<vmem>>, vector<4x1xf32>
    %cst_13 = arith.constant dense<0.000000e+00> : vector<16x1xf32>
    %13 = tpu.matmul %0, %12, %cst_13 {dimension_numbers = #tpu.dot_dimension_numbers<[1], [0], [0], [1], [0, 0, 1, 1], [], []>} : vector<16x4xf32>, vector<4x1xf32>, vector<16x1xf32> -> vector<16x1xf32>
    %c0_14 = arith.constant 0 : index
    %c0_15 = arith.constant 0 : index
    %14 = vector.load %arg6[%c0_14, %c0_15] : memref<64x1xf32, #tpu.memory_space<vmem>>, vector<64x1xf32>
    %cst_16 = arith.constant dense<0.000000e+00> : vector<16x1xf32>
    %15 = tpu.matmul %11, %14, %cst_16 {dimension_numbers = #tpu.dot_dimension_numbers<[1], [0], [0], [1], [0, 0, 1, 1], [], []>} : vector<16x64xf32>, vector<64x1xf32>, vector<16x1xf32> -> vector<16x1xf32>
    %16 = arith.addf %13, %15 : vector<16x1xf32>
    %c0_17 = arith.constant 0 : index
    %c0_18 = arith.constant 0 : index
    %17 = vector.load %arg7[%c0_17, %c0_18] : memref<1x1xf32, #tpu.memory_space<vmem>>, vector<1x1xf32>
    %18 = vector.broadcast %17 : vector<1x1xf32> to vector<16x1xf32>
    %19 = arith.addf %16, %18 : vector<16x1xf32>
    %cst_19 = arith.constant 0.000000e+00 : f32
    %20 = vector.broadcast %cst_19 : f32 to vector<16x1xf32>
    %21 = arith.subf %20, %19 : vector<16x1xf32>
    %22 = math.exp %21 : vector<16x1xf32>
    %cst_20 = arith.constant 1.000000e+00 : f32
    %23 = vector.broadcast %cst_20 : f32 to vector<16x1xf32>
    %24 = arith.addf %23, %22 : vector<16x1xf32>
    %25 = tpu.reciprocal %24 {approx = true} : vector<16x1xf32> -> vector<16x1xf32>
    %c0_21 = arith.constant 0 : index
    %c0_22 = arith.constant 0 : index
    %26 = vector.load %arg8[%c0_21, %c0_22] : memref<16x1xf32, #tpu.memory_space<vmem>>, vector<16x1xf32>
    tpu.vector_store %arg8[%c0_21, %c0_22], %25 {strides = array<i32>} : memref<16x1xf32, #tpu.memory_space<vmem>>, vector<16x1xf32>,
    return
  }
}

</mosaic_0001>

<llo_original>
// kernel: custom-call.4
$region0: #{custom-call.4}
  %s0 = inlined_call_operand.vmem [shape: pred[16], index: 0, kind: output, shape index: {}]

// kernel: custom-call.5
$region0: #{custom-call.5}
  %s0 = inlined_call_operand.vmem [shape: s32[16], index: 0, kind: output, shape index: {}]

// kernel: forward.7
$region0: #{forward.7}
  #allocation0 [shape = 'u32[]', space=smem, size = 0x4, offset = 0x4, fixed_abs, tag = 'smem constant byte address 0x4 - core index']
  #allocation1 [shape = 'u32[144,128]{1,0:T(1,128)}', space=vmem, size = 0x12000, scoped, tag = 'internal scratch']
  #allocation2 [shape = 'f32[1,1]{1,0:T(1,128)S(1)}', space=vmem, size = 0x200, scoped, tag = 'scoped memory for forward.7']
  %s0 = inlined_call_operand.vmem [shape: f32[32,132], index: 0, kind: input, shape index: {}]
  %s1 = inlined_call_operand.vmem [shape: f32[32,132], index: 1, kind: input, shape index: {}]
  %s2 = inlined_call_operand.vmem [shape: f32[132,1], index: 2, kind: input, shape index: {}]
  %s3 = inlined_call_operand.vmem [shape: f32[132,1], index: 3, kind: input, shape index: {}]
  %s4 = inlined_call_operand.<no memory space> [shape: f32[1,1], index: 4, kind: input, shape index: {}]
  %s5 = inlined_call_operand.vmem [shape: f32[32,1], index: 5, kind: output, shape index: {}]
  %s6 = sld [smem:[#allocation0]]
  $region30: #{forward.7} parent=0
    _
  %s8 = ssub.s32 1, %s6
  %s9 = scalar_select 0, %s8, %s6
  %v10 = vstv %s4
  %11 = vst [vmem:[#allocation2] sm:$0x1] %v10
  // Predicated region
  $region2: #{forward.7} parent=0 // pred_check
    _
  $region3: #{forward.7} parent=0 // pred_check_branch
    %13 = sbr.rel (0) target = $region5
  $region4: #{forward.7} parent=0 // pred_region
    _
  $region5: #{forward.7} parent=0 // pred_fallthru
    _
  // Predicated region
  $region6: #{forward.7} parent=0 // pred_check
    _
  $region7: #{forward.7} parent=0 // pred_check_branch
    %15 = sbr.rel (0) target = $region9
  $region8: #{forward.7} parent=0 // pred_region
    _
  $region9: #{forward.7} parent=0 // pred_fallthru
    _
  // Predicated region
  $region10: #{forward.7} parent=0 // pred_check
    _
  $region11: #{forward.7} parent=0 // pred_check_branch
    %17 = sbr.rel (0) target = $region13
  $region12: #{forward.7} parent=0 // pred_region
    _
  $region13: #{forward.7} parent=0 // pred_fallthru
    _
  // Predicated region
  $region14: #{forward.7} parent=0 // pred_check
    _
  $region15: #{forward.7} parent=0 // pred_check_branch
    %19 = sbr.rel (0) target = $region17
  $region16: #{forward.7} parent=0 // pred_region
    _
  $region17: #{forward.7} parent=0 // pred_fallthru
    _
  // Predicated region
  $region18: #{forward.7} parent=0 // pred_check
    _
  $region19: #{forward.7} parent=0 // pred_check_branch
    %21 = sbr.rel (0) target = $region21
  $region20: #{forward.7} parent=0 // pred_region
    _
  $region21: #{forward.7} parent=0 // pred_fallthru
    _
  %v22 = vld [vmem:[%s0] sm:$0xff]
  %v23 = vld [vmem:[%s0 + $0x8] sm:$0xff]
  %v24 = vld [vmem:[%s0 + $0x10] sm:$0xff]
  %v25 = vld [vmem:[%s0 + $0x18] sm:$0xff]
  %v26 = vld [vmem:[%s0 + $0x20] sm:$0xff]
  %v27 = vld [vmem:[%s0 + $0x28] sm:$0xff]
  %v28 = vld [vmem:[%s0 + $0x30] sm:$0xff]
  %v29 = vld [vmem:[%s0 + $0x38] sm:$0xff]
  %v30 = vld [vmem:[%s2] sm:$0xff]
  %v31 = vld [vmem:[%s2 + $0x8] sm:$0xff]
  %v32 = vld [vmem:[%s2 + $0x10] sm:$0xff]
  %v33 = vld [vmem:[%s2 + $0x18] sm:$0xff]
  %v34 = vld [vmem:[%s2 + $0x20] sm:$0xff]
  %v35 = vld [vmem:[%s2 + $0x28] sm:$0xff]
  %v36 = vld [vmem:[%s2 + $0x30] sm:$0xff]
  %v37 = vld [vmem:[%s2 + $0x38] sm:$0xff]
  %v38 = vld [vmem:[%s2 + $0x40] sm:$0xff]
  %v39 = vld [vmem:[%s2 + $0x48] sm:$0xff]
  %v40 = vld [vmem:[%s2 + $0x50] sm:$0xff]
  %v41 = vld [vmem:[%s2 + $0x58] sm:$0xff]
  %v42 = vld [vmem:[%s2 + $0x60] sm:$0xff]
  %v43 = vld [vmem:[%s2 + $0x68] sm:$0xff]
  %v44 = vld [vmem:[%s2 + $0x70] sm:$0xff]
  %v45 = vld [vmem:[%s2 + $0x78] sm:$0xff]
  %v46 = vld [vmem:[%s2 + $0x80] sm:$0xf]
  %v47 = vld [vmem:[%s1] sm:$0xff]
  %v48 = vld [vmem:[%s1 + $0x8] sm:$0xff]
  %v49 = vld [vmem:[%s1 + $0x10] sm:$0xff]
  %v50 = vld [vmem:[%s1 + $0x18] sm:$0xff]
  %v51 = vld [vmem:[%s1 + $0x20] sm:$0xff]
  %v52 = vld [vmem:[%s1 + $0x28] sm:$0xff]
  %v53 = vld [vmem:[%s1 + $0x30] sm:$0xff]
  %v54 = vld [vmem:[%s1 + $0x38] sm:$0xff]
  %v55 = vld [vmem:[%s3] sm:$0xff]
  %v56 = vld [vmem:[%s3 + $0x8] sm:$0xff]
  %v57 = vld [vmem:[%s3 + $0x10] sm:$0xff]
  %v58 = vld [vmem:[%s3 + $0x18] sm:$0xff]
  %v59 = vld [vmem:[%s3 + $0x20] sm:$0xff]
  %v60 = vld [vmem:[%s3 + $0x28] sm:$0xff]
  %v61 = vld [vmem:[%s3 + $0x30] sm:$0xff]
  %v62 = vld [vmem:[%s3 + $0x38] sm:$0xff]
  %v63 = vld [vmem:[%s3 + $0x40] sm:$0xff]
  %v64 = vld [vmem:[%s3 + $0x48] sm:$0xff]
  %v65 = vld [vmem:[%s3 + $0x50] sm:$0xff]
  %v66 = vld [vmem:[%s3 + $0x58] sm:$0xff]
  %v67 = vld [vmem:[%s3 + $0x60] sm:$0xff]
  %v68 = vld [vmem:[%s3 + $0x68] sm:$0xff]
  %v69 = vld [vmem:[%s3 + $0x70] sm:$0xff]
  %v70 = vld [vmem:[%s3 + $0x78] sm:$0xff]
  %v71 = vld [vmem:[%s3 + $0x80] sm:$0xf]
  %vm72 = vcmask 31744
  %v74 = vsel %vm72, %v48, 0
  %v77 = vsel %vm72, %v50, 0
  %v80 = vsel %vm72, %v52, 0
  %v83 = vsel %vm72, %v54, 0
  %vm85 = vcmask 1043456
  %v87 = vsel %vm85, %v71, 0
  %89 = vmatprep.subr.mxu0 0.0
  %90 = vmatpush1.msra.mxu0 %v70
  %91 = vmatprep.subr.mxu0 0.0
  %92 = vmatpush1.msra.mxu0 %v69
  %93 = vmatprep.subr.mxu0 0.0
  %94 = vmatpush1.msra.mxu0 %v68
  %95 = vmatprep.subr.mxu0 0.0
  %96 = vmatpush1.msra.mxu0 %v67
  %97 = vmatprep.subr.mxu0 0.0
  %98 = vmatpush1.msra.mxu0 %v66
  %99 = vmatprep.subr.mxu0 0.0
  %100 = vmatpush1.msra.mxu0 %v65
  %101 = vmatprep.subr.mxu0 0.0
  %102 = vmatpush1.msra.mxu0 %v64
  %103 = vmatprep.subr.mxu0 0.0
  %104 = vmatpush1.msra.mxu0 %v63
  %105 = vmatprep.subr.mxu0 0.0
  %106 = vmatpush1.msra.mxu0 %v62
  %107 = vmatprep.subr.mxu0 0.0
  %108 = vmatpush1.msra.mxu0 %v61
  %109 = vmatprep.subr.mxu0 0.0
  %110 = vmatpush1.msra.mxu0 %v60
  %111 = vmatprep.subr.mxu0 0.0
  %112 = vmatpush1.msra.mxu0 %v59
  %113 = vmatprep.subr.mxu0 0.0
  %114 = vmatpush1.msra.mxu0 %v58
  %115 = vmatprep.subr.mxu0 0.0
  %116 = vmatpush1.msra.mxu0 %v57
  %117 = vmatprep.subr.mxu0 0.0
  %118 = vmatpush1.msra.mxu0 %v56
  %119 = vmatprep.subr.mxu0 0.0
  %120 = vmatpush1.msra.mxu0 %v55
  %121 = vmatprep.subr.mxu0 0.0
  %122 = vmatpush2.msra.mxu0 0.0
  %123 = vmatprep.subr.mxu0 0.0
  %124 = vmatpush2.msra.mxu0 0.0
  %125 = vmatprep.subr.mxu0 0.0
  %126 = vmatpush2.msra.mxu0 0.0
  %127 = vmatprep.subr.mxu0 0.0
  %128 = vmatpush2.msra.mxu0 0.0
  %129 = vmatprep.subr.mxu0 0.0
  %130 = vmatpush2.msra.mxu0 0.0
  %131 = vmatprep.subr.mxu0 0.0
  %132 = vmatpush2.msra.mxu0 0.0
  %133 = vmatprep.subr.mxu0 0.0
  %134 = vmatpush2.msra.mxu0 0.0
  %135 = vmatprep.subr.mxu0 0.0
  %136 = vmatpush2.msra.mxu0 0.0
  %137 = vmatprep.subr.mxu0 0.0
  %138 = vmatpush2.msra.mxu0 0.0
  %139 = vmatprep.subr.mxu0 0.0
  %140 = vmatpush2.msra.mxu0 0.0
  %141 = vmatprep.subr.mxu0 0.0
  %142 = vmatpush2.msra.mxu0 0.0
  %143 = vmatprep.subr.mxu0 0.0
  %144 = vmatpush2.msra.mxu0 0.0
  %145 = vmatprep.subr.mxu0 0.0
  %146 = vmatpush2.msra.mxu0 0.0
  %147 = vmatprep.subr.mxu0 0.0
  %148 = vmatpush2.msra.mxu0 0.0
  %149 = vmatprep.subr.mxu0 0.0
  %150 = vmatpush2.msra.mxu0 0.0
  %151 = vmatprep.subr.mxu0 0.0
  %152 = vmatpush2.msra.mxu0 %v87
  %153 = vmatprep.mubr.f32.mxu0 %v74
  %154 = vmatmul.mubr.f32.gmra.mxu0 %v47
  %v155 = vpop.f32.mrf.mxu0
  %v156 = vadd.f32 0.0, %v155
  %v157 = vpop.f32.mrf.mxu0
  %158 = vmatprep.mubr.f32.mxu0 %v77
  %159 = vmatmul.mubr.f32.gmra.mxu0 %v49
  %v160 = vpop.f32.mrf.mxu0
  %v161 = vadd.f32 0.0, %v160
  %v162 = vpop.f32.mrf.mxu0
  %163 = vmatprep.mubr.f32.mxu0 %v80
  %164 = vmatmul.mubr.f32.gmra.mxu0 %v51
  %v165 = vpop.f32.mrf.mxu0
  %v166 = vadd.f32 0.0, %v165
  %v167 = vpop.f32.mrf.mxu0
  %168 = vmatprep.mubr.f32.mxu0 %v83
  %169 = vmatmul.mubr.f32.gmra.mxu0 %v53
  %v170 = vpop.f32.mrf.mxu0
  %v171 = vadd.f32 0.0, %v170
  %v172 = vpop.f32.mrf.mxu0
  %173 = vdwg.mxu0
  %v175 = vsel %vm72, %v23, 0
  %v178 = vsel %vm72, %v25, 0
  %v181 = vsel %vm72, %v27, 0
  %v184 = vsel %vm72, %v29, 0
  %v187 = vsel %vm85, %v46, 0
  %189 = vmatprep.subr.mxu0 0.0
  %190 = vmatpush1.msra.mxu0 %v45
  %191 = vmatprep.subr.mxu0 0.0
  %192 = vmatpush1.msra.mxu0 %v44
  %193 = vmatprep.subr.mxu0 0.0
  %194 = vmatpush1.msra.mxu0 %v43
  %195 = vmatprep.subr.mxu0 0.0
  %196 = vmatpush1.msra.mxu0 %v42
  %197 = vmatprep.subr.mxu0 0.0
  %198 = vmatpush1.msra.mxu0 %v41
  %199 = vmatprep.subr.mxu0 0.0
  %200 = vmatpush1.msra.mxu0 %v40
  %201 = vmatprep.subr.mxu0 0.0
  %202 = vmatpush1.msra.mxu0 %v39
  %203 = vmatprep.subr.mxu0 0.0
  %204 = vmatpush1.msra.mxu0 %v38
  %205 = vmatprep.subr.mxu0 0.0
  %206 = vmatpush1.msra.mxu0 %v37
  %207 = vmatprep.subr.mxu0 0.0
  %208 = vmatpush1.msra.mxu0 %v36
  %209 = vmatprep.subr.mxu0 0.0
  %210 = vmatpush1.msra.mxu0 %v35
  %211 = vmatprep.subr.mxu0 0.0
  %212 = vmatpush1.msra.mxu0 %v34
  %213 = vmatprep.subr.mxu0 0.0
  %214 = vmatpush1.msra.mxu0 %v33
  %215 = vmatprep.subr.mxu0 0.0
  %216 = vmatpush1.msra.mxu0 %v32
  %217 = vmatprep.subr.mxu0 0.0
  %218 = vmatpush1.msra.mxu0 %v31
  %219 = vmatprep.subr.mxu0 0.0
  %220 = vmatpush1.msra.mxu0 %v30
  %221 = vmatprep.subr.mxu0 0.0
  %222 = vmatpush2.msra.mxu0 0.0
  %223 = vmatprep.subr.mxu0 0.0
  %224 = vmatpush2.msra.mxu0 0.0
  %225 = vmatprep.subr.mxu0 0.0
  %226 = vmatpush2.msra.mxu0 0.0
  %227 = vmatprep.subr.mxu0 0.0
  %228 = vmatpush2.msra.mxu0 0.0
  %229 = vmatprep.subr.mxu0 0.0
  %230 = vmatpush2.msra.mxu0 0.0
  %231 = vmatprep.subr.mxu0 0.0
  %232 = vmatpush2.msra.mxu0 0.0
  %233 = vmatprep.subr.mxu0 0.0
  %234 = vmatpush2.msra.mxu0 0.0
  %235 = vmatprep.subr.mxu0 0.0
  %236 = vmatpush2.msra.mxu0 0.0
  %237 = vmatprep.subr.mxu0 0.0
  %238 = vmatpush2.msra.mxu0 0.0
  %239 = vmatprep.subr.mxu0 0.0
  %240 = vmatpush2.msra.mxu0 0.0
  %241 = vmatprep.subr.mxu0 0.0
  %242 = vmatpush2.msra.mxu0 0.0
  %243 = vmatprep.subr.mxu0 0.0
  %244 = vmatpush2.msra.mxu0 0.0
  %245 = vmatprep.subr.mxu0 0.0
  %246 = vmatpush2.msra.mxu0 0.0
  %247 = vmatprep.subr.mxu0 0.0
  %248 = vmatpush2.msra.mxu0 0.0
  %249 = vmatprep.subr.mxu0 0.0
  %250 = vmatpush2.msra.mxu0 0.0
  %251 = vmatprep.subr.mxu0 0.0
  %252 = vmatpush2.msra.mxu0 %v187
  %253 = vmatprep.mubr.f32.mxu0 %v175
  %254 = vmatmul.mubr.f32.gmra.mxu0 %v22
  %v255 = vpop.f32.mrf.mxu0
  %v256 = vadd.f32 %v156, %v255
  %v257 = vpop.f32.mrf.mxu0
  %258 = vmatprep.mubr.f32.mxu0 %v178
  %259 = vmatmul.mubr.f32.gmra.mxu0 %v24
  %v260 = vpop.f32.mrf.mxu0
  %v261 = vadd.f32 %v161, %v260
  %v262 = vpop.f32.mrf.mxu0
  %263 = vmatprep.mubr.f32.mxu0 %v181
  %264 = vmatmul.mubr.f32.gmra.mxu0 %v26
  %v265 = vpop.f32.mrf.mxu0
  %v266 = vadd.f32 %v166, %v265
  %v267 = vpop.f32.mrf.mxu0
  %268 = vmatprep.mubr.f32.mxu0 %v184
  %269 = vmatmul.mubr.f32.gmra.mxu0 %v28
  %v270 = vpop.f32.mrf.mxu0
  %v271 = vadd.f32 %v171, %v270
  %v272 = vpop.f32.mrf.mxu0
  %273 = vdwg.mxu0
  %v274 = vld [vmem:[#allocation2] sm:$0x1]
  %v276 = vlaneseq
  %v277 = vshrl.u32 %v276, 7
  %v278 = vsub.s32 0, %v277
  %v279 = vrot.slane %v274, %v278
  %v281 = vadd.f32 %v256, %v279
  %v282 = vadd.f32 %v261, %v279
  %v283 = vadd.f32 %v266, %v279
  %v284 = vadd.f32 %v271, %v279
  %vm285 = vcmask 7168
  %286 = vst.msk [vmem:[%s5] sm:$0xff] %vm285, %v281
  %287 = vst.msk [vmem:[%s5 + $0x8] sm:$0xff] %vm285, %v282
  %288 = vst.msk [vmem:[%s5 + $0x10] sm:$0xff] %vm285, %v283
  %289 = vst.msk [vmem:[%s5 + $0x18] sm:$0xff] %vm285, %v284
  // Predicated region
  $region22: #{forward.7} parent=0 // pred_check
    _
  $region23: #{forward.7} parent=0 // pred_check_branch
    %291 = sbr.rel (0) target = $region25
  $region24: #{forward.7} parent=0 // pred_region
    _
  $region25: #{forward.7} parent=0 // pred_fallthru
    _
  // Predicated region
  $region26: #{forward.7} parent=0 // pred_check
    _
  $region27: #{forward.7} parent=0 // pred_check_branch
    %293 = sbr.rel (0) target = $region29
  $region28: #{forward.7} parent=0 // pred_region
    _
  $region29: #{forward.7} parent=0 // pred_fallthru
    _

// kernel: forward.6
$region0: #{forward.6}
  #allocation0 [shape = 'u32[]', space=smem, size = 0x4, offset = 0x4, fixed_abs, tag = 'smem constant byte address 0x4 - core index']
  #allocation1 [shape = 'u32[144,128]{1,0:T(1,128)}', space=vmem, size = 0x12000, scoped, tag = 'internal scratch']
  %s0 = inlined_call_operand.vmem [shape: f32[16,4], index: 0, kind: input, shape index: {}]
  %s1 = inlined_call_operand.vmem [shape: f32[4,132], index: 1, kind: input, shape index: {}]
  %s2 = inlined_call_operand.vmem [shape: f32[1,128], index: 2, kind: input, shape index: {}]
  %s3 = inlined_call_operand.vmem [shape: f32[16,16], index: 3, kind: input, shape index: {}]
  %s4 = inlined_call_operand.vmem [shape: f32[16,132], index: 4, kind: output, shape index: {}]
  %s5 = sld [smem:[#allocation0]]
  $region26: #{forward.6} parent=0
    _
  %s7 = ssub.s32 1, %s5
  %s8 = scalar_select 0, %s7, %s5
  // Predicated region
  $region2: #{forward.6} parent=0 // pred_check
    _
  $region3: #{forward.6} parent=0 // pred_check_branch
    %10 = sbr.rel (0) target = $region5
  $region4: #{forward.6} parent=0 // pred_region
    _
  $region5: #{forward.6} parent=0 // pred_fallthru
    _
  // Predicated region
  $region6: #{forward.6} parent=0 // pred_check
    _
  $region7: #{forward.6} parent=0 // pred_check_branch
    %12 = sbr.rel (0) target = $region9
  $region8: #{forward.6} parent=0 // pred_region
    _
  $region9: #{forward.6} parent=0 // pred_fallthru
    _
  // Predicated region
  $region10: #{forward.6} parent=0 // pred_check
    _
  $region11: #{forward.6} parent=0 // pred_check_branch
    %14 = sbr.rel (0) target = $region13
  $region12: #{forward.6} parent=0 // pred_region
    _
  $region13: #{forward.6} parent=0 // pred_fallthru
    _
  // Predicated region
  $region14: #{forward.6} parent=0 // pred_check
    _
  $region15: #{forward.6} parent=0 // pred_check_branch
    %16 = sbr.rel (0) target = $region17
  $region16: #{forward.6} parent=0 // pred_region
    _
  $region17: #{forward.6} parent=0 // pred_fallthru
    _
  %v18 = vld [vmem:[%s0] sm:$0xff]
  %v19 = vld [vmem:[%s0 + $0x8] sm:$0xff]
  %v20 = vld [vmem:[%s1] sm:$0xff]
  %v22 = vcombine.high %v20, %v20
  %vm23 = vcmask 31744
  %v25 = vsel %vm23, %v18, 0
  %v28 = vsel %vm23, %v19, 0
  %vm30 = vcmask 1043456
  %v31 = vsel %vm30, %v20, 0
  %v33 = vsel %vm30, %v22, 0
  %35 = vmatprep.subr.mxu0 0.0
  %36 = vmatpush1.msra.mxu0 0.0
  %37 = vmatprep.subr.mxu0 0.0
  %38 = vmatpush1.msra.mxu0 0.0
  %39 = vmatprep.subr.mxu0 0.0
  %40 = vmatpush1.msra.mxu0 0.0
  %41 = vmatprep.subr.mxu0 0.0
  %42 = vmatpush1.msra.mxu0 0.0
  %43 = vmatprep.subr.mxu0 0.0
  %44 = vmatpush1.msra.mxu0 0.0
  %45 = vmatprep.subr.mxu0 0.0
  %46 = vmatpush1.msra.mxu0 0.0
  %47 = vmatprep.subr.mxu0 0.0
  %48 = vmatpush1.msra.mxu0 0.0
  %49 = vmatprep.subr.mxu0 0.0
  %50 = vmatpush1.msra.mxu0 0.0
  %51 = vmatprep.subr.mxu0 0.0
  %52 = vmatpush1.msra.mxu0 0.0
  %53 = vmatprep.subr.mxu0 0.0
  %54 = vmatpush1.msra.mxu0 0.0
  %55 = vmatprep.subr.mxu0 0.0
  %56 = vmatpush1.msra.mxu0 0.0
  %57 = vmatprep.subr.mxu0 0.0
  %58 = vmatpush1.msra.mxu0 0.0
  %59 = vmatprep.subr.mxu0 0.0
  %60 = vmatpush1.msra.mxu0 0.0
  %61 = vmatprep.subr.mxu0 0.0
  %62 = vmatpush1.msra.mxu0 0.0
  %63 = vmatprep.subr.mxu0 0.0
  %64 = vmatpush1.msra.mxu0 0.0
  %65 = vmatprep.subr.mxu0 %v33
  %66 = vmatpush1.msra.mxu0 %v31
  %67 = vmatprep.subr.mxu0 0.0
  %68 = vmatpush2.msra.mxu0 0.0
  %69 = vmatprep.subr.mxu0 0.0
  %70 = vmatpush2.msra.mxu0 0.0
  %71 = vmatprep.subr.mxu0 0.0
  %72 = vmatpush2.msra.mxu0 0.0
  %73 = vmatprep.subr.mxu0 0.0
  %74 = vmatpush2.msra.mxu0 0.0
  %75 = vmatprep.subr.mxu0 0.0
  %76 = vmatpush2.msra.mxu0 0.0
  %77 = vmatprep.subr.mxu0 0.0
  %78 = vmatpush2.msra.mxu0 0.0
  %79 = vmatprep.subr.mxu0 0.0
  %80 = vmatpush2.msra.mxu0 0.0
  %81 = vmatprep.subr.mxu0 0.0
  %82 = vmatpush2.msra.mxu0 0.0
  %83 = vmatprep.subr.mxu0 0.0
  %84 = vmatpush2.msra.mxu0 0.0
  %85 = vmatprep.subr.mxu0 0.0
  %86 = vmatpush2.msra.mxu0 0.0
  %87 = vmatprep.subr.mxu0 0.0
  %88 = vmatpush2.msra.mxu0 0.0
  %89 = vmatprep.subr.mxu0 0.0
  %90 = vmatpush2.msra.mxu0 0.0
  %91 = vmatprep.subr.mxu0 0.0
  %92 = vmatpush2.msra.mxu0 0.0
  %93 = vmatprep.subr.mxu0 0.0
  %94 = vmatpush2.msra.mxu0 0.0
  %95 = vmatprep.subr.mxu0 0.0
  %96 = vmatpush2.msra.mxu0 0.0
  %97 = vmatprep.subr.mxu0 0.0
  %98 = vmatpush2.msra.mxu0 0.0
  %99 = vmatprep.mubr.f32.mxu0 0.0
  %100 = vmatmul.mubr.f32.gmra.mxu0 %v25
  %v101 = vpop.f32.mrf.mxu0
  %v102 = vadd.f32 0.0, %v101
  %v103 = vpop.f32.mrf.mxu0
  %v104 = vadd.f32 0.0, %v103
  %105 = vmatprep.mubr.f32.mxu0 0.0
  %106 = vmatmul.mubr.f32.gmra.mxu0 %v28
  %v107 = vpop.f32.mrf.mxu0
  %v108 = vadd.f32 0.0, %v107
  %v109 = vpop.f32.mrf.mxu0
  %v110 = vadd.f32 0.0, %v109
  %111 = vdwg.mxu0
  %v112 = vld [vmem:[%s3] sm:$0xff]
  %v113 = vld [vmem:[%s3 + $0x8] sm:$0xff]
  %v114 = vld [vmem:[%s2] sm:$0x1]
  %115 = vxpose.xlu0.b32.start [1/16] %v104, 128
  %116 = vxpose.xlu0.b32.cont [2/16] %v110, 128
  %117 = vxpose.xlu0.b32.cont [3/16] 0.0, 128
  %118 = vxpose.xlu0.b32.cont [4/16] 0.0, 128
  %119 = vxpose.xlu0.b32.cont [5/16] 0.0, 128
  %120 = vxpose.xlu0.b32.cont [6/16] 0.0, 128
  %121 = vxpose.xlu0.b32.cont [7/16] 0.0, 128
  %122 = vxpose.xlu0.b32.cont [8/16] 0.0, 128
  %123 = vxpose.xlu0.b32.cont [9/16] 0.0, 128
  %124 = vxpose.xlu0.b32.cont [10/16] 0.0, 128
  %125 = vxpose.xlu0.b32.cont [11/16] 0.0, 128
  %126 = vxpose.xlu0.b32.cont [12/16] 0.0, 128
  %127 = vxpose.xlu0.b32.cont [13/16] 0.0, 128
  %128 = vxpose.xlu0.b32.cont [14/16] 0.0, 128
  %129 = vxpose.xlu0.b32.cont [15/16] 0.0, 128
  %130 = vxpose.xlu0.b32.end [16/16] 0.0, 128
  %v131 = vpop.trf.xlu0
  %v132 = vpop.trf.xlu0
  %v133 = vpop.trf.xlu0
  %v134 = vpop.trf.xlu0
  %v135 = vpop.trf.xlu0
  %v136 = vpop.trf.xlu0
  %v137 = vpop.trf.xlu0
  %v138 = vpop.trf.xlu0
  %v139 = vpop.trf.xlu0
  %v140 = vpop.trf.xlu0
  %v141 = vpop.trf.xlu0
  %v142 = vpop.trf.xlu0
  %v143 = vpop.trf.xlu0
  %v144 = vpop.trf.xlu0
  %v145 = vpop.trf.xlu0
  %v146 = vpop.trf.xlu0
  %148 = vset.pattern.permute.xlu0 2
  %149 = vperm.xlu0 %148, %v104
  %v150 = vpop.permute.xlu0 %149
  %153 = vset.pattern.permute.xlu0 2
  %154 = vperm.xlu0 %153, %v110
  %v155 = vpop.permute.xlu0 %154
  %v157 = vlaneseq
  %v158 = vshrl.u32 %v157, 7
  %v159 = vsub.s32 0, %v158
  %v160 = vrot.slane %v131, %v159
  %v161 = vadd.f32 %v150, %v160
  %v162 = vadd.f32 %v155, %v160
  %vm163 = vcmp.gt.f32.partialorder %v161, 0.0
  %vm164 = vcmp.gt.f32.partialorder %v162, 0.0
  %v165 = vmul.f32 %v161, 0.2
  %v166 = vmul.f32 %v162, 0.2
  %v167 = vsel %vm163, %v161, %v165
  %v168 = vsel %vm164, %v162, %v166
  %vm169 = vcmp.gt.f32.partialorder %v112, 0.0
  %vm170 = vcmp.gt.f32.partialorder %v113, 0.0
  %v171 = vsel %vm169, %v167, -1e+30
  %v172 = vsel %vm170, %v168, -1e+30
  %vm173 = vcmask 130048
  %v174 = vsel %vm173, %v171, -inf
  %175 = vmax.xlane.f32.xlu0 %v174
  %v176 = vpop.xlane.xlu0 %175
  %v177 = vsel %vm173, %v172, -inf
  %178 = vmax.xlane.f32.xlu0 %v177
  %v179 = vpop.xlane.xlu0 %178
  %v180 = vsub.f32 %v171, %v176
  %v181 = vsub.f32 %v172, %v179
  %v182 = vmul.f32 %v180, 1.442695
  %v183 = vpow.pop %v182
  %v184 = vmul.f32 %v181, 1.442695
  %v185 = vpow.pop %v184
  %v186 = vsel %vm173, %v183, 0.0
  %187 = vadd.xlane.f32.xlu0 %v186
  %v188 = vpop.xlane.xlu0 %187
  %v189 = vsel %vm173, %v185, 0.0
  %190 = vadd.xlane.f32.xlu0 %v189
  %v191 = vpop.xlane.xlu0 %190
  %v192 = vmax.f32 %v188, 1e-20
  %v193 = vmax.f32 %v191, 1e-20
  %v194 = vrcp.pop %v192
  %v195 = vrcp.pop %v193
  %v196 = vmul.f32 %v183, %v194
  %v197 = vmul.f32 %v185, %v195
  %v198 = vpack.c.bf16 %v197, %v196
  %v199 = vpack.c.bf16 %v108, %v102
  %v201 = vsel %vm173, %v198, 0
  %203 = vmatprep.subr.bf16.mxu0 0
  %204 = vmatpush1.bf16.msra.mxu0 0
  %205 = vmatprep.subr.bf16.mxu0 0
  %206 = vmatpush1.bf16.msra.mxu0 0
  %207 = vmatprep.subr.bf16.mxu0 0
  %208 = vmatpush1.bf16.msra.mxu0 0
  %209 = vmatprep.subr.bf16.mxu0 0
  %210 = vmatpush1.bf16.msra.mxu0 0
  %211 = vmatprep.subr.bf16.mxu0 0
  %212 = vmatpush1.bf16.msra.mxu0 0
  %213 = vmatprep.subr.bf16.mxu0 0
  %214 = vmatpush1.bf16.msra.mxu0 0
  %215 = vmatprep.subr.bf16.mxu0 0
  %216 = vmatpush1.bf16.msra.mxu0 0
  %217 = vmatprep.subr.bf16.mxu0 0
  %218 = vmatpush1.bf16.msra.mxu0 %v199
  %219 = vmatprep.subr.bf16.mxu0 0
  %220 = vmatpush2.bf16.msra.mxu0 0
  %221 = vmatprep.subr.bf16.mxu0 0
  %222 = vmatpush2.bf16.msra.mxu0 0
  %223 = vmatprep.subr.bf16.mxu0 0
  %224 = vmatpush2.bf16.msra.mxu0 0
  %225 = vmatprep.subr.bf16.mxu0 0
  %226 = vmatpush2.bf16.msra.mxu0 0
  %227 = vmatprep.subr.bf16.mxu0 0
  %228 = vmatpush2.bf16.msra.mxu0 0
  %229 = vmatprep.subr.bf16.mxu0 0
  %230 = vmatpush2.bf16.msra.mxu0 0
  %231 = vmatprep.subr.bf16.mxu0 0
  %232 = vmatpush2.bf16.msra.mxu0 0
  %233 = vmatprep.subr.bf16.mxu0 0
  %234 = vmatpush2.bf16.msra.mxu0 0
  %235 = vmatprep.mubr.bf16.mxu0 0
  %236 = vmatmul.mubr.bf16.gmra.mxu0 %v201
  %v237 = vpop.f32.mrf.mxu0
  %v238 = vadd.f32 0.0, %v237
  %v239 = vpop.f32.mrf.mxu0
  %v240 = vpop.f32.mrf.mxu0
  %v241 = vadd.f32 0.0, %v240
  %v242 = vpop.f32.mrf.mxu0
  %243 = vdwg.mxu0
  %244 = vset.pattern.permute.xlu0 3
  %245 = vperm.xlu0 %244, %v104
  %v246 = vpop.permute.xlu0 %245
  %248 = vset.pattern.permute.xlu0 3
  %249 = vperm.xlu0 %248, %v110
  %v250 = vpop.permute.xlu0 %249
  %v252 = vlaneseq
  %v253 = vshrl.u32 %v252, 7
  %v254 = vsub.s32 1, %v253
  %v255 = vrot.slane %v131, %v254
  %v256 = vadd.f32 %v246, %v255
  %v257 = vadd.f32 %v250, %v255
  %vm258 = vcmp.gt.f32.partialorder %v256, 0.0
  %vm259 = vcmp.gt.f32.partialorder %v257, 0.0
  %v260 = vmul.f32 %v256, 0.2
  %v261 = vmul.f32 %v257, 0.2
  %v262 = vsel %vm258, %v256, %v260
  %v263 = vsel %vm259, %v257, %v261
  %v264 = vsel %vm169, %v262, -1e+30
  %v265 = vsel %vm170, %v263, -1e+30
  %v266 = vsel %vm173, %v264, -inf
  %267 = vmax.xlane.f32.xlu0 %v266
  %v268 = vpop.xlane.xlu0 %267
  %v269 = vsel %vm173, %v265, -inf
  %270 = vmax.xlane.f32.xlu0 %v269
  %v271 = vpop.xlane.xlu0 %270
  %v272 = vsub.f32 %v264, %v268
  %v273 = vsub.f32 %v265, %v271
  %v274 = vmul.f32 %v272, 1.442695
  %v275 = vpow.pop %v274
  %v276 = vmul.f32 %v273, 1.442695
  %v277 = vpow.pop %v276
  %v278 = vsel %vm173, %v275, 0.0
  %279 = vadd.xlane.f32.xlu0 %v278
  %v280 = vpop.xlane.xlu0 %279
  %v281 = vsel %vm173, %v277, 0.0
  %282 = vadd.xlane.f32.xlu0 %v281
  %v283 = vpop.xlane.xlu0 %282
  %v284 = vmax.f32 %v280, 1e-20
  %v285 = vmax.f32 %v283, 1e-20
  %v286 = vrcp.pop %v284
  %v287 = vrcp.pop %v285
  %v288 = vmul.f32 %v275, %v286
  %v289 = vmul.f32 %v277, %v287
  %v290 = vpack.c.bf16 %v289, %v288
  %292 = vrot.lane.b32.xlu0 %v199, 64
  %v293 = vpop.permute.xlu0 %292
  %v296 = vsel %vm173, %v290, 0
  %298 = vmatprep.subr.bf16.mxu0 0
  %299 = vmatpush1.bf16.msra.mxu0 0
  %300 = vmatprep.subr.bf16.mxu0 0
  %301 = vmatpush1.bf16.msra.mxu0 0
  %302 = vmatprep.subr.bf16.mxu0 0
  %303 = vmatpush1.bf16.msra.mxu0 0
  %304 = vmatprep.subr.bf16.mxu0 0
  %305 = vmatpush1.bf16.msra.mxu0 0
  %306 = vmatprep.subr.bf16.mxu0 0
  %307 = vmatpush1.bf16.msra.mxu0 0
  %308 = vmatprep.subr.bf16.mxu0 0
  %309 = vmatpush1.bf16.msra.mxu0 0
  %310 = vmatprep.subr.bf16.mxu0 0
  %311 = vmatpush1.bf16.msra.mxu0 0
  %312 = vmatprep.subr.bf16.mxu0 0
  %313 = vmatpush1.bf16.msra.mxu0 %v293
  %314 = vmatprep.subr.bf16.mxu0 0
  %315 = vmatpush2.bf16.msra.mxu0 0
  %316 = vmatprep.subr.bf16.mxu0 0
  %317 = vmatpush2.bf16.msra.mxu0 0
  %318 = vmatprep.subr.bf16.mxu0 0
  %319 = vmatpush2.bf16.msra.mxu0 0
  %320 = vmatprep.subr.bf16.mxu0 0
  %321 = vmatpush2.bf16.msra.mxu0 0
  %322 = vmatprep.subr.bf16.mxu0 0
  %323 = vmatpush2.bf16.msra.mxu0 0
  %324 = vmatprep.subr.bf16.mxu0 0
  %325 = vmatpush2.bf16.msra.mxu0 0
  %326 = vmatprep.subr.bf16.mxu0 0
  %327 = vmatpush2.bf16.msra.mxu0 0
  %328 = vmatprep.subr.bf16.mxu0 0
  %329 = vmatpush2.bf16.msra.mxu0 0
  %330 = vmatprep.mubr.bf16.mxu0 0
  %331 = vmatmul.mubr.bf16.gmra.mxu0 %v296
  %v332 = vpop.f32.mrf.mxu0
  %v333 = vadd.f32 0.0, %v332
  %v334 = vpop.f32.mrf.mxu0
  %v335 = vpop.f32.mrf.mxu0
  %v336 = vadd.f32 0.0, %v335
  %v337 = vpop.f32.mrf.mxu0
  %338 = vdwg.mxu0
  %341 = vrot.lane.b32.xlu0 %v333, 64
  %v342 = vpop.permute.xlu0 %341
  %343 = vrot.lane.b32.xlu0 %v336, 64
  %v344 = vpop.permute.xlu0 %343
  %vm347 = vcmask 523264
  %v348 = vsel %vm347, %v238, %v342
  %v349 = vsel %vm347, %v241, %v344
  %v351 = vlaneseq
  %v352 = vshrl.u32 %v351, 7
  %v353 = vsub.s32 0, %v352
  %v354 = vrot.slane %v114, %v353
  %v356 = vadd.f32 %v348, %v354
  %v357 = vadd.f32 %v349, %v354
  %v358 = vmax.f32 %v356, 0.0
  %v359 = vmax.f32 %v357, 0.0
  %362 = vrot.lane.b32.xlu0 %v358, 4
  %v363 = vpop.permute.xlu0 %362
  %364 = vrot.lane.b32.xlu0 %v359, 4
  %v365 = vpop.permute.xlu0 %364
  %v368 = vsel %vm23, %v18, %v363
  %v369 = vsel %vm23, %v19, %v365
  %370 = vst [vmem:[%s4] sm:$0xff] %v368
  %371 = vst.msk [vmem:[%s4 + $0x8] sm:$0xff] %vm23, %v363
  %372 = vst [vmem:[%s4 + $0x10] sm:$0xff] %v369
  %373 = vst.msk [vmem:[%s4 + $0x18] sm:$0xff] %vm23, %v365
  // Predicated region
  $region18: #{forward.6} parent=0 // pred_check
    _
  $region19: #{forward.6} parent=0 // pred_check_branch
    %375 = sbr.rel (0) target = $region21
  $region20: #{forward.6} parent=0 // pred_region
    _
  $region21: #{forward.6} parent=0 // pred_fallthru
    _
  // Predicated region
  $region22: #{forward.6} parent=0 // pred_check
    _
  $region23: #{forward.6} parent=0 // pred_check_branch
    %377 = sbr.rel (0) target = $region25
  $region24: #{forward.6} parent=0 // pred_region
    _
  $region25: #{forward.6} parent=0 // pred_fallthru
    _

// kernel: forward.11
$region0: #{forward.11}
  #allocation0 [shape = 'u32[]', space=smem, size = 0x4, offset = 0x4, fixed_abs, tag = 'smem constant byte address 0x4 - core index']
  #allocation1 [shape = 'u32[144,128]{1,0:T(1,128)}', space=vmem, size = 0x12000, scoped, tag = 'internal scratch']
  #allocation2 [shape = 'f32[1,1]{1,0:T(1,128)S(1)}', space=vmem, size = 0x200, scoped, tag = 'scoped memory for forward.11']
  %s0 = inlined_call_operand.vmem [shape: f32[16,4], index: 0, kind: input, shape index: {}]
  %s1 = inlined_call_operand.vmem [shape: f32[16,128], index: 1, kind: input, shape index: {}]
  %s2 = inlined_call_operand.vmem [shape: f32[4,64], index: 2, kind: input, shape index: {}]
  %s3 = inlined_call_operand.vmem [shape: f32[128,64], index: 3, kind: input, shape index: {}]
  %s4 = inlined_call_operand.vmem [shape: f32[1,64], index: 4, kind: input, shape index: {}]
  %s5 = inlined_call_operand.vmem [shape: f32[4,1], index: 5, kind: input, shape index: {}]
  %s6 = inlined_call_operand.vmem [shape: f32[64,1], index: 6, kind: input, shape index: {}]
  %s7 = inlined_call_operand.<no memory space> [shape: f32[1,1], index: 7, kind: input, shape index: {}]
  %s8 = inlined_call_operand.vmem [shape: f32[16,1], index: 8, kind: output, shape index: {}]
  %s9 = sld [smem:[#allocation0]]
  $region42: #{forward.11} parent=0
    _
  %s11 = ssub.s32 1, %s9
  %s12 = scalar_select 0, %s11, %s9
  %v13 = vstv %s7
  %14 = vst [vmem:[#allocation2] sm:$0x1] %v13
  // Predicated region
  $region2: #{forward.11} parent=0 // pred_check
    _
  $region3: #{forward.11} parent=0 // pred_check_branch
    %16 = sbr.rel (0) target = $region5
  $region4: #{forward.11} parent=0 // pred_region
    _
  $region5: #{forward.11} parent=0 // pred_fallthru
    _
  // Predicated region
  $region6: #{forward.11} parent=0 // pred_check
    _
  $region7: #{forward.11} parent=0 // pred_check_branch
    %18 = sbr.rel (0) target = $region9
  $region8: #{forward.11} parent=0 // pred_region
    _
  $region9: #{forward.11} parent=0 // pred_fallthru
    _
  // Predicated region
  $region10: #{forward.11} parent=0 // pred_check
    _
  $region11: #{forward.11} parent=0 // pred_check_branch
    %20 = sbr.rel (0) target = $region13
  $region12: #{forward.11} parent=0 // pred_region
    _
  $region13: #{forward.11} parent=0 // pred_fallthru
    _
  // Predicated region
  $region14: #{forward.11} parent=0 // pred_check
    _
  $region15: #{forward.11} parent=0 // pred_check_branch
    %22 = sbr.rel (0) target = $region17
  $region16: #{forward.11} parent=0 // pred_region
    _
  $region17: #{forward.11} parent=0 // pred_fallthru
    _
  // Predicated region
  $region18: #{forward.11} parent=0 // pred_check
    _
  $region19: #{forward.11} parent=0 // pred_check_branch
    %24 = sbr.rel (0) target = $region21
  $region20: #{forward.11} parent=0 // pred_region
    _
  $region21: #{forward.11} parent=0 // pred_fallthru
    _
  // Predicated region
  $region22: #{forward.11} parent=0 // pred_check
    _
  $region23: #{forward.11} parent=0 // pred_check_branch
    %26 = sbr.rel (0) target = $region25
  $region24: #{forward.11} parent=0 // pred_region
    _
  $region25: #{forward.11} parent=0 // pred_fallthru
    _
  // Predicated region
  $region26: #{forward.11} parent=0 // pred_check
    _
  $region27: #{forward.11} parent=0 // pred_check_branch
    %28 = sbr.rel (0) target = $region29
  $region28: #{forward.11} parent=0 // pred_region
    _
  $region29: #{forward.11} parent=0 // pred_fallthru
    _
  // Predicated region
  $region30: #{forward.11} parent=0 // pred_check
    _
  $region31: #{forward.11} parent=0 // pred_check_branch
    %30 = sbr.rel (0) target = $region33
  $region32: #{forward.11} parent=0 // pred_region
    _
  $region33: #{forward.11} parent=0 // pred_fallthru
    _
  %v31 = vld [vmem:[%s0] sm:$0xff]
  %v32 = vld [vmem:[%s0 + $0x8] sm:$0xff]
  %v33 = vld [vmem:[%s1] sm:$0xff]
  %v34 = vld [vmem:[%s1 + $0x8] sm:$0xff]
  %v35 = vld [vmem:[%s2] sm:$0xf]
  %v36 = vld [vmem:[%s3] sm:$0xff]
  %v37 = vld [vmem:[%s3 + $0x8] sm:$0xff]
  %v38 = vld [vmem:[%s3 + $0x10] sm:$0xff]
  %v39 = vld [vmem:[%s3 + $0x18] sm:$0xff]
  %v40 = vld [vmem:[%s3 + $0x20] sm:$0xff]
  %v41 = vld [vmem:[%s3 + $0x28] sm:$0xff]
  %v42 = vld [vmem:[%s3 + $0x30] sm:$0xff]
  %v43 = vld [vmem:[%s3 + $0x38] sm:$0xff]
  %v44 = vld [vmem:[%s3 + $0x40] sm:$0xff]
  %v45 = vld [vmem:[%s3 + $0x48] sm:$0xff]
  %v46 = vld [vmem:[%s3 + $0x50] sm:$0xff]
  %v47 = vld [vmem:[%s3 + $0x58] sm:$0xff]
  %v48 = vld [vmem:[%s3 + $0x60] sm:$0xff]
  %v49 = vld [vmem:[%s3 + $0x68] sm:$0xff]
  %v50 = vld [vmem:[%s3 + $0x70] sm:$0xff]
  %v51 = vld [vmem:[%s3 + $0x78] sm:$0xff]
  %52 = vmatprep.subr.mxu0 0.0
  %53 = vmatpush1.msra.mxu0 %v51
  %54 = vmatprep.subr.mxu0 0.0
  %55 = vmatpush1.msra.mxu0 %v50
  %56 = vmatprep.subr.mxu0 0.0
  %57 = vmatpush1.msra.mxu0 %v49
  %58 = vmatprep.subr.mxu0 0.0
  %59 = vmatpush1.msra.mxu0 %v48
  %60 = vmatprep.subr.mxu0 0.0
  %61 = vmatpush1.msra.mxu0 %v47
  %62 = vmatprep.subr.mxu0 0.0
  %63 = vmatpush1.msra.mxu0 %v46
  %64 = vmatprep.subr.mxu0 0.0
  %65 = vmatpush1.msra.mxu0 %v45
  %66 = vmatprep.subr.mxu0 0.0
  %67 = vmatpush1.msra.mxu0 %v44
  %68 = vmatprep.subr.mxu0 0.0
  %69 = vmatpush1.msra.mxu0 %v43
  %70 = vmatprep.subr.mxu0 0.0
  %71 = vmatpush1.msra.mxu0 %v42
  %72 = vmatprep.subr.mxu0 0.0
  %73 = vmatpush1.msra.mxu0 %v41
  %74 = vmatprep.subr.mxu0 0.0
  %75 = vmatpush1.msra.mxu0 %v40
  %76 = vmatprep.subr.mxu0 0.0
  %77 = vmatpush1.msra.mxu0 %v39
  %78 = vmatprep.subr.mxu0 0.0
  %79 = vmatpush1.msra.mxu0 %v38
  %80 = vmatprep.subr.mxu0 0.0
  %81 = vmatpush1.msra.mxu0 %v37
  %82 = vmatprep.subr.mxu0 0.0
  %83 = vmatpush1.msra.mxu0 %v36
  %84 = vmatprep.subr.mxu0 0.0
  %85 = vmatpush2.msra.mxu0 0.0
  %86 = vmatprep.subr.mxu0 0.0
  %87 = vmatpush2.msra.mxu0 0.0
  %88 = vmatprep.subr.mxu0 0.0
  %89 = vmatpush2.msra.mxu0 0.0
  %90 = vmatprep.subr.mxu0 0.0
  %91 = vmatpush2.msra.mxu0 0.0
  %92 = vmatprep.subr.mxu0 0.0
  %93 = vmatpush2.msra.mxu0 0.0
  %94 = vmatprep.subr.mxu0 0.0
  %95 = vmatpush2.msra.mxu0 0.0
  %96 = vmatprep.subr.mxu0 0.0
  %97 = vmatpush2.msra.mxu0 0.0
  %98 = vmatprep.subr.mxu0 0.0
  %99 = vmatpush2.msra.mxu0 0.0
  %100 = vmatprep.subr.mxu0 0.0
  %101 = vmatpush2.msra.mxu0 0.0
  %102 = vmatprep.subr.mxu0 0.0
  %103 = vmatpush2.msra.mxu0 0.0
  %104 = vmatprep.subr.mxu0 0.0
  %105 = vmatpush2.msra.mxu0 0.0
  %106 = vmatprep.subr.mxu0 0.0
  %107 = vmatpush2.msra.mxu0 0.0
  %108 = vmatprep.subr.mxu0 0.0
  %109 = vmatpush2.msra.mxu0 0.0
  %110 = vmatprep.subr.mxu0 0.0
  %111 = vmatpush2.msra.mxu0 0.0
  %112 = vmatprep.subr.mxu0 0.0
  %113 = vmatpush2.msra.mxu0 0.0
  %114 = vmatprep.subr.mxu0 0.0
  %115 = vmatpush2.msra.mxu0 0.0
  %116 = vmatprep.mubr.f32.mxu0 0.0
  %117 = vmatmul.mubr.f32.gmra.mxu0 %v33
  %v118 = vpop.f32.mrf.mxu0
  %v119 = vadd.f32 0.0, %v118
  %v120 = vpop.f32.mrf.mxu0
  %121 = vmatprep.mubr.f32.mxu0 0.0
  %122 = vmatmul.mubr.f32.gmra.mxu0 %v34
  %v123 = vpop.f32.mrf.mxu0
  %v124 = vadd.f32 0.0, %v123
  %v125 = vpop.f32.mrf.mxu0
  %126 = vdwg.mxu0
  %vm127 = vcmask 31744
  %v129 = vsel %vm127, %v31, 0
  %v132 = vsel %vm127, %v32, 0
  %vm134 = vcmask 1043456
  %v136 = vsel %vm134, %v35, 0
  %138 = vmatprep.subr.mxu0 0.0
  %139 = vmatpush1.msra.mxu0 0.0
  %140 = vmatprep.subr.mxu0 0.0
  %141 = vmatpush1.msra.mxu0 0.0
  %142 = vmatprep.subr.mxu0 0.0
  %143 = vmatpush1.msra.mxu0 0.0
  %144 = vmatprep.subr.mxu0 0.0
  %145 = vmatpush1.msra.mxu0 0.0
  %146 = vmatprep.subr.mxu0 0.0
  %147 = vmatpush1.msra.mxu0 0.0
  %148 = vmatprep.subr.mxu0 0.0
  %149 = vmatpush1.msra.mxu0 0.0
  %150 = vmatprep.subr.mxu0 0.0
  %151 = vmatpush1.msra.mxu0 0.0
  %152 = vmatprep.subr.mxu0 0.0
  %153 = vmatpush1.msra.mxu0 0.0
  %154 = vmatprep.subr.mxu0 0.0
  %155 = vmatpush1.msra.mxu0 0.0
  %156 = vmatprep.subr.mxu0 0.0
  %157 = vmatpush1.msra.mxu0 0.0
  %158 = vmatprep.subr.mxu0 0.0
  %159 = vmatpush1.msra.mxu0 0.0
  %160 = vmatprep.subr.mxu0 0.0
  %161 = vmatpush1.msra.mxu0 0.0
  %162 = vmatprep.subr.mxu0 0.0
  %163 = vmatpush1.msra.mxu0 0.0
  %164 = vmatprep.subr.mxu0 0.0
  %165 = vmatpush1.msra.mxu0 0.0
  %166 = vmatprep.subr.mxu0 0.0
  %167 = vmatpush1.msra.mxu0 0.0
  %168 = vmatprep.subr.mxu0 0.0
  %169 = vmatpush1.msra.mxu0 %v136
  %170 = vmatprep.subr.mxu0 0.0
  %171 = vmatpush2.msra.mxu0 0.0
  %172 = vmatprep.subr.mxu0 0.0
  %173 = vmatpush2.msra.mxu0 0.0
  %174 = vmatprep.subr.mxu0 0.0
  %175 = vmatpush2.msra.mxu0 0.0
  %176 = vmatprep.subr.mxu0 0.0
  %177 = vmatpush2.msra.mxu0 0.0
  %178 = vmatprep.subr.mxu0 0.0
  %179 = vmatpush2.msra.mxu0 0.0
  %180 = vmatprep.subr.mxu0 0.0
  %181 = vmatpush2.msra.mxu0 0.0
  %182 = vmatprep.subr.mxu0 0.0
  %183 = vmatpush2.msra.mxu0 0.0
  %184 = vmatprep.subr.mxu0 0.0
  %185 = vmatpush2.msra.mxu0 0.0
  %186 = vmatprep.subr.mxu0 0.0
  %187 = vmatpush2.msra.mxu0 0.0
  %188 = vmatprep.subr.mxu0 0.0
  %189 = vmatpush2.msra.mxu0 0.0
  %190 = vmatprep.subr.mxu0 0.0
  %191 = vmatpush2.msra.mxu0 0.0
  %192 = vmatprep.subr.mxu0 0.0
  %193 = vmatpush2.msra.mxu0 0.0
  %194 = vmatprep.subr.mxu0 0.0
  %195 = vmatpush2.msra.mxu0 0.0
  %196 = vmatprep.subr.mxu0 0.0
  %197 = vmatpush2.msra.mxu0 0.0
  %198 = vmatprep.subr.mxu0 0.0
  %199 = vmatpush2.msra.mxu0 0.0
  %200 = vmatprep.subr.mxu0 0.0
  %201 = vmatpush2.msra.mxu0 0.0
  %202 = vmatprep.mubr.f32.mxu0 0.0
  %203 = vmatmul.mubr.f32.gmra.mxu0 %v129
  %v204 = vpop.f32.mrf.mxu0
  %v205 = vadd.f32 %v119, %v204
  %v206 = vpop.f32.mrf.mxu0
  %207 = vmatprep.mubr.f32.mxu0 0.0
  %208 = vmatmul.mubr.f32.gmra.mxu0 %v132
  %v209 = vpop.f32.mrf.mxu0
  %v210 = vadd.f32 %v124, %v209
  %v211 = vpop.f32.mrf.mxu0
  %212 = vdwg.mxu0
  %v213 = vld [vmem:[%s4] sm:$0x1]
  %v215 = vlaneseq
  %v216 = vshrl.u32 %v215, 7
  %v217 = vsub.s32 0, %v216
  %v218 = vrot.slane %v213, %v217
  %v220 = vadd.f32 %v205, %v218
  %v221 = vadd.f32 %v210, %v218
  %v222 = vmax.f32 %v220, 0.0
  %v223 = vmax.f32 %v221, 0.0
  %v224 = vld [vmem:[%s5] sm:$0xf]
  %v225 = vld [vmem:[%s6] sm:$0xff]
  %v226 = vld [vmem:[%s6 + $0x8] sm:$0xff]
  %v227 = vld [vmem:[%s6 + $0x10] sm:$0xff]
  %v228 = vld [vmem:[%s6 + $0x18] sm:$0xff]
  %v229 = vld [vmem:[%s6 + $0x20] sm:$0xff]
  %v230 = vld [vmem:[%s6 + $0x28] sm:$0xff]
  %v231 = vld [vmem:[%s6 + $0x30] sm:$0xff]
  %v232 = vld [vmem:[%s6 + $0x38] sm:$0xff]
  %vm233 = vcmask 523264
  %v235 = vsel %vm233, %v222, 0
  %v238 = vsel %vm233, %v223, 0
  %240 = vmatprep.subr.mxu0 0.0
  %241 = vmatpush1.msra.mxu0 0.0
  %242 = vmatprep.subr.mxu0 0.0
  %243 = vmatpush1.msra.mxu0 0.0
  %244 = vmatprep.subr.mxu0 0.0
  %245 = vmatpush1.msra.mxu0 0.0
  %246 = vmatprep.subr.mxu0 0.0
  %247 = vmatpush1.msra.mxu0 0.0
  %248 = vmatprep.subr.mxu0 0.0
  %249 = vmatpush1.msra.mxu0 0.0
  %250 = vmatprep.subr.mxu0 0.0
  %251 = vmatpush1.msra.mxu0 0.0
  %252 = vmatprep.subr.mxu0 0.0
  %253 = vmatpush1.msra.mxu0 0.0
  %254 = vmatprep.subr.mxu0 0.0
  %255 = vmatpush1.msra.mxu0 0.0
  %256 = vmatprep.subr.mxu0 0.0
  %257 = vmatpush1.msra.mxu0 %v232
  %258 = vmatprep.subr.mxu0 0.0
  %259 = vmatpush1.msra.mxu0 %v231
  %260 = vmatprep.subr.mxu0 0.0
  %261 = vmatpush1.msra.mxu0 %v230
  %262 = vmatprep.subr.mxu0 0.0
  %263 = vmatpush1.msra.mxu0 %v229
  %264 = vmatprep.subr.mxu0 0.0
  %265 = vmatpush1.msra.mxu0 %v228
  %266 = vmatprep.subr.mxu0 0.0
  %267 = vmatpush1.msra.mxu0 %v227
  %268 = vmatprep.subr.mxu0 0.0
  %269 = vmatpush1.msra.mxu0 %v226
  %270 = vmatprep.subr.mxu0 0.0
  %271 = vmatpush1.msra.mxu0 %v225
  %272 = vmatprep.subr.mxu0 0.0
  %273 = vmatpush2.msra.mxu0 0.0
  %274 = vmatprep.subr.mxu0 0.0
  %275 = vmatpush2.msra.mxu0 0.0
  %276 = vmatprep.subr.mxu0 0.0
  %277 = vmatpush2.msra.mxu0 0.0
  %278 = vmatprep.subr.mxu0 0.0
  %279 = vmatpush2.msra.mxu0 0.0
  %280 = vmatprep.subr.mxu0 0.0
  %281 = vmatpush2.msra.mxu0 0.0
  %282 = vmatprep.subr.mxu0 0.0
  %283 = vmatpush2.msra.mxu0 0.0
  %284 = vmatprep.subr.mxu0 0.0
  %285 = vmatpush2.msra.mxu0 0.0
  %286 = vmatprep.subr.mxu0 0.0
  %287 = vmatpush2.msra.mxu0 0.0
  %288 = vmatprep.subr.mxu0 0.0
  %289 = vmatpush2.msra.mxu0 0.0
  %290 = vmatprep.subr.mxu0 0.0
  %291 = vmatpush2.msra.mxu0 0.0
  %292 = vmatprep.subr.mxu0 0.0
  %293 = vmatpush2.msra.mxu0 0.0
  %294 = vmatprep.subr.mxu0 0.0
  %295 = vmatpush2.msra.mxu0 0.0
  %296 = vmatprep.subr.mxu0 0.0
  %297 = vmatpush2.msra.mxu0 0.0
  %298 = vmatprep.subr.mxu0 0.0
  %299 = vmatpush2.msra.mxu0 0.0
  %300 = vmatprep.subr.mxu0 0.0
  %301 = vmatpush2.msra.mxu0 0.0
  %302 = vmatprep.subr.mxu0 0.0
  %303 = vmatpush2.msra.mxu0 0.0
  %304 = vmatprep.mubr.f32.mxu0 0.0
  %305 = vmatmul.mubr.f32.gmra.mxu0 %v235
  %v306 = vpop.f32.mrf.mxu0
  %v307 = vadd.f32 0.0, %v306
  %v308 = vpop.f32.mrf.mxu0
  %309 = vmatprep.mubr.f32.mxu0 0.0
  %310 = vmatmul.mubr.f32.gmra.mxu0 %v238
  %v311 = vpop.f32.mrf.mxu0
  %v312 = vadd.f32 0.0, %v311
  %v313 = vpop.f32.mrf.mxu0
  %314 = vdwg.mxu0
  %v316 = vsel %vm134, %v224, 0
  %318 = vmatprep.subr.mxu0 0.0
  %319 = vmatpush1.msra.mxu0 0.0
  %320 = vmatprep.subr.mxu0 0.0
  %321 = vmatpush1.msra.mxu0 0.0
  %322 = vmatprep.subr.mxu0 0.0
  %323 = vmatpush1.msra.mxu0 0.0
  %324 = vmatprep.subr.mxu0 0.0
  %325 = vmatpush1.msra.mxu0 0.0
  %326 = vmatprep.subr.mxu0 0.0
  %327 = vmatpush1.msra.mxu0 0.0
  %328 = vmatprep.subr.mxu0 0.0
  %329 = vmatpush1.msra.mxu0 0.0
  %330 = vmatprep.subr.mxu0 0.0
  %331 = vmatpush1.msra.mxu0 0.0
  %332 = vmatprep.subr.mxu0 0.0
  %333 = vmatpush1.msra.mxu0 0.0
  %334 = vmatprep.subr.mxu0 0.0
  %335 = vmatpush1.msra.mxu0 0.0
  %336 = vmatprep.subr.mxu0 0.0
  %337 = vmatpush1.msra.mxu0 0.0
  %338 = vmatprep.subr.mxu0 0.0
  %339 = vmatpush1.msra.mxu0 0.0
  %340 = vmatprep.subr.mxu0 0.0
  %341 = vmatpush1.msra.mxu0 0.0
  %342 = vmatprep.subr.mxu0 0.0
  %343 = vmatpush1.msra.mxu0 0.0
  %344 = vmatprep.subr.mxu0 0.0
  %345 = vmatpush1.msra.mxu0 0.0
  %346 = vmatprep.subr.mxu0 0.0
  %347 = vmatpush1.msra.mxu0 0.0
  %348 = vmatprep.subr.mxu0 0.0
  %349 = vmatpush1.msra.mxu0 %v316
  %350 = vmatprep.subr.mxu0 0.0
  %351 = vmatpush2.msra.mxu0 0.0
  %352 = vmatprep.subr.mxu0 0.0
  %353 = vmatpush2.msra.mxu0 0.0
  %354 = vmatprep.subr.mxu0 0.0
  %355 = vmatpush2.msra.mxu0 0.0
  %356 = vmatprep.subr.mxu0 0.0
  %357 = vmatpush2.msra.mxu0 0.0
  %358 = vmatprep.subr.mxu0 0.0
  %359 = vmatpush2.msra.mxu0 0.0
  %360 = vmatprep.subr.mxu0 0.0
  %361 = vmatpush2.msra.mxu0 0.0
  %362 = vmatprep.subr.mxu0 0.0
  %363 = vmatpush2.msra.mxu0 0.0
  %364 = vmatprep.subr.mxu0 0.0
  %365 = vmatpush2.msra.mxu0 0.0
  %366 = vmatprep.subr.mxu0 0.0
  %367 = vmatpush2.msra.mxu0 0.0
  %368 = vmatprep.subr.mxu0 0.0
  %369 = vmatpush2.msra.mxu0 0.0
  %370 = vmatprep.subr.mxu0 0.0
  %371 = vmatpush2.msra.mxu0 0.0
  %372 = vmatprep.subr.mxu0 0.0
  %373 = vmatpush2.msra.mxu0 0.0
  %374 = vmatprep.subr.mxu0 0.0
  %375 = vmatpush2.msra.mxu0 0.0
  %376 = vmatprep.subr.mxu0 0.0
  %377 = vmatpush2.msra.mxu0 0.0
  %378 = vmatprep.subr.mxu0 0.0
  %379 = vmatpush2.msra.mxu0 0.0
  %380 = vmatprep.subr.mxu0 0.0
  %381 = vmatpush2.msra.mxu0 0.0
  %382 = vmatprep.mubr.f32.mxu0 0.0
  %383 = vmatmul.mubr.f32.gmra.mxu0 %v129
  %v384 = vpop.f32.mrf.mxu0
  %v385 = vadd.f32 %v307, %v384
  %v386 = vpop.f32.mrf.mxu0
  %387 = vmatprep.mubr.f32.mxu0 0.0
  %388 = vmatmul.mubr.f32.gmra.mxu0 %v132
  %v389 = vpop.f32.mrf.mxu0
  %v390 = vadd.f32 %v312, %v389
  %v391 = vpop.f32.mrf.mxu0
  %392 = vdwg.mxu0
  %v393 = vld [vmem:[#allocation2] sm:$0x1]
  %v395 = vlaneseq
  %v396 = vshrl.u32 %v395, 7
  %v397 = vsub.s32 0, %v396
  %v398 = vrot.slane %v393, %v397
  %v400 = vadd.f32 %v385, %v398
  %v401 = vadd.f32 %v390, %v398
  %v402 = vsub.f32 0.0, %v400
  %v403 = vsub.f32 0.0, %v401
  %v404 = vmul.f32 %v402, 1.442695
  %v405 = vpow.pop %v404
  %v406 = vmul.f32 %v403, 1.442695
  %v407 = vpow.pop %v406
  %v408 = vadd.f32 %v405, 1.0
  %v409 = vadd.f32 %v407, 1.0
  %v410 = vrcp.pop %v408
  %v411 = vrcp.pop %v409
  %vm412 = vcmask 7168
  %413 = vst.msk [vmem:[%s8] sm:$0xff] %vm412, %v410
  %414 = vst.msk [vmem:[%s8 + $0x8] sm:$0xff] %vm412, %v411
  // Predicated region
  $region34: #{forward.11} parent=0 // pred_check
    _
  $region35: #{forward.11} parent=0 // pred_check_branch
    %416 = sbr.rel (0) target = $region37
  $region36: #{forward.11} parent=0 // pred_region
    _
  $region37: #{forward.11} parent=0 // pred_fallthru
    _
  // Predicated region
  $region38: #{forward.11} parent=0 // pred_check
    _
  $region39: #{forward.11} parent=0 // pred_check_branch
    %418 = sbr.rel (0) target = $region41
  $region40: #{forward.11} parent=0 // pred_region
    _
  $region41: #{forward.11} parent=0 // pred_fallthru
    _

// kernel: forward.10
$region0: #{forward.10}
  #allocation0 [shape = 'u32[]', space=smem, size = 0x4, offset = 0x4, fixed_abs, tag = 'smem constant byte address 0x4 - core index']
  #allocation1 [shape = 'u32[144,128]{1,0:T(1,128)}', space=vmem, size = 0x12000, scoped, tag = 'internal scratch']
  %s0 = inlined_call_operand.vmem [shape: f32[16,132], index: 0, kind: input, shape index: {}]
  %s1 = inlined_call_operand.vmem [shape: f32[16,16], index: 1, kind: input, shape index: {}]
  %s2 = inlined_call_operand.vmem [shape: f32[132,132], index: 2, kind: input, shape index: {}]
  %s3 = inlined_call_operand.vmem [shape: f32[1,128], index: 3, kind: input, shape index: {}]
  %s4 = inlined_call_operand.vmem [shape: f32[132,132], index: 4, kind: input, shape index: {}]
  %s5 = inlined_call_operand.vmem [shape: f32[128,132], index: 5, kind: input, shape index: {}]
  %s6 = inlined_call_operand.vmem [shape: f32[1,128], index: 6, kind: input, shape index: {}]
  %s7 = inlined_call_operand.vmem [shape: f32[132,132], index: 7, kind: input, shape index: {}]
  %s8 = inlined_call_operand.vmem [shape: f32[128,132], index: 8, kind: input, shape index: {}]
  %s9 = inlined_call_operand.vmem [shape: f32[1,128], index: 9, kind: input, shape index: {}]
  %s10 = inlined_call_operand.vmem [shape: f32[16,128], index: 10, kind: output, shape index: {}]
  %s11 = sld [smem:[#allocation0]]
  $region50: #{forward.10} parent=0
    _
  %s13 = ssub.s32 1, %s11
  %s14 = scalar_select 0, %s13, %s11
  // Predicated region
  $region2: #{forward.10} parent=0 // pred_check
    _
  $region3: #{forward.10} parent=0 // pred_check_branch
    %16 = sbr.rel (0) target = $region5
  $region4: #{forward.10} parent=0 // pred_region
    _
  $region5: #{forward.10} parent=0 // pred_fallthru
    _
  // Predicated region
  $region6: #{forward.10} parent=0 // pred_check
    _
  $region7: #{forward.10} parent=0 // pred_check_branch
    %18 = sbr.rel (0) target = $region9
  $region8: #{forward.10} parent=0 // pred_region
    _
  $region9: #{forward.10} parent=0 // pred_fallthru
    _
  // Predicated region
  $region10: #{forward.10} parent=0 // pred_check
    _
  $region11: #{forward.10} parent=0 // pred_check_branch
    %20 = sbr.rel (0) target = $region13
  $region12: #{forward.10} parent=0 // pred_region
    _
  $region13: #{forward.10} parent=0 // pred_fallthru
    _
  // Predicated region
  $region14: #{forward.10} parent=0 // pred_check
    _
  $region15: #{forward.10} parent=0 // pred_check_branch
    %22 = sbr.rel (0) target = $region17
  $region16: #{forward.10} parent=0 // pred_region
    _
  $region17: #{forward.10} parent=0 // pred_fallthru
    _
  // Predicated region
  $region18: #{forward.10} parent=0 // pred_check
    _
  $region19: #{forward.10} parent=0 // pred_check_branch
    %24 = sbr.rel (0) target = $region21
  $region20: #{forward.10} parent=0 // pred_region
    _
  $region21: #{forward.10} parent=0 // pred_fallthru
    _
  // Predicated region
  $region22: #{forward.10} parent=0 // pred_check
    _
  $region23: #{forward.10} parent=0 // pred_check_branch
    %26 = sbr.rel (0) target = $region25
  $region24: #{forward.10} parent=0 // pred_region
    _
  $region25: #{forward.10} parent=0 // pred_fallthru
    _
  // Predicated region
  $region26: #{forward.10} parent=0 // pred_check
    _
  $region27: #{forward.10} parent=0 // pred_check_branch
    %28 = sbr.rel (0) target = $region29
  $region28: #{forward.10} parent=0 // pred_region
    _
  $region29: #{forward.10} parent=0 // pred_fallthru
    _
  // Predicated region
  $region30: #{forward.10} parent=0 // pred_check
    _
  $region31: #{forward.10} parent=0 // pred_check_branch
    %30 = sbr.rel (0) target = $region33
  $region32: #{forward.10} parent=0 // pred_region
    _
  $region33: #{forward.10} parent=0 // pred_fallthru
    _
  // Predicated region
  $region34: #{forward.10} parent=0 // pred_check
    _
  $region35: #{forward.10} parent=0 // pred_check_branch
    %32 = sbr.rel (0) target = $region37
  $region36: #{forward.10} parent=0 // pred_region
    _
  $region37: #{forward.10} parent=0 // pred_fallthru
    _
  // Predicated region
  $region38: #{forward.10} parent=0 // pred_check
    _
  $region39: #{forward.10} parent=0 // pred_check_branch
    %34 = sbr.rel (0) target = $region41
  $region40: #{forward.10} parent=0 // pred_region
    _
  $region41: #{forward.10} parent=0 // pred_fallthru
    _
  %v36 = vld [vmem:[%s0] sm:$0xff]
  %v37 = vld [vmem:[%s0 + $0x8] sm:$0xff]
  %v38 = vld [vmem:[%s0 + $0x10] sm:$0xff]
  %v39 = vld [vmem:[%s0 + $0x18] sm:$0xff]
  %v40 = vld [vmem:[%s1] sm:$0xff]
  %v41 = vld [vmem:[%s1 + $0x8] sm:$0xff]
  %v42 = vld [vmem:[%s2] sm:$0xff]
  %v43 = vld [vmem:[%s2 + $0x8] sm:$0xff]
  %v44 = vld [vmem:[%s2 + $0x10] sm:$0xff]
  %v45 = vld [vmem:[%s2 + $0x18] sm:$0xff]
  %v46 = vld [vmem:[%s2 + $0x20] sm:$0xff]
  %v47 = vld [vmem:[%s2 + $0x28] sm:$0xff]
  %v48 = vld [vmem:[%s2 + $0x30] sm:$0xff]
  %v49 = vld [vmem:[%s2 + $0x38] sm:$0xff]
  %v50 = vld [vmem:[%s2 + $0x40] sm:$0xff]
  %v51 = vld [vmem:[%s2 + $0x48] sm:$0xff]
  %v52 = vld [vmem:[%s2 + $0x50] sm:$0xff]
  %v53 = vld [vmem:[%s2 + $0x58] sm:$0xff]
  %v54 = vld [vmem:[%s2 + $0x60] sm:$0xff]
  %v55 = vld [vmem:[%s2 + $0x68] sm:$0xff]
  %v56 = vld [vmem:[%s2 + $0x70] sm:$0xff]
  %v57 = vld [vmem:[%s2 + $0x78] sm:$0xff]
  %v58 = vld [vmem:[%s2 + $0x80] sm:$0xff]
  %v59 = vld [vmem:[%s2 + $0x88] sm:$0xff]
  %v60 = vld [vmem:[%s2 + $0x90] sm:$0xff]
  %v61 = vld [vmem:[%s2 + $0x98] sm:$0xff]
  %v62 = vld [vmem:[%s2 + $0xa0] sm:$0xff]
  %v63 = vld [vmem:[%s2 + $0xa8] sm:$0xff]
  %v64 = vld [vmem:[%s2 + $0xb0] sm:$0xff]
  %v65 = vld [vmem:[%s2 + $0xb8] sm:$0xff]
  %v66 = vld [vmem:[%s2 + $0xc0] sm:$0xff]
  %v67 = vld [vmem:[%s2 + $0xc8] sm:$0xff]
  %v68 = vld [vmem:[%s2 + $0xd0] sm:$0xff]
  %v69 = vld [vmem:[%s2 + $0xd8] sm:$0xff]
  %v70 = vld [vmem:[%s2 + $0xe0] sm:$0xff]
  %v71 = vld [vmem:[%s2 + $0xe8] sm:$0xff]
  %v72 = vld [vmem:[%s2 + $0xf0] sm:$0xff]
  %v73 = vld [vmem:[%s2 + $0xf8] sm:$0xff]
  %v74 = vld [vmem:[%s2 + $0x100] sm:$0xf]
  %v75 = vld [vmem:[%s2 + $0x108] sm:$0xf]
  %vm76 = vcmask 31744
  %v78 = vsel %vm76, %v37, 0
  %v81 = vsel %vm76, %v39, 0
  %vm83 = vcmask 1043456
  %v85 = vsel %vm83, %v74, 0
  %v88 = vsel %vm83, %v75, 0
  %90 = vmatprep.subr.mxu0 %v73
  %91 = vmatpush1.msra.mxu0 %v72
  %92 = vmatprep.subr.mxu0 %v71
  %93 = vmatpush1.msra.mxu0 %v70
  %94 = vmatprep.subr.mxu0 %v69
  %95 = vmatpush1.msra.mxu0 %v68
  %96 = vmatprep.subr.mxu0 %v67
  %97 = vmatpush1.msra.mxu0 %v66
  %98 = vmatprep.subr.mxu0 %v65
  %99 = vmatpush1.msra.mxu0 %v64
  %100 = vmatprep.subr.mxu0 %v63
  %101 = vmatpush1.msra.mxu0 %v62
  %102 = vmatprep.subr.mxu0 %v61
  %103 = vmatpush1.msra.mxu0 %v60
  %104 = vmatprep.subr.mxu0 %v59
  %105 = vmatpush1.msra.mxu0 %v58
  %106 = vmatprep.subr.mxu0 %v57
  %107 = vmatpush1.msra.mxu0 %v56
  %108 = vmatprep.subr.mxu0 %v55
  %109 = vmatpush1.msra.mxu0 %v54
  %110 = vmatprep.subr.mxu0 %v53
  %111 = vmatpush1.msra.mxu0 %v52
  %112 = vmatprep.subr.mxu0 %v51
  %113 = vmatpush1.msra.mxu0 %v50
  %114 = vmatprep.subr.mxu0 %v49
  %115 = vmatpush1.msra.mxu0 %v48
  %116 = vmatprep.subr.mxu0 %v47
  %117 = vmatpush1.msra.mxu0 %v46
  %118 = vmatprep.subr.mxu0 %v45
  %119 = vmatpush1.msra.mxu0 %v44
  %120 = vmatprep.subr.mxu0 %v43
  %121 = vmatpush1.msra.mxu0 %v42
  %122 = vmatprep.subr.mxu0 0.0
  %123 = vmatpush2.msra.mxu0 0.0
  %124 = vmatprep.subr.mxu0 0.0
  %125 = vmatpush2.msra.mxu0 0.0
  %126 = vmatprep.subr.mxu0 0.0
  %127 = vmatpush2.msra.mxu0 0.0
  %128 = vmatprep.subr.mxu0 0.0
  %129 = vmatpush2.msra.mxu0 0.0
  %130 = vmatprep.subr.mxu0 0.0
  %131 = vmatpush2.msra.mxu0 0.0
  %132 = vmatprep.subr.mxu0 0.0
  %133 = vmatpush2.msra.mxu0 0.0
  %134 = vmatprep.subr.mxu0 0.0
  %135 = vmatpush2.msra.mxu0 0.0
  %136 = vmatprep.subr.mxu0 0.0
  %137 = vmatpush2.msra.mxu0 0.0
  %138 = vmatprep.subr.mxu0 0.0
  %139 = vmatpush2.msra.mxu0 0.0
  %140 = vmatprep.subr.mxu0 0.0
  %141 = vmatpush2.msra.mxu0 0.0
  %142 = vmatprep.subr.mxu0 0.0
  %143 = vmatpush2.msra.mxu0 0.0
  %144 = vmatprep.subr.mxu0 0.0
  %145 = vmatpush2.msra.mxu0 0.0
  %146 = vmatprep.subr.mxu0 0.0
  %147 = vmatpush2.msra.mxu0 0.0
  %148 = vmatprep.subr.mxu0 0.0
  %149 = vmatpush2.msra.mxu0 0.0
  %150 = vmatprep.subr.mxu0 0.0
  %151 = vmatpush2.msra.mxu0 0.0
  %152 = vmatprep.subr.mxu0 %v88
  %153 = vmatpush2.msra.mxu0 %v85
  %154 = vmatprep.mubr.f32.mxu0 %v78
  %155 = vmatmul.mubr.f32.gmra.mxu0 %v36
  %v156 = vpop.f32.mrf.mxu0
  %v157 = vadd.f32 0.0, %v156
  %v158 = vpop.f32.mrf.mxu0
  %v159 = vadd.f32 0.0, %v158
  %160 = vmatprep.mubr.f32.mxu0 %v81
  %161 = vmatmul.mubr.f32.gmra.mxu0 %v38
  %v162 = vpop.f32.mrf.mxu0
  %v163 = vadd.f32 0.0, %v162
  %v164 = vpop.f32.mrf.mxu0
  %v165 = vadd.f32 0.0, %v164
  %166 = vdwg.mxu0
  %v167 = vld [vmem:[%s3] sm:$0x1]
  %168 = vxpose.xlu0.b32.start [1/16] %v159, 128
  %169 = vxpose.xlu0.b32.cont [2/16] %v165, 128
  %170 = vxpose.xlu0.b32.cont [3/16] 0.0, 128
  %171 = vxpose.xlu0.b32.cont [4/16] 0.0, 128
  %172 = vxpose.xlu0.b32.cont [5/16] 0.0, 128
  %173 = vxpose.xlu0.b32.cont [6/16] 0.0, 128
  %174 = vxpose.xlu0.b32.cont [7/16] 0.0, 128
  %175 = vxpose.xlu0.b32.cont [8/16] 0.0, 128
  %176 = vxpose.xlu0.b32.cont [9/16] 0.0, 128
  %177 = vxpose.xlu0.b32.cont [10/16] 0.0, 128
  %178 = vxpose.xlu0.b32.cont [11/16] 0.0, 128
  %179 = vxpose.xlu0.b32.cont [12/16] 0.0, 128
  %180 = vxpose.xlu0.b32.cont [13/16] 0.0, 128
  %181 = vxpose.xlu0.b32.cont [14/16] 0.0, 128
  %182 = vxpose.xlu0.b32.cont [15/16] 0.0, 128
  %183 = vxpose.xlu0.b32.end [16/16] 0.0, 128
  %v184 = vpop.trf.xlu0
  %v185 = vpop.trf.xlu0
  %v186 = vpop.trf.xlu0
  %v187 = vpop.trf.xlu0
  %v188 = vpop.trf.xlu0
  %v189 = vpop.trf.xlu0
  %v190 = vpop.trf.xlu0
  %v191 = vpop.trf.xlu0
  %v192 = vpop.trf.xlu0
  %v193 = vpop.trf.xlu0
  %v194 = vpop.trf.xlu0
  %v195 = vpop.trf.xlu0
  %v196 = vpop.trf.xlu0
  %v197 = vpop.trf.xlu0
  %v198 = vpop.trf.xlu0
  %v199 = vpop.trf.xlu0
  %201 = vset.pattern.permute.xlu0 2
  %202 = vperm.xlu0 %201, %v159
  %v203 = vpop.permute.xlu0 %202
  %206 = vset.pattern.permute.xlu0 2
  %207 = vperm.xlu0 %206, %v165
  %v208 = vpop.permute.xlu0 %207
  %v210 = vlaneseq
  %v211 = vshrl.u32 %v210, 7
  %v212 = vsub.s32 0, %v211
  %v213 = vrot.slane %v184, %v212
  %v214 = vadd.f32 %v203, %v213
  %v215 = vadd.f32 %v208, %v213
  %vm216 = vcmp.gt.f32.partialorder %v214, 0.0
  %vm217 = vcmp.gt.f32.partialorder %v215, 0.0
  %v218 = vmul.f32 %v214, 0.2
  %v219 = vmul.f32 %v215, 0.2
  %v220 = vsel %vm216, %v214, %v218
  %v221 = vsel %vm217, %v215, %v219
  %vm222 = vcmp.gt.f32.partialorder %v40, 0.0
  %vm223 = vcmp.gt.f32.partialorder %v41, 0.0
  %v224 = vsel %vm222, %v220, -1e+30
  %v225 = vsel %vm223, %v221, -1e+30
  %vm226 = vcmask 130048
  %v227 = vsel %vm226, %v224, -inf
  %228 = vmax.xlane.f32.xlu0 %v227
  %v229 = vpop.xlane.xlu0 %228
  %v230 = vsel %vm226, %v225, -inf
  %231 = vmax.xlane.f32.xlu0 %v230
  %v232 = vpop.xlane.xlu0 %231
  %v233 = vsub.f32 %v224, %v229
  %v234 = vsub.f32 %v225, %v232
  %v235 = vmul.f32 %v233, 1.442695
  %v236 = vpow.pop %v235
  %v237 = vmul.f32 %v234, 1.442695
  %v238 = vpow.pop %v237
  %v239 = vsel %vm226, %v236, 0.0
  %240 = vadd.xlane.f32.xlu0 %v239
  %v241 = vpop.xlane.xlu0 %240
  %v242 = vsel %vm226, %v238, 0.0
  %243 = vadd.xlane.f32.xlu0 %v242
  %v244 = vpop.xlane.xlu0 %243
  %v245 = vmax.f32 %v241, 1e-20
  %v246 = vmax.f32 %v244, 1e-20
  %v247 = vrcp.pop %v245
  %v248 = vrcp.pop %v246
  %v249 = vmul.f32 %v236, %v247
  %v250 = vmul.f32 %v238, %v248
  %v251 = vpack.c.bf16 %v250, %v249
  %v252 = vpack.c.bf16 %v163, %v157
  %v254 = vsel %vm226, %v251, 0
  %256 = vmatprep.subr.bf16.mxu0 0
  %257 = vmatpush1.bf16.msra.mxu0 0
  %258 = vmatprep.subr.bf16.mxu0 0
  %259 = vmatpush1.bf16.msra.mxu0 0
  %260 = vmatprep.subr.bf16.mxu0 0
  %261 = vmatpush1.bf16.msra.mxu0 0
  %262 = vmatprep.subr.bf16.mxu0 0
  %263 = vmatpush1.bf16.msra.mxu0 0
  %264 = vmatprep.subr.bf16.mxu0 0
  %265 = vmatpush1.bf16.msra.mxu0 0
  %266 = vmatprep.subr.bf16.mxu0 0
  %267 = vmatpush1.bf16.msra.mxu0 0
  %268 = vmatprep.subr.bf16.mxu0 0
  %269 = vmatpush1.bf16.msra.mxu0 0
  %270 = vmatprep.subr.bf16.mxu0 0
  %271 = vmatpush1.bf16.msra.mxu0 %v252
  %272 = vmatprep.subr.bf16.mxu0 0
  %273 = vmatpush2.bf16.msra.mxu0 0
  %274 = vmatprep.subr.bf16.mxu0 0
  %275 = vmatpush2.bf16.msra.mxu0 0
  %276 = vmatprep.subr.bf16.mxu0 0
  %277 = vmatpush2.bf16.msra.mxu0 0
  %278 = vmatprep.subr.bf16.mxu0 0
  %279 = vmatpush2.bf16.msra.mxu0 0
  %280 = vmatprep.subr.bf16.mxu0 0
  %281 = vmatpush2.bf16.msra.mxu0 0
  %282 = vmatprep.subr.bf16.mxu0 0
  %283 = vmatpush2.bf16.msra.mxu0 0
  %284 = vmatprep.subr.bf16.mxu0 0
  %285 = vmatpush2.bf16.msra.mxu0 0
  %286 = vmatprep.subr.bf16.mxu0 0
  %287 = vmatpush2.bf16.msra.mxu0 0
  %288 = vmatprep.mubr.bf16.mxu0 0
  %289 = vmatmul.mubr.bf16.gmra.mxu0 %v254
  %v290 = vpop.f32.mrf.mxu0
  %v291 = vadd.f32 0.0, %v290
  %v292 = vpop.f32.mrf.mxu0
  %v293 = vpop.f32.mrf.mxu0
  %v294 = vadd.f32 0.0, %v293
  %v295 = vpop.f32.mrf.mxu0
  %296 = vdwg.mxu0
  %297 = vset.pattern.permute.xlu0 3
  %298 = vperm.xlu0 %297, %v159
  %v299 = vpop.permute.xlu0 %298
  %301 = vset.pattern.permute.xlu0 3
  %302 = vperm.xlu0 %301, %v165
  %v303 = vpop.permute.xlu0 %302
  %v305 = vlaneseq
  %v306 = vshrl.u32 %v305, 7
  %v307 = vsub.s32 1, %v306
  %v308 = vrot.slane %v184, %v307
  %v309 = vadd.f32 %v299, %v308
  %v310 = vadd.f32 %v303, %v308
  %vm311 = vcmp.gt.f32.partialorder %v309, 0.0
  %vm312 = vcmp.gt.f32.partialorder %v310, 0.0
  %v313 = vmul.f32 %v309, 0.2
  %v314 = vmul.f32 %v310, 0.2
  %v315 = vsel %vm311, %v309, %v313
  %v316 = vsel %vm312, %v310, %v314
  %v317 = vsel %vm222, %v315, -1e+30
  %v318 = vsel %vm223, %v316, -1e+30
  %v319 = vsel %vm226, %v317, -inf
  %320 = vmax.xlane.f32.xlu0 %v319
  %v321 = vpop.xlane.xlu0 %320
  %v322 = vsel %vm226, %v318, -inf
  %323 = vmax.xlane.f32.xlu0 %v322
  %v324 = vpop.xlane.xlu0 %323
  %v325 = vsub.f32 %v317, %v321
  %v326 = vsub.f32 %v318, %v324
  %v327 = vmul.f32 %v325, 1.442695
  %v328 = vpow.pop %v327
  %v329 = vmul.f32 %v326, 1.442695
  %v330 = vpow.pop %v329
  %v331 = vsel %vm226, %v328, 0.0
  %332 = vadd.xlane.f32.xlu0 %v331
  %v333 = vpop.xlane.xlu0 %332
  %v334 = vsel %vm226, %v330, 0.0
  %335 = vadd.xlane.f32.xlu0 %v334
  %v336 = vpop.xlane.xlu0 %335
  %v337 = vmax.f32 %v333, 1e-20
  %v338 = vmax.f32 %v336, 1e-20
  %v339 = vrcp.pop %v337
  %v340 = vrcp.pop %v338
  %v341 = vmul.f32 %v328, %v339
  %v342 = vmul.f32 %v330, %v340
  %v343 = vpack.c.bf16 %v342, %v341
  %345 = vrot.lane.b32.xlu0 %v252, 64
  %v346 = vpop.permute.xlu0 %345
  %v349 = vsel %vm226, %v343, 0
  %351 = vmatprep.subr.bf16.mxu0 0
  %352 = vmatpush1.bf16.msra.mxu0 0
  %353 = vmatprep.subr.bf16.mxu0 0
  %354 = vmatpush1.bf16.msra.mxu0 0
  %355 = vmatprep.subr.bf16.mxu0 0
  %356 = vmatpush1.bf16.msra.mxu0 0
  %357 = vmatprep.subr.bf16.mxu0 0
  %358 = vmatpush1.bf16.msra.mxu0 0
  %359 = vmatprep.subr.bf16.mxu0 0
  %360 = vmatpush1.bf16.msra.mxu0 0
  %361 = vmatprep.subr.bf16.mxu0 0
  %362 = vmatpush1.bf16.msra.mxu0 0
  %363 = vmatprep.subr.bf16.mxu0 0
  %364 = vmatpush1.bf16.msra.mxu0 0
  %365 = vmatprep.subr.bf16.mxu0 0
  %366 = vmatpush1.bf16.msra.mxu0 %v346
  %367 = vmatprep.subr.bf16.mxu0 0
  %368 = vmatpush2.bf16.msra.mxu0 0
  %369 = vmatprep.subr.bf16.mxu0 0
  %370 = vmatpush2.bf16.msra.mxu0 0
  %371 = vmatprep.subr.bf16.mxu0 0
  %372 = vmatpush2.bf16.msra.mxu0 0
  %373 = vmatprep.subr.bf16.mxu0 0
  %374 = vmatpush2.bf16.msra.mxu0 0
  %375 = vmatprep.subr.bf16.mxu0 0
  %376 = vmatpush2.bf16.msra.mxu0 0
  %377 = vmatprep.subr.bf16.mxu0 0
  %378 = vmatpush2.bf16.msra.mxu0 0
  %379 = vmatprep.subr.bf16.mxu0 0
  %380 = vmatpush2.bf16.msra.mxu0 0
  %381 = vmatprep.subr.bf16.mxu0 0
  %382 = vmatpush2.bf16.msra.mxu0 0
  %383 = vmatprep.mubr.bf16.mxu0 0
  %384 = vmatmul.mubr.bf16.gmra.mxu0 %v349
  %v385 = vpop.f32.mrf.mxu0
  %v386 = vadd.f32 0.0, %v385
  %v387 = vpop.f32.mrf.mxu0
  %v388 = vpop.f32.mrf.mxu0
  %v389 = vadd.f32 0.0, %v388
  %v390 = vpop.f32.mrf.mxu0
  %391 = vdwg.mxu0
  %394 = vrot.lane.b32.xlu0 %v386, 64
  %v395 = vpop.permute.xlu0 %394
  %396 = vrot.lane.b32.xlu0 %v389, 64
  %v397 = vpop.permute.xlu0 %396
  %vm400 = vcmask 523264
  %v401 = vsel %vm400, %v291, %v395
  %v402 = vsel %vm400, %v294, %v397
  %v404 = vlaneseq
  %v405 = vshrl.u32 %v404, 7
  %v406 = vsub.s32 0, %v405
  %v407 = vrot.slane %v167, %v406
  %v409 = vadd.f32 %v401, %v407
  %v410 = vadd.f32 %v402, %v407
  %v411 = vmax.f32 %v409, 0.0
  %v412 = vmax.f32 %v410, 0.0
  %v413 = vld [vmem:[%s4] sm:$0xff]
  %v414 = vld [vmem:[%s4 + $0x8] sm:$0xff]
  %v415 = vld [vmem:[%s4 + $0x10] sm:$0xff]
  %v416 = vld [vmem:[%s4 + $0x18] sm:$0xff]
  %v417 = vld [vmem:[%s4 + $0x20] sm:$0xff]
  %v418 = vld [vmem:[%s4 + $0x28] sm:$0xff]
  %v419 = vld [vmem:[%s4 + $0x30] sm:$0xff]
  %v420 = vld [vmem:[%s4 + $0x38] sm:$0xff]
  %v421 = vld [vmem:[%s4 + $0x40] sm:$0xff]
  %v422 = vld [vmem:[%s4 + $0x48] sm:$0xff]
  %v423 = vld [vmem:[%s4 + $0x50] sm:$0xff]
  %v424 = vld [vmem:[%s4 + $0x58] sm:$0xff]
  %v425 = vld [vmem:[%s4 + $0x60] sm:$0xff]
  %v426 = vld [vmem:[%s4 + $0x68] sm:$0xff]
  %v427 = vld [vmem:[%s4 + $0x70] sm:$0xff]
  %v428 = vld [vmem:[%s4 + $0x78] sm:$0xff]
  %v429 = vld [vmem:[%s4 + $0x80] sm:$0xff]
  %v430 = vld [vmem:[%s4 + $0x88] sm:$0xff]
  %v431 = vld [vmem:[%s4 + $0x90] sm:$0xff]
  %v432 = vld [vmem:[%s4 + $0x98] sm:$0xff]
  %v433 = vld [vmem:[%s4 + $0xa0] sm:$0xff]
  %v434 = vld [vmem:[%s4 + $0xa8] sm:$0xff]
  %v435 = vld [vmem:[%s4 + $0xb0] sm:$0xff]
  %v436 = vld [vmem:[%s4 + $0xb8] sm:$0xff]
  %v437 = vld [vmem:[%s4 + $0xc0] sm:$0xff]
  %v438 = vld [vmem:[%s4 + $0xc8] sm:$0xff]
  %v439 = vld [vmem:[%s4 + $0xd0] sm:$0xff]
  %v440 = vld [vmem:[%s4 + $0xd8] sm:$0xff]
  %v441 = vld [vmem:[%s4 + $0xe0] sm:$0xff]
  %v442 = vld [vmem:[%s4 + $0xe8] sm:$0xff]
  %v443 = vld [vmem:[%s4 + $0xf0] sm:$0xff]
  %v444 = vld [vmem:[%s4 + $0xf8] sm:$0xff]
  %v445 = vld [vmem:[%s4 + $0x100] sm:$0xf]
  %v446 = vld [vmem:[%s4 + $0x108] sm:$0xf]
  %v447 = vld [vmem:[%s5] sm:$0xff]
  %v448 = vld [vmem:[%s5 + $0x8] sm:$0xff]
  %v449 = vld [vmem:[%s5 + $0x10] sm:$0xff]
  %v450 = vld [vmem:[%s5 + $0x18] sm:$0xff]
  %v451 = vld [vmem:[%s5 + $0x20] sm:$0xff]
  %v452 = vld [vmem:[%s5 + $0x28] sm:$0xff]
  %v453 = vld [vmem:[%s5 + $0x30] sm:$0xff]
  %v454 = vld [vmem:[%s5 + $0x38] sm:$0xff]
  %v455 = vld [vmem:[%s5 + $0x40] sm:$0xff]
  %v456 = vld [vmem:[%s5 + $0x48] sm:$0xff]
  %v457 = vld [vmem:[%s5 + $0x50] sm:$0xff]
  %v458 = vld [vmem:[%s5 + $0x58] sm:$0xff]
  %v459 = vld [vmem:[%s5 + $0x60] sm:$0xff]
  %v460 = vld [vmem:[%s5 + $0x68] sm:$0xff]
  %v461 = vld [vmem:[%s5 + $0x70] sm:$0xff]
  %v462 = vld [vmem:[%s5 + $0x78] sm:$0xff]
  %v463 = vld [vmem:[%s5 + $0x80] sm:$0xff]
  %v464 = vld [vmem:[%s5 + $0x88] sm:$0xff]
  %v465 = vld [vmem:[%s5 + $0x90] sm:$0xff]
  %v466 = vld [vmem:[%s5 + $0x98] sm:$0xff]
  %v467 = vld [vmem:[%s5 + $0xa0] sm:$0xff]
  %v468 = vld [vmem:[%s5 + $0xa8] sm:$0xff]
  %v469 = vld [vmem:[%s5 + $0xb0] sm:$0xff]
  %v470 = vld [vmem:[%s5 + $0xb8] sm:$0xff]
  %v471 = vld [vmem:[%s5 + $0xc0] sm:$0xff]
  %v472 = vld [vmem:[%s5 + $0xc8] sm:$0xff]
  %v473 = vld [vmem:[%s5 + $0xd0] sm:$0xff]
  %v474 = vld [vmem:[%s5 + $0xd8] sm:$0xff]
  %v475 = vld [vmem:[%s5 + $0xe0] sm:$0xff]
  %v476 = vld [vmem:[%s5 + $0xe8] sm:$0xff]
  %v477 = vld [vmem:[%s5 + $0xf0] sm:$0xff]
  %v478 = vld [vmem:[%s5 + $0xf8] sm:$0xff]
  %479 = vmatprep.subr.mxu0 %v478
  %480 = vmatpush1.msra.mxu0 %v477
  %481 = vmatprep.subr.mxu0 %v476
  %482 = vmatpush1.msra.mxu0 %v475
  %483 = vmatprep.subr.mxu0 %v474
  %484 = vmatpush1.msra.mxu0 %v473
  %485 = vmatprep.subr.mxu0 %v472
  %486 = vmatpush1.msra.mxu0 %v471
  %487 = vmatprep.subr.mxu0 %v470
  %488 = vmatpush1.msra.mxu0 %v469
  %489 = vmatprep.subr.mxu0 %v468
  %490 = vmatpush1.msra.mxu0 %v467
  %491 = vmatprep.subr.mxu0 %v466
  %492 = vmatpush1.msra.mxu0 %v465
  %493 = vmatprep.subr.mxu0 %v464
  %494 = vmatpush1.msra.mxu0 %v463
  %495 = vmatprep.subr.mxu0 %v462
  %496 = vmatpush1.msra.mxu0 %v461
  %497 = vmatprep.subr.mxu0 %v460
  %498 = vmatpush1.msra.mxu0 %v459
  %499 = vmatprep.subr.mxu0 %v458
  %500 = vmatpush1.msra.mxu0 %v457
  %501 = vmatprep.subr.mxu0 %v456
  %502 = vmatpush1.msra.mxu0 %v455
  %503 = vmatprep.subr.mxu0 %v454
  %504 = vmatpush1.msra.mxu0 %v453
  %505 = vmatprep.subr.mxu0 %v452
  %506 = vmatpush1.msra.mxu0 %v451
  %507 = vmatprep.subr.mxu0 %v450
  %508 = vmatpush1.msra.mxu0 %v449
  %509 = vmatprep.subr.mxu0 %v448
  %510 = vmatpush1.msra.mxu0 %v447
  %511 = vmatprep.subr.mxu0 0.0
  %512 = vmatpush2.msra.mxu0 0.0
  %513 = vmatprep.subr.mxu0 0.0
  %514 = vmatpush2.msra.mxu0 0.0
  %515 = vmatprep.subr.mxu0 0.0
  %516 = vmatpush2.msra.mxu0 0.0
  %517 = vmatprep.subr.mxu0 0.0
  %518 = vmatpush2.msra.mxu0 0.0
  %519 = vmatprep.subr.mxu0 0.0
  %520 = vmatpush2.msra.mxu0 0.0
  %521 = vmatprep.subr.mxu0 0.0
  %522 = vmatpush2.msra.mxu0 0.0
  %523 = vmatprep.subr.mxu0 0.0
  %524 = vmatpush2.msra.mxu0 0.0
  %525 = vmatprep.subr.mxu0 0.0
  %526 = vmatpush2.msra.mxu0 0.0
  %527 = vmatprep.subr.mxu0 0.0
  %528 = vmatpush2.msra.mxu0 0.0
  %529 = vmatprep.subr.mxu0 0.0
  %530 = vmatpush2.msra.mxu0 0.0
  %531 = vmatprep.subr.mxu0 0.0
  %532 = vmatpush2.msra.mxu0 0.0
  %533 = vmatprep.subr.mxu0 0.0
  %534 = vmatpush2.msra.mxu0 0.0
  %535 = vmatprep.subr.mxu0 0.0
  %536 = vmatpush2.msra.mxu0 0.0
  %537 = vmatprep.subr.mxu0 0.0
  %538 = vmatpush2.msra.mxu0 0.0
  %539 = vmatprep.subr.mxu0 0.0
  %540 = vmatpush2.msra.mxu0 0.0
  %541 = vmatprep.subr.mxu0 0.0
  %542 = vmatpush2.msra.mxu0 0.0
  %543 = vmatprep.mubr.f32.mxu0 0.0
  %544 = vmatmul.mubr.f32.gmra.mxu0 %v411
  %v545 = vpop.f32.mrf.mxu0
  %v546 = vadd.f32 0.0, %v545
  %v547 = vpop.f32.mrf.mxu0
  %v548 = vadd.f32 0.0, %v547
  %549 = vmatprep.mubr.f32.mxu0 0.0
  %550 = vmatmul.mubr.f32.gmra.mxu0 %v412
  %v551 = vpop.f32.mrf.mxu0
  %v552 = vadd.f32 0.0, %v551
  %v553 = vpop.f32.mrf.mxu0
  %v554 = vadd.f32 0.0, %v553
  %555 = vdwg.mxu0
  %v557 = vsel %vm83, %v445, 0
  %v560 = vsel %vm83, %v446, 0
  %562 = vmatprep.subr.mxu0 %v444
  %563 = vmatpush1.msra.mxu0 %v443
  %564 = vmatprep.subr.mxu0 %v442
  %565 = vmatpush1.msra.mxu0 %v441
  %566 = vmatprep.subr.mxu0 %v440
  %567 = vmatpush1.msra.mxu0 %v439
  %568 = vmatprep.subr.mxu0 %v438
  %569 = vmatpush1.msra.mxu0 %v437
  %570 = vmatprep.subr.mxu0 %v436
  %571 = vmatpush1.msra.mxu0 %v435
  %572 = vmatprep.subr.mxu0 %v434
  %573 = vmatpush1.msra.mxu0 %v433
  %574 = vmatprep.subr.mxu0 %v432
  %575 = vmatpush1.msra.mxu0 %v431
  %576 = vmatprep.subr.mxu0 %v430
  %577 = vmatpush1.msra.mxu0 %v429
  %578 = vmatprep.subr.mxu0 %v428
  %579 = vmatpush1.msra.mxu0 %v427
  %580 = vmatprep.subr.mxu0 %v426
  %581 = vmatpush1.msra.mxu0 %v425
  %582 = vmatprep.subr.mxu0 %v424
  %583 = vmatpush1.msra.mxu0 %v423
  %584 = vmatprep.subr.mxu0 %v422
  %585 = vmatpush1.msra.mxu0 %v421
  %586 = vmatprep.subr.mxu0 %v420
  %587 = vmatpush1.msra.mxu0 %v419
  %588 = vmatprep.subr.mxu0 %v418
  %589 = vmatpush1.msra.mxu0 %v417
  %590 = vmatprep.subr.mxu0 %v416
  %591 = vmatpush1.msra.mxu0 %v415
  %592 = vmatprep.subr.mxu0 %v414
  %593 = vmatpush1.msra.mxu0 %v413
  %594 = vmatprep.subr.mxu0 0.0
  %595 = vmatpush2.msra.mxu0 0.0
  %596 = vmatprep.subr.mxu0 0.0
  %597 = vmatpush2.msra.mxu0 0.0
  %598 = vmatprep.subr.mxu0 0.0
  %599 = vmatpush2.msra.mxu0 0.0
  %600 = vmatprep.subr.mxu0 0.0
  %601 = vmatpush2.msra.mxu0 0.0
  %602 = vmatprep.subr.mxu0 0.0
  %603 = vmatpush2.msra.mxu0 0.0
  %604 = vmatprep.subr.mxu0 0.0
  %605 = vmatpush2.msra.mxu0 0.0
  %606 = vmatprep.subr.mxu0 0.0
  %607 = vmatpush2.msra.mxu0 0.0
  %608 = vmatprep.subr.mxu0 0.0
  %609 = vmatpush2.msra.mxu0 0.0
  %610 = vmatprep.subr.mxu0 0.0
  %611 = vmatpush2.msra.mxu0 0.0
  %612 = vmatprep.subr.mxu0 0.0
  %613 = vmatpush2.msra.mxu0 0.0
  %614 = vmatprep.subr.mxu0 0.0
  %615 = vmatpush2.msra.mxu0 0.0
  %616 = vmatprep.subr.mxu0 0.0
  %617 = vmatpush2.msra.mxu0 0.0
  %618 = vmatprep.subr.mxu0 0.0
  %619 = vmatpush2.msra.mxu0 0.0
  %620 = vmatprep.subr.mxu0 0.0
  %621 = vmatpush2.msra.mxu0 0.0
  %622 = vmatprep.subr.mxu0 0.0
  %623 = vmatpush2.msra.mxu0 0.0
  %624 = vmatprep.subr.mxu0 %v560
  %625 = vmatpush2.msra.mxu0 %v557
  %626 = vmatprep.mubr.f32.mxu0 %v78
  %627 = vmatmul.mubr.f32.gmra.mxu0 %v36
  %v628 = vpop.f32.mrf.mxu0
  %v629 = vadd.f32 %v546, %v628
  %v630 = vpop.f32.mrf.mxu0
  %v631 = vadd.f32 %v548, %v630
  %632 = vmatprep.mubr.f32.mxu0 %v81
  %633 = vmatmul.mubr.f32.gmra.mxu0 %v38
  %v634 = vpop.f32.mrf.mxu0
  %v635 = vadd.f32 %v552, %v634
  %v636 = vpop.f32.mrf.mxu0
  %v637 = vadd.f32 %v554, %v636
  %638 = vdwg.mxu0
  %v639 = vld [vmem:[%s6] sm:$0x1]
  %640 = vxpose.xlu0.b32.start [1/16] %v631, 128
  %641 = vxpose.xlu0.b32.cont [2/16] %v637, 128
  %642 = vxpose.xlu0.b32.cont [3/16] 0.0, 128
  %643 = vxpose.xlu0.b32.cont [4/16] 0.0, 128
  %644 = vxpose.xlu0.b32.cont [5/16] 0.0, 128
  %645 = vxpose.xlu0.b32.cont [6/16] 0.0, 128
  %646 = vxpose.xlu0.b32.cont [7/16] 0.0, 128
  %647 = vxpose.xlu0.b32.cont [8/16] 0.0, 128
  %648 = vxpose.xlu0.b32.cont [9/16] 0.0, 128
  %649 = vxpose.xlu0.b32.cont [10/16] 0.0, 128
  %650 = vxpose.xlu0.b32.cont [11/16] 0.0, 128
  %651 = vxpose.xlu0.b32.cont [12/16] 0.0, 128
  %652 = vxpose.xlu0.b32.cont [13/16] 0.0, 128
  %653 = vxpose.xlu0.b32.cont [14/16] 0.0, 128
  %654 = vxpose.xlu0.b32.cont [15/16] 0.0, 128
  %655 = vxpose.xlu0.b32.end [16/16] 0.0, 128
  %v656 = vpop.trf.xlu0
  %v657 = vpop.trf.xlu0
  %v658 = vpop.trf.xlu0
  %v659 = vpop.trf.xlu0
  %v660 = vpop.trf.xlu0
  %v661 = vpop.trf.xlu0
  %v662 = vpop.trf.xlu0
  %v663 = vpop.trf.xlu0
  %v664 = vpop.trf.xlu0
  %v665 = vpop.trf.xlu0
  %v666 = vpop.trf.xlu0
  %v667 = vpop.trf.xlu0
  %v668 = vpop.trf.xlu0
  %v669 = vpop.trf.xlu0
  %v670 = vpop.trf.xlu0
  %v671 = vpop.trf.xlu0
  %673 = vset.pattern.permute.xlu0 2
  %674 = vperm.xlu0 %673, %v631
  %v675 = vpop.permute.xlu0 %674
  %678 = vset.pattern.permute.xlu0 2
  %679 = vperm.xlu0 %678, %v637
  %v680 = vpop.permute.xlu0 %679
  %v682 = vlaneseq
  %v683 = vshrl.u32 %v682, 7
  %v684 = vsub.s32 0, %v683
  %v685 = vrot.slane %v656, %v684
  %v686 = vadd.f32 %v675, %v685
  %v687 = vadd.f32 %v680, %v685
  %vm688 = vcmp.gt.f32.partialorder %v686, 0.0
  %vm689 = vcmp.gt.f32.partialorder %v687, 0.0
  %v690 = vmul.f32 %v686, 0.2
  %v691 = vmul.f32 %v687, 0.2
  %v692 = vsel %vm688, %v686, %v690
  %v693 = vsel %vm689, %v687, %v691
  %v694 = vsel %vm222, %v692, -1e+30
  %v695 = vsel %vm223, %v693, -1e+30
  %v696 = vsel %vm226, %v694, -inf
  %697 = vmax.xlane.f32.xlu0 %v696
  %v698 = vpop.xlane.xlu0 %697
  %v699 = vsel %vm226, %v695, -inf
  %700 = vmax.xlane.f32.xlu0 %v699
  %v701 = vpop.xlane.xlu0 %700
  %v702 = vsub.f32 %v694, %v698
  %v703 = vsub.f32 %v695, %v701
  %v704 = vmul.f32 %v702, 1.442695
  %v705 = vpow.pop %v704
  %v706 = vmul.f32 %v703, 1.442695
  %v707 = vpow.pop %v706
  %v708 = vsel %vm226, %v705, 0.0
  %709 = vadd.xlane.f32.xlu0 %v708
  %v710 = vpop.xlane.xlu0 %709
  %v711 = vsel %vm226, %v707, 0.0
  %712 = vadd.xlane.f32.xlu0 %v711
  %v713 = vpop.xlane.xlu0 %712
  %v714 = vmax.f32 %v710, 1e-20
  %v715 = vmax.f32 %v713, 1e-20
  %v716 = vrcp.pop %v714
  %v717 = vrcp.pop %v715
  %v718 = vmul.f32 %v705, %v716
  %v719 = vmul.f32 %v707, %v717
  %v720 = vpack.c.bf16 %v719, %v718
  %v721 = vpack.c.bf16 %v635, %v629
  %v723 = vsel %vm226, %v720, 0
  %725 = vmatprep.subr.bf16.mxu0 0
  %726 = vmatpush1.bf16.msra.mxu0 0
  %727 = vmatprep.subr.bf16.mxu0 0
  %728 = vmatpush1.bf16.msra.mxu0 0
  %729 = vmatprep.subr.bf16.mxu0 0
  %730 = vmatpush1.bf16.msra.mxu0 0
  %731 = vmatprep.subr.bf16.mxu0 0
  %732 = vmatpush1.bf16.msra.mxu0 0
  %733 = vmatprep.subr.bf16.mxu0 0
  %734 = vmatpush1.bf16.msra.mxu0 0
  %735 = vmatprep.subr.bf16.mxu0 0
  %736 = vmatpush1.bf16.msra.mxu0 0
  %737 = vmatprep.subr.bf16.mxu0 0
  %738 = vmatpush1.bf16.msra.mxu0 0
  %739 = vmatprep.subr.bf16.mxu0 0
  %740 = vmatpush1.bf16.msra.mxu0 %v721
  %741 = vmatprep.subr.bf16.mxu0 0
  %742 = vmatpush2.bf16.msra.mxu0 0
  %743 = vmatprep.subr.bf16.mxu0 0
  %744 = vmatpush2.bf16.msra.mxu0 0
  %745 = vmatprep.subr.bf16.mxu0 0
  %746 = vmatpush2.bf16.msra.mxu0 0
  %747 = vmatprep.subr.bf16.mxu0 0
  %748 = vmatpush2.bf16.msra.mxu0 0
  %749 = vmatprep.subr.bf16.mxu0 0
  %750 = vmatpush2.bf16.msra.mxu0 0
  %751 = vmatprep.subr.bf16.mxu0 0
  %752 = vmatpush2.bf16.msra.mxu0 0
  %753 = vmatprep.subr.bf16.mxu0 0
  %754 = vmatpush2.bf16.msra.mxu0 0
  %755 = vmatprep.subr.bf16.mxu0 0
  %756 = vmatpush2.bf16.msra.mxu0 0
  %757 = vmatprep.mubr.bf16.mxu0 0
  %758 = vmatmul.mubr.bf16.gmra.mxu0 %v723
  %v759 = vpop.f32.mrf.mxu0
  %v760 = vadd.f32 0.0, %v759
  %v761 = vpop.f32.mrf.mxu0
  %v762 = vpop.f32.mrf.mxu0
  %v763 = vadd.f32 0.0, %v762
  %v764 = vpop.f32.mrf.mxu0
  %765 = vdwg.mxu0
  %766 = vset.pattern.permute.xlu0 3
  %767 = vperm.xlu0 %766, %v631
  %v768 = vpop.permute.xlu0 %767
  %770 = vset.pattern.permute.xlu0 3
  %771 = vperm.xlu0 %770, %v637
  %v772 = vpop.permute.xlu0 %771
  %v774 = vlaneseq
  %v775 = vshrl.u32 %v774, 7
  %v776 = vsub.s32 1, %v775
  %v777 = vrot.slane %v656, %v776
  %v778 = vadd.f32 %v768, %v777
  %v779 = vadd.f32 %v772, %v777
  %vm780 = vcmp.gt.f32.partialorder %v778, 0.0
  %vm781 = vcmp.gt.f32.partialorder %v779, 0.0
  %v782 = vmul.f32 %v778, 0.2
  %v783 = vmul.f32 %v779, 0.2
  %v784 = vsel %vm780, %v778, %v782
  %v785 = vsel %vm781, %v779, %v783
  %v786 = vsel %vm222, %v784, -1e+30
  %v787 = vsel %vm223, %v785, -1e+30
  %v788 = vsel %vm226, %v786, -inf
  %789 = vmax.xlane.f32.xlu0 %v788
  %v790 = vpop.xlane.xlu0 %789
  %v791 = vsel %vm226, %v787, -inf
  %792 = vmax.xlane.f32.xlu0 %v791
  %v793 = vpop.xlane.xlu0 %792
  %v794 = vsub.f32 %v786, %v790
  %v795 = vsub.f32 %v787, %v793
  %v796 = vmul.f32 %v794, 1.442695
  %v797 = vpow.pop %v796
  %v798 = vmul.f32 %v795, 1.442695
  %v799 = vpow.pop %v798
  %v800 = vsel %vm226, %v797, 0.0
  %801 = vadd.xlane.f32.xlu0 %v800
  %v802 = vpop.xlane.xlu0 %801
  %v803 = vsel %vm226, %v799, 0.0
  %804 = vadd.xlane.f32.xlu0 %v803
  %v805 = vpop.xlane.xlu0 %804
  %v806 = vmax.f32 %v802, 1e-20
  %v807 = vmax.f32 %v805, 1e-20
  %v808 = vrcp.pop %v806
  %v809 = vrcp.pop %v807
  %v810 = vmul.f32 %v797, %v808
  %v811 = vmul.f32 %v799, %v809
  %v812 = vpack.c.bf16 %v811, %v810
  %814 = vrot.lane.b32.xlu0 %v721, 64
  %v815 = vpop.permute.xlu0 %814
  %v818 = vsel %vm226, %v812, 0
  %820 = vmatprep.subr.bf16.mxu0 0
  %821 = vmatpush1.bf16.msra.mxu0 0
  %822 = vmatprep.subr.bf16.mxu0 0
  %823 = vmatpush1.bf16.msra.mxu0 0
  %824 = vmatprep.subr.bf16.mxu0 0
  %825 = vmatpush1.bf16.msra.mxu0 0
  %826 = vmatprep.subr.bf16.mxu0 0
  %827 = vmatpush1.bf16.msra.mxu0 0
  %828 = vmatprep.subr.bf16.mxu0 0
  %829 = vmatpush1.bf16.msra.mxu0 0
  %830 = vmatprep.subr.bf16.mxu0 0
  %831 = vmatpush1.bf16.msra.mxu0 0
  %832 = vmatprep.subr.bf16.mxu0 0
  %833 = vmatpush1.bf16.msra.mxu0 0
  %834 = vmatprep.subr.bf16.mxu0 0
  %835 = vmatpush1.bf16.msra.mxu0 %v815
  %836 = vmatprep.subr.bf16.mxu0 0
  %837 = vmatpush2.bf16.msra.mxu0 0
  %838 = vmatprep.subr.bf16.mxu0 0
  %839 = vmatpush2.bf16.msra.mxu0 0
  %840 = vmatprep.subr.bf16.mxu0 0
  %841 = vmatpush2.bf16.msra.mxu0 0
  %842 = vmatprep.subr.bf16.mxu0 0
  %843 = vmatpush2.bf16.msra.mxu0 0
  %844 = vmatprep.subr.bf16.mxu0 0
  %845 = vmatpush2.bf16.msra.mxu0 0
  %846 = vmatprep.subr.bf16.mxu0 0
  %847 = vmatpush2.bf16.msra.mxu0 0
  %848 = vmatprep.subr.bf16.mxu0 0
  %849 = vmatpush2.bf16.msra.mxu0 0
  %850 = vmatprep.subr.bf16.mxu0 0
  %851 = vmatpush2.bf16.msra.mxu0 0
  %852 = vmatprep.mubr.bf16.mxu0 0
  %853 = vmatmul.mubr.bf16.gmra.mxu0 %v818
  %v854 = vpop.f32.mrf.mxu0
  %v855 = vadd.f32 0.0, %v854
  %v856 = vpop.f32.mrf.mxu0
  %v857 = vpop.f32.mrf.mxu0
  %v858 = vadd.f32 0.0, %v857
  %v859 = vpop.f32.mrf.mxu0
  %860 = vdwg.mxu0
  %863 = vrot.lane.b32.xlu0 %v855, 64
  %v864 = vpop.permute.xlu0 %863
  %865 = vrot.lane.b32.xlu0 %v858, 64
  %v866 = vpop.permute.xlu0 %865
  %v869 = vsel %vm400, %v760, %v864
  %v870 = vsel %vm400, %v763, %v866
  %v872 = vlaneseq
  %v873 = vshrl.u32 %v872, 7
  %v874 = vsub.s32 0, %v873
  %v875 = vrot.slane %v639, %v874
  %v877 = vadd.f32 %v869, %v875
  %v878 = vadd.f32 %v870, %v875
  %v879 = vmax.f32 %v877, 0.0
  %v880 = vmax.f32 %v878, 0.0
  %v881 = vld [vmem:[%s7] sm:$0xff]
  %v882 = vld [vmem:[%s7 + $0x8] sm:$0xff]
  %v883 = vld [vmem:[%s7 + $0x10] sm:$0xff]
  %v884 = vld [vmem:[%s7 + $0x18] sm:$0xff]
  %v885 = vld [vmem:[%s7 + $0x20] sm:$0xff]
  %v886 = vld [vmem:[%s7 + $0x28] sm:$0xff]
  %v887 = vld [vmem:[%s7 + $0x30] sm:$0xff]
  %v888 = vld [vmem:[%s7 + $0x38] sm:$0xff]
  %v889 = vld [vmem:[%s7 + $0x40] sm:$0xff]
  %v890 = vld [vmem:[%s7 + $0x48] sm:$0xff]
  %v891 = vld [vmem:[%s7 + $0x50] sm:$0xff]
  %v892 = vld [vmem:[%s7 + $0x58] sm:$0xff]
  %v893 = vld [vmem:[%s7 + $0x60] sm:$0xff]
  %v894 = vld [vmem:[%s7 + $0x68] sm:$0xff]
  %v895 = vld [vmem:[%s7 + $0x70] sm:$0xff]
  %v896 = vld [vmem:[%s7 + $0x78] sm:$0xff]
  %v897 = vld [vmem:[%s7 + $0x80] sm:$0xff]
  %v898 = vld [vmem:[%s7 + $0x88] sm:$0xff]
  %v899 = vld [vmem:[%s7 + $0x90] sm:$0xff]
  %v900 = vld [vmem:[%s7 + $0x98] sm:$0xff]
  %v901 = vld [vmem:[%s7 + $0xa0] sm:$0xff]
  %v902 = vld [vmem:[%s7 + $0xa8] sm:$0xff]
  %v903 = vld [vmem:[%s7 + $0xb0] sm:$0xff]
  %v904 = vld [vmem:[%s7 + $0xb8] sm:$0xff]
  %v905 = vld [vmem:[%s7 + $0xc0] sm:$0xff]
  %v906 = vld [vmem:[%s7 + $0xc8] sm:$0xff]
  %v907 = vld [vmem:[%s7 + $0xd0] sm:$0xff]
  %v908 = vld [vmem:[%s7 + $0xd8] sm:$0xff]
  %v909 = vld [vmem:[%s7 + $0xe0] sm:$0xff]
  %v910 = vld [vmem:[%s7 + $0xe8] sm:$0xff]
  %v911 = vld [vmem:[%s7 + $0xf0] sm:$0xff]
  %v912 = vld [vmem:[%s7 + $0xf8] sm:$0xff]
  %v913 = vld [vmem:[%s7 + $0x100] sm:$0xf]
  %v914 = vld [vmem:[%s7 + $0x108] sm:$0xf]
  %v915 = vld [vmem:[%s8] sm:$0xff]
  %v916 = vld [vmem:[%s8 + $0x8] sm:$0xff]
  %v917 = vld [vmem:[%s8 + $0x10] sm:$0xff]
  %v918 = vld [vmem:[%s8 + $0x18] sm:$0xff]
  %v919 = vld [vmem:[%s8 + $0x20] sm:$0xff]
  %v920 = vld [vmem:[%s8 + $0x28] sm:$0xff]
  %v921 = vld [vmem:[%s8 + $0x30] sm:$0xff]
  %v922 = vld [vmem:[%s8 + $0x38] sm:$0xff]
  %v923 = vld [vmem:[%s8 + $0x40] sm:$0xff]
  %v924 = vld [vmem:[%s8 + $0x48] sm:$0xff]
  %v925 = vld [vmem:[%s8 + $0x50] sm:$0xff]
  %v926 = vld [vmem:[%s8 + $0x58] sm:$0xff]
  %v927 = vld [vmem:[%s8 + $0x60] sm:$0xff]
  %v928 = vld [vmem:[%s8 + $0x68] sm:$0xff]
  %v929 = vld [vmem:[%s8 + $0x70] sm:$0xff]
  %v930 = vld [vmem:[%s8 + $0x78] sm:$0xff]
  %v931 = vld [vmem:[%s8 + $0x80] sm:$0xff]
  %v932 = vld [vmem:[%s8 + $0x88] sm:$0xff]
  %v933 = vld [vmem:[%s8 + $0x90] sm:$0xff]
  %v934 = vld [vmem:[%s8 + $0x98] sm:$0xff]
  %v935 = vld [vmem:[%s8 + $0xa0] sm:$0xff]
  %v936 = vld [vmem:[%s8 + $0xa8] sm:$0xff]
  %v937 = vld [vmem:[%s8 + $0xb0] sm:$0xff]
  %v938 = vld [vmem:[%s8 + $0xb8] sm:$0xff]
  %v939 = vld [vmem:[%s8 + $0xc0] sm:$0xff]
  %v940 = vld [vmem:[%s8 + $0xc8] sm:$0xff]
  %v941 = vld [vmem:[%s8 + $0xd0] sm:$0xff]
  %v942 = vld [vmem:[%s8 + $0xd8] sm:$0xff]
  %v943 = vld [vmem:[%s8 + $0xe0] sm:$0xff]
  %v944 = vld [vmem:[%s8 + $0xe8] sm:$0xff]
  %v945 = vld [vmem:[%s8 + $0xf0] sm:$0xff]
  %v946 = vld [vmem:[%s8 + $0xf8] sm:$0xff]
  %947 = vmatprep.subr.mxu0 %v946
  %948 = vmatpush1.msra.mxu0 %v945
  %949 = vmatprep.subr.mxu0 %v944
  %950 = vmatpush1.msra.mxu0 %v943
  %951 = vmatprep.subr.mxu0 %v942
  %952 = vmatpush1.msra.mxu0 %v941
  %953 = vmatprep.subr.mxu0 %v940
  %954 = vmatpush1.msra.mxu0 %v939
  %955 = vmatprep.subr.mxu0 %v938
  %956 = vmatpush1.msra.mxu0 %v937
  %957 = vmatprep.subr.mxu0 %v936
  %958 = vmatpush1.msra.mxu0 %v935
  %959 = vmatprep.subr.mxu0 %v934
  %960 = vmatpush1.msra.mxu0 %v933
  %961 = vmatprep.subr.mxu0 %v932
  %962 = vmatpush1.msra.mxu0 %v931
  %963 = vmatprep.subr.mxu0 %v930
  %964 = vmatpush1.msra.mxu0 %v929
  %965 = vmatprep.subr.mxu0 %v928
  %966 = vmatpush1.msra.mxu0 %v927
  %967 = vmatprep.subr.mxu0 %v926
  %968 = vmatpush1.msra.mxu0 %v925
  %969 = vmatprep.subr.mxu0 %v924
  %970 = vmatpush1.msra.mxu0 %v923
  %971 = vmatprep.subr.mxu0 %v922
  %972 = vmatpush1.msra.mxu0 %v921
  %973 = vmatprep.subr.mxu0 %v920
  %974 = vmatpush1.msra.mxu0 %v919
  %975 = vmatprep.subr.mxu0 %v918
  %976 = vmatpush1.msra.mxu0 %v917
  %977 = vmatprep.subr.mxu0 %v916
  %978 = vmatpush1.msra.mxu0 %v915
  %979 = vmatprep.subr.mxu0 0.0
  %980 = vmatpush2.msra.mxu0 0.0
  %981 = vmatprep.subr.mxu0 0.0
  %982 = vmatpush2.msra.mxu0 0.0
  %983 = vmatprep.subr.mxu0 0.0
  %984 = vmatpush2.msra.mxu0 0.0
  %985 = vmatprep.subr.mxu0 0.0
  %986 = vmatpush2.msra.mxu0 0.0
  %987 = vmatprep.subr.mxu0 0.0
  %988 = vmatpush2.msra.mxu0 0.0
  %989 = vmatprep.subr.mxu0 0.0
  %990 = vmatpush2.msra.mxu0 0.0
  %991 = vmatprep.subr.mxu0 0.0
  %992 = vmatpush2.msra.mxu0 0.0
  %993 = vmatprep.subr.mxu0 0.0
  %994 = vmatpush2.msra.mxu0 0.0
  %995 = vmatprep.subr.mxu0 0.0
  %996 = vmatpush2.msra.mxu0 0.0
  %997 = vmatprep.subr.mxu0 0.0
  %998 = vmatpush2.msra.mxu0 0.0
  %999 = vmatprep.subr.mxu0 0.0
  %1000 = vmatpush2.msra.mxu0 0.0
  %1001 = vmatprep.subr.mxu0 0.0
  %1002 = vmatpush2.msra.mxu0 0.0
  %1003 = vmatprep.subr.mxu0 0.0
  %1004 = vmatpush2.msra.mxu0 0.0
  %1005 = vmatprep.subr.mxu0 0.0
  %1006 = vmatpush2.msra.mxu0 0.0
  %1007 = vmatprep.subr.mxu0 0.0
  %1008 = vmatpush2.msra.mxu0 0.0
  %1009 = vmatprep.subr.mxu0 0.0
  %1010 = vmatpush2.msra.mxu0 0.0
  %1011 = vmatprep.mubr.f32.mxu0 0.0
  %1012 = vmatmul.mubr.f32.gmra.mxu0 %v879
  %v1013 = vpop.f32.mrf.mxu0
  %v1014 = vadd.f32 0.0, %v1013
  %v1015 = vpop.f32.mrf.mxu0
  %v1016 = vadd.f32 0.0, %v1015
  %1017 = vmatprep.mubr.f32.mxu0 0.0
  %1018 = vmatmul.mubr.f32.gmra.mxu0 %v880
  %v1019 = vpop.f32.mrf.mxu0
  %v1020 = vadd.f32 0.0, %v1019
  %v1021 = vpop.f32.mrf.mxu0
  %v1022 = vadd.f32 0.0, %v1021
  %1023 = vdwg.mxu0
  %v1025 = vsel %vm83, %v913, 0
  %v1028 = vsel %vm83, %v914, 0
  %1030 = vmatprep.subr.mxu0 %v912
  %1031 = vmatpush1.msra.mxu0 %v911
  %1032 = vmatprep.subr.mxu0 %v910
  %1033 = vmatpush1.msra.mxu0 %v909
  %1034 = vmatprep.subr.mxu0 %v908
  %1035 = vmatpush1.msra.mxu0 %v907
  %1036 = vmatprep.subr.mxu0 %v906
  %1037 = vmatpush1.msra.mxu0 %v905
  %1038 = vmatprep.subr.mxu0 %v904
  %1039 = vmatpush1.msra.mxu0 %v903
  %1040 = vmatprep.subr.mxu0 %v902
  %1041 = vmatpush1.msra.mxu0 %v901
  %1042 = vmatprep.subr.mxu0 %v900
  %1043 = vmatpush1.msra.mxu0 %v899
  %1044 = vmatprep.subr.mxu0 %v898
  %1045 = vmatpush1.msra.mxu0 %v897
  %1046 = vmatprep.subr.mxu0 %v896
  %1047 = vmatpush1.msra.mxu0 %v895
  %1048 = vmatprep.subr.mxu0 %v894
  %1049 = vmatpush1.msra.mxu0 %v893
  %1050 = vmatprep.subr.mxu0 %v892
  %1051 = vmatpush1.msra.mxu0 %v891
  %1052 = vmatprep.subr.mxu0 %v890
  %1053 = vmatpush1.msra.mxu0 %v889
  %1054 = vmatprep.subr.mxu0 %v888
  %1055 = vmatpush1.msra.mxu0 %v887
  %1056 = vmatprep.subr.mxu0 %v886
  %1057 = vmatpush1.msra.mxu0 %v885
  %1058 = vmatprep.subr.mxu0 %v884
  %1059 = vmatpush1.msra.mxu0 %v883
  %1060 = vmatprep.subr.mxu0 %v882
  %1061 = vmatpush1.msra.mxu0 %v881
  %1062 = vmatprep.subr.mxu0 0.0
  %1063 = vmatpush2.msra.mxu0 0.0
  %1064 = vmatprep.subr.mxu0 0.0
  %1065 = vmatpush2.msra.mxu0 0.0
  %1066 = vmatprep.subr.mxu0 0.0
  %1067 = vmatpush2.msra.mxu0 0.0
  %1068 = vmatprep.subr.mxu0 0.0
  %1069 = vmatpush2.msra.mxu0 0.0
  %1070 = vmatprep.subr.mxu0 0.0
  %1071 = vmatpush2.msra.mxu0 0.0
  %1072 = vmatprep.subr.mxu0 0.0
  %1073 = vmatpush2.msra.mxu0 0.0
  %1074 = vmatprep.subr.mxu0 0.0
  %1075 = vmatpush2.msra.mxu0 0.0
  %1076 = vmatprep.subr.mxu0 0.0
  %1077 = vmatpush2.msra.mxu0 0.0
  %1078 = vmatprep.subr.mxu0 0.0
  %1079 = vmatpush2.msra.mxu0 0.0
  %1080 = vmatprep.subr.mxu0 0.0
  %1081 = vmatpush2.msra.mxu0 0.0
  %1082 = vmatprep.subr.mxu0 0.0
  %1083 = vmatpush2.msra.mxu0 0.0
  %1084 = vmatprep.subr.mxu0 0.0
  %1085 = vmatpush2.msra.mxu0 0.0
  %1086 = vmatprep.subr.mxu0 0.0
  %1087 = vmatpush2.msra.mxu0 0.0
  %1088 = vmatprep.subr.mxu0 0.0
  %1089 = vmatpush2.msra.mxu0 0.0
  %1090 = vmatprep.subr.mxu0 0.0
  %1091 = vmatpush2.msra.mxu0 0.0
  %1092 = vmatprep.subr.mxu0 %v1028
  %1093 = vmatpush2.msra.mxu0 %v1025
  %1094 = vmatprep.mubr.f32.mxu0 %v78
  %1095 = vmatmul.mubr.f32.gmra.mxu0 %v36
  %v1096 = vpop.f32.mrf.mxu0
  %v1097 = vadd.f32 %v1014, %v1096
  %v1098 = vpop.f32.mrf.mxu0
  %v1099 = vadd.f32 %v1016, %v1098
  %1100 = vmatprep.mubr.f32.mxu0 %v81
  %1101 = vmatmul.mubr.f32.gmra.mxu0 %v38
  %v1102 = vpop.f32.mrf.mxu0
  %v1103 = vadd.f32 %v1020, %v1102
  %v1104 = vpop.f32.mrf.mxu0
  %v1105 = vadd.f32 %v1022, %v1104
  %1106 = vdwg.mxu0
  %v1107 = vld [vmem:[%s9] sm:$0x1]
  %1108 = vxpose.xlu0.b32.start [1/16] %v1099, 128
  %1109 = vxpose.xlu0.b32.cont [2/16] %v1105, 128
  %1110 = vxpose.xlu0.b32.cont [3/16] 0.0, 128
  %1111 = vxpose.xlu0.b32.cont [4/16] 0.0, 128
  %1112 = vxpose.xlu0.b32.cont [5/16] 0.0, 128
  %1113 = vxpose.xlu0.b32.cont [6/16] 0.0, 128
  %1114 = vxpose.xlu0.b32.cont [7/16] 0.0, 128
  %1115 = vxpose.xlu0.b32.cont [8/16] 0.0, 128
  %1116 = vxpose.xlu0.b32.cont [9/16] 0.0, 128
  %1117 = vxpose.xlu0.b32.cont [10/16] 0.0, 128
  %1118 = vxpose.xlu0.b32.cont [11/16] 0.0, 128
  %1119 = vxpose.xlu0.b32.cont [12/16] 0.0, 128
  %1120 = vxpose.xlu0.b32.cont [13/16] 0.0, 128
  %1121 = vxpose.xlu0.b32.cont [14/16] 0.0, 128
  %1122 = vxpose.xlu0.b32.cont [15/16] 0.0, 128
  %1123 = vxpose.xlu0.b32.end [16/16] 0.0, 128
  %v1124 = vpop.trf.xlu0
  %v1125 = vpop.trf.xlu0
  %v1126 = vpop.trf.xlu0
  %v1127 = vpop.trf.xlu0
  %v1128 = vpop.trf.xlu0
  %v1129 = vpop.trf.xlu0
  %v1130 = vpop.trf.xlu0
  %v1131 = vpop.trf.xlu0
  %v1132 = vpop.trf.xlu0
  %v1133 = vpop.trf.xlu0
  %v1134 = vpop.trf.xlu0
  %v1135 = vpop.trf.xlu0
  %v1136 = vpop.trf.xlu0
  %v1137 = vpop.trf.xlu0
  %v1138 = vpop.trf.xlu0
  %v1139 = vpop.trf.xlu0
  %1141 = vset.pattern.permute.xlu0 2
  %1142 = vperm.xlu0 %1141, %v1099
  %v1143 = vpop.permute.xlu0 %1142
  %1146 = vset.pattern.permute.xlu0 2
  %1147 = vperm.xlu0 %1146, %v1105
  %v1148 = vpop.permute.xlu0 %1147
  %v1150 = vlaneseq
  %v1151 = vshrl.u32 %v1150, 7
  %v1152 = vsub.s32 0, %v1151
  %v1153 = vrot.slane %v1124, %v1152
  %v1154 = vadd.f32 %v1143, %v1153
  %v1155 = vadd.f32 %v1148, %v1153
  %vm1156 = vcmp.gt.f32.partialorder %v1154, 0.0
  %vm1157 = vcmp.gt.f32.partialorder %v1155, 0.0
  %v1158 = vmul.f32 %v1154, 0.2
  %v1159 = vmul.f32 %v1155, 0.2
  %v1160 = vsel %vm1156, %v1154, %v1158
  %v1161 = vsel %vm1157, %v1155, %v1159
  %v1162 = vsel %vm222, %v1160, -1e+30
  %v1163 = vsel %vm223, %v1161, -1e+30
  %v1164 = vsel %vm226, %v1162, -inf
  %1165 = vmax.xlane.f32.xlu0 %v1164
  %v1166 = vpop.xlane.xlu0 %1165
  %v1167 = vsel %vm226, %v1163, -inf
  %1168 = vmax.xlane.f32.xlu0 %v1167
  %v1169 = vpop.xlane.xlu0 %1168
  %v1170 = vsub.f32 %v1162, %v1166
  %v1171 = vsub.f32 %v1163, %v1169
  %v1172 = vmul.f32 %v1170, 1.442695
  %v1173 = vpow.pop %v1172
  %v1174 = vmul.f32 %v1171, 1.442695
  %v1175 = vpow.pop %v1174
  %v1176 = vsel %vm226, %v1173, 0.0
  %1177 = vadd.xlane.f32.xlu0 %v1176
  %v1178 = vpop.xlane.xlu0 %1177
  %v1179 = vsel %vm226, %v1175, 0.0
  %1180 = vadd.xlane.f32.xlu0 %v1179
  %v1181 = vpop.xlane.xlu0 %1180
  %v1182 = vmax.f32 %v1178, 1e-20
  %v1183 = vmax.f32 %v1181, 1e-20
  %v1184 = vrcp.pop %v1182
  %v1185 = vrcp.pop %v1183
  %v1186 = vmul.f32 %v1173, %v1184
  %v1187 = vmul.f32 %v1175, %v1185
  %v1188 = vpack.c.bf16 %v1187, %v1186
  %v1189 = vpack.c.bf16 %v1103, %v1097
  %v1191 = vsel %vm226, %v1188, 0
  %1193 = vmatprep.subr.bf16.mxu0 0
  %1194 = vmatpush1.bf16.msra.mxu0 0
  %1195 = vmatprep.subr.bf16.mxu0 0
  %1196 = vmatpush1.bf16.msra.mxu0 0
  %1197 = vmatprep.subr.bf16.mxu0 0
  %1198 = vmatpush1.bf16.msra.mxu0 0
  %1199 = vmatprep.subr.bf16.mxu0 0
  %1200 = vmatpush1.bf16.msra.mxu0 0
  %1201 = vmatprep.subr.bf16.mxu0 0
  %1202 = vmatpush1.bf16.msra.mxu0 0
  %1203 = vmatprep.subr.bf16.mxu0 0
  %1204 = vmatpush1.bf16.msra.mxu0 0
  %1205 = vmatprep.subr.bf16.mxu0 0
  %1206 = vmatpush1.bf16.msra.mxu0 0
  %1207 = vmatprep.subr.bf16.mxu0 0
  %1208 = vmatpush1.bf16.msra.mxu0 %v1189
  %1209 = vmatprep.subr.bf16.mxu0 0
  %1210 = vmatpush2.bf16.msra.mxu0 0
  %1211 = vmatprep.subr.bf16.mxu0 0
  %1212 = vmatpush2.bf16.msra.mxu0 0
  %1213 = vmatprep.subr.bf16.mxu0 0
  %1214 = vmatpush2.bf16.msra.mxu0 0
  %1215 = vmatprep.subr.bf16.mxu0 0
  %1216 = vmatpush2.bf16.msra.mxu0 0
  %1217 = vmatprep.subr.bf16.mxu0 0
  %1218 = vmatpush2.bf16.msra.mxu0 0
  %1219 = vmatprep.subr.bf16.mxu0 0
  %1220 = vmatpush2.bf16.msra.mxu0 0
  %1221 = vmatprep.subr.bf16.mxu0 0
  %1222 = vmatpush2.bf16.msra.mxu0 0
  %1223 = vmatprep.subr.bf16.mxu0 0
  %1224 = vmatpush2.bf16.msra.mxu0 0
  %1225 = vmatprep.mubr.bf16.mxu0 0
  %1226 = vmatmul.mubr.bf16.gmra.mxu0 %v1191
  %v1227 = vpop.f32.mrf.mxu0
  %v1228 = vadd.f32 0.0, %v1227
  %v1229 = vpop.f32.mrf.mxu0
  %v1230 = vpop.f32.mrf.mxu0
  %v1231 = vadd.f32 0.0, %v1230
  %v1232 = vpop.f32.mrf.mxu0
  %1233 = vdwg.mxu0
  %1234 = vset.pattern.permute.xlu0 3
  %1235 = vperm.xlu0 %1234, %v1099
  %v1236 = vpop.permute.xlu0 %1235
  %1238 = vset.pattern.permute.xlu0 3
  %1239 = vperm.xlu0 %1238, %v1105
  %v1240 = vpop.permute.xlu0 %1239
  %v1242 = vlaneseq
  %v1243 = vshrl.u32 %v1242, 7
  %v1244 = vsub.s32 1, %v1243
  %v1245 = vrot.slane %v1124, %v1244
  %v1246 = vadd.f32 %v1236, %v1245
  %v1247 = vadd.f32 %v1240, %v1245
  %vm1248 = vcmp.gt.f32.partialorder %v1246, 0.0
  %vm1249 = vcmp.gt.f32.partialorder %v1247, 0.0
  %v1250 = vmul.f32 %v1246, 0.2
  %v1251 = vmul.f32 %v1247, 0.2
  %v1252 = vsel %vm1248, %v1246, %v1250
  %v1253 = vsel %vm1249, %v1247, %v1251
  %v1254 = vsel %vm222, %v1252, -1e+30
  %v1255 = vsel %vm223, %v1253, -1e+30
  %v1256 = vsel %vm226, %v1254, -inf
  %1257 = vmax.xlane.f32.xlu0 %v1256
  %v1258 = vpop.xlane.xlu0 %1257
  %v1259 = vsel %vm226, %v1255, -inf
  %1260 = vmax.xlane.f32.xlu0 %v1259
  %v1261 = vpop.xlane.xlu0 %1260
  %v1262 = vsub.f32 %v1254, %v1258
  %v1263 = vsub.f32 %v1255, %v1261
  %v1264 = vmul.f32 %v1262, 1.442695
  %v1265 = vpow.pop %v1264
  %v1266 = vmul.f32 %v1263, 1.442695
  %v1267 = vpow.pop %v1266
  %v1268 = vsel %vm226, %v1265, 0.0
  %1269 = vadd.xlane.f32.xlu0 %v1268
  %v1270 = vpop.xlane.xlu0 %1269
  %v1271 = vsel %vm226, %v1267, 0.0
  %1272 = vadd.xlane.f32.xlu0 %v1271
  %v1273 = vpop.xlane.xlu0 %1272
  %v1274 = vmax.f32 %v1270, 1e-20
  %v1275 = vmax.f32 %v1273, 1e-20
  %v1276 = vrcp.pop %v1274
  %v1277 = vrcp.pop %v1275
  %v1278 = vmul.f32 %v1265, %v1276
  %v1279 = vmul.f32 %v1267, %v1277
  %v1280 = vpack.c.bf16 %v1279, %v1278
  %1282 = vrot.lane.b32.xlu0 %v1189, 64
  %v1283 = vpop.permute.xlu0 %1282
  %v1286 = vsel %vm226, %v1280, 0
  %1288 = vmatprep.subr.bf16.mxu0 0
  %1289 = vmatpush1.bf16.msra.mxu0 0
  %1290 = vmatprep.subr.bf16.mxu0 0
  %1291 = vmatpush1.bf16.msra.mxu0 0
  %1292 = vmatprep.subr.bf16.mxu0 0
  %1293 = vmatpush1.bf16.msra.mxu0 0
  %1294 = vmatprep.subr.bf16.mxu0 0
  %1295 = vmatpush1.bf16.msra.mxu0 0
  %1296 = vmatprep.subr.bf16.mxu0 0
  %1297 = vmatpush1.bf16.msra.mxu0 0
  %1298 = vmatprep.subr.bf16.mxu0 0
  %1299 = vmatpush1.bf16.msra.mxu0 0
  %1300 = vmatprep.subr.bf16.mxu0 0
  %1301 = vmatpush1.bf16.msra.mxu0 0
  %1302 = vmatprep.subr.bf16.mxu0 0
  %1303 = vmatpush1.bf16.msra.mxu0 %v1283
  %1304 = vmatprep.subr.bf16.mxu0 0
  %1305 = vmatpush2.bf16.msra.mxu0 0
  %1306 = vmatprep.subr.bf16.mxu0 0
  %1307 = vmatpush2.bf16.msra.mxu0 0
  %1308 = vmatprep.subr.bf16.mxu0 0
  %1309 = vmatpush2.bf16.msra.mxu0 0
  %1310 = vmatprep.subr.bf16.mxu0 0
  %1311 = vmatpush2.bf16.msra.mxu0 0
  %1312 = vmatprep.subr.bf16.mxu0 0
  %1313 = vmatpush2.bf16.msra.mxu0 0
  %1314 = vmatprep.subr.bf16.mxu0 0
  %1315 = vmatpush2.bf16.msra.mxu0 0
  %1316 = vmatprep.subr.bf16.mxu0 0
  %1317 = vmatpush2.bf16.msra.mxu0 0
  %1318 = vmatprep.subr.bf16.mxu0 0
  %1319 = vmatpush2.bf16.msra.mxu0 0
  %1320 = vmatprep.mubr.bf16.mxu0 0
  %1321 = vmatmul.mubr.bf16.gmra.mxu0 %v1286
  %v1322 = vpop.f32.mrf.mxu0
  %v1323 = vadd.f32 0.0, %v1322
  %v1324 = vpop.f32.mrf.mxu0
  %v1325 = vpop.f32.mrf.mxu0
  %v1326 = vadd.f32 0.0, %v1325
  %v1327 = vpop.f32.mrf.mxu0
  %1328 = vdwg.mxu0
  %1331 = vrot.lane.b32.xlu0 %v1323, 64
  %v1332 = vpop.permute.xlu0 %1331
  %1333 = vrot.lane.b32.xlu0 %v1326, 64
  %v1334 = vpop.permute.xlu0 %1333
  %v1337 = vsel %vm400, %v1228, %v1332
  %v1338 = vsel %vm400, %v1231, %v1334
  %v1340 = vlaneseq
  %v1341 = vshrl.u32 %v1340, 7
  %v1342 = vsub.s32 0, %v1341
  %v1343 = vrot.slane %v1107, %v1342
  %v1345 = vadd.f32 %v1337, %v1343
  %v1346 = vadd.f32 %v1338, %v1343
  %v1347 = vmax.f32 %v1345, 0.0
  %v1348 = vmax.f32 %v1346, 0.0
  %1349 = vst [vmem:[%s10] sm:$0xff] %v1347
  %1350 = vst [vmem:[%s10 + $0x8] sm:$0xff] %v1348
  // Predicated region
  $region42: #{forward.10} parent=0 // pred_check
    _
  $region43: #{forward.10} parent=0 // pred_check_branch
    %1352 = sbr.rel (0) target = $region45
  $region44: #{forward.10} parent=0 // pred_region
    _
  $region45: #{forward.10} parent=0 // pred_fallthru
    _
  // Predicated region
  $region46: #{forward.10} parent=0 // pred_check
    _
  $region47: #{forward.10} parent=0 // pred_check_branch
    %1354 = sbr.rel (0) target = $region49
  $region48: #{forward.10} parent=0 // pred_region
    _
  $region49: #{forward.10} parent=0 // pred_fallthru
    _

</llo_original>
